<compile_context>
chip_gen: v5e
topology: v5e:2x2
jax: 0.10.0
libtpu: 0.0.40
codegen_flags: <defaults>
</compile_context>

<pallas_src>
import functools

import jax
import jax.numpy as jnp
from jax import lax
from jax.experimental import pallas as pl
from jax.experimental.pallas import tpu as pltpu


def _round_up(x, m):
    return ((x + m - 1) // m) * m


def _auto_num_splits():
    """2 on chips exposing >= 2 TensorCores per device (v7x / megacore), else 1."""
    try:
        dev = jax.devices()[0]
        nc = getattr(dev, "num_cores", None)
        if nc is None:
            nc = getattr(dev, "core_count", None)
        return 2 if (nc is not None and int(nc) >= 2) else 1
    except Exception:  # pragma: no cover - defensive
        return 1


def _suffstats_kernel(x_ref, y_ref, out_ref, cnt_ref, *, n_valid, use_bf16_matmul):
    """Accumulates [X|1]^T @ (lane-packed masked X) and class counts over N-tiles."""
    p = pl.program_id(0)
    i = pl.program_id(1)

    @pl.when(i == 0)
    def _():
        out_ref[...] = jnp.zeros_like(out_ref)
        cnt_ref[...] = jnp.zeros_like(cnt_ref)

    tn, d = x_ref.shape
    d_ext, cd = out_ref.shape            # d_ext = d + 8, cd = C * d
    num_classes = cnt_ref.shape[-1]

    # Global row index of every row in this tile.  Rows >= n_valid are padding
    # (ragged tail, or a fully out-of-range tile whose index_map was clamped)
    # and must contribute nothing.
    row0 = (p * pl.num_programs(1) + i) * tn
    row_ids = row0 + lax.broadcasted_iota(jnp.int32, (tn, 1), 0)
    row_valid = row_ids < n_valid

    x = x_ref[...].astype(jnp.float32)                 # [TN, d]
    xv = jnp.where(row_valid, x, 0.0)                  # select -> NaN-safe zeroing
    y = jnp.where(row_valid, y_ref[...], -1)           # [TN, 1]; pad matches no class

    # Lane-packed masked copies: Xm[:, c*d:(c+1)*d] = X rows of class c, else 0.
    # Built with a single compare+select (no per-class broadcasts/multiplies,
    # no integer division).
    lane_ids = lax.broadcasted_iota(jnp.int32, (tn, cd), 1)
    lane_lo = y * d                                    # [TN, 1]
    m_full = (lane_ids >= lane_lo) & (lane_ids < lane_lo + d)
    x_rep = jnp.concatenate([xv] * num_classes, axis=1)   # [TN, C*d]
    xm = jnp.where(m_full, x_rep, 0.0)

    # Stationary operand augmented with a ones column: output row d of the
    # gram matmul becomes the per-class sums (rows d+1..d+7 stay zero).
    pad_ids = lax.broadcasted_iota(jnp.int32, (tn, d_ext - d), 1)
    ones_col = jnp.where((pad_ids == 0) & row_valid, 1.0, 0.0)
    xa = jnp.concatenate([xv, ones_col], axis=1)       # [TN, d+8]

    if use_bf16_matmul:
        # Optional (v5e-oriented) bf16 operands with f32 accumulation.
        xa = xa.astype(jnp.bfloat16)
        xm = xm.astype(jnp.bfloat16)

    # Lane-dense [d+8, C*d] gram + class sums in one MXU pass.
    out_ref[...] += lax.dot_general(
        xa, xm, (((0,), (0,)), ((), ())), preferred_element_type=jnp.float32)

    # Per-class counts (tiny [TN, C] compare + cross-sublane reduce).
    cls_ids = lax.broadcasted_iota(jnp.int32, (tn, num_classes), 1)
    cnt_ref[...] += jnp.sum((cls_ids == y).astype(jnp.float32),
                            axis=0, keepdims=True)


def compute_suff_stats(X, y, num_classes, *, num_splits=None, max_tile=4096,
                       use_bf16_matmul=False):
    """One pallas_call -> (per-class grams [C,d,d], class sums [C,d], counts [C])."""
    N, d = X.shape
    C = int(num_classes)
    if num_splits is None:
        num_splits = _auto_num_splits()

    d_ext = d + 8                      # 8 extra sublane-aligned rows (row d = sums)
    cd = C * d

    # Large N-tiles: ~0.75 KiB of VMEM per row at d=32 -> TN=4096 is a few MiB,
    # well under every generation's scoped-VMEM budget (limit raised below).
    TN = min(_round_up(max_tile, 8),
             _round_up(max(pl.cdiv(N, num_splits), 8), 8))
    total_tiles = pl.cdiv(N, TN)
    tiles_per_split = pl.cdiv(total_tiles, num_splits)
    last_tile = total_tiles - 1

    # No pad / cast of X; only the tiny label vector is reshaped to a column.
    y2 = y.reshape(N, 1).astype(jnp.int32)

    # Clamp block indices so over-allocated tiles (ragged split) re-read the
    # last in-range block; the kernel masks them out via its row-index check.
    def x_map(p, i):
        return (jnp.minimum(p * tiles_per_split + i, last_tile), 0)

    def y_map(p, i):
        return (jnp.minimum(p * tiles_per_split + i, last_tile), 0)

    rows_covered = num_splits * tiles_per_split * TN
    flops = 2 * rows_covered * d_ext * cd + 2 * rows_covered * C
    bytes_accessed = (rows_covered * (d * X.dtype.itemsize + 4)
                      + num_splits * (d_ext * cd + C) * 4)

    kernel = functools.partial(_suffstats_kernel, n_valid=N,
                               use_bf16_matmul=use_bf16_matmul)

    out, cnt = pl.pallas_call(
        kernel,
        out_shape=(jax.ShapeDtypeStruct((num_splits, d_ext, cd), jnp.float32),
                   jax.ShapeDtypeStruct((num_splits, 1, C), jnp.float32)),
        grid_spec=pltpu.PrefetchScalarGridSpec(
            num_scalar_prefetch=0,
            grid=(num_splits, tiles_per_split),
            in_specs=[
                pl.BlockSpec((TN, d), x_map),
                pl.BlockSpec((TN, 1), y_map),
            ],
            out_specs=(
                pl.BlockSpec((None, d_ext, cd), lambda p, i: (p, 0, 0)),
                pl.BlockSpec((None, 1, C), lambda p, i: (p, 0, 0)),
            )),
        compiler_params=pltpu.CompilerParams(
            dimension_semantics=("parallel", "arbitrary"),
            vmem_limit_bytes=48 * 1024 * 1024),
        cost_estimate=pl.CostEstimate(flops=flops, transcendentals=0,
                                      bytes_accessed=bytes_accessed),
    )(X, y2)

    # Combine per-core partials (a couple of tiny [d+8, C*d] adds in XLA).
    out = out.sum(axis=0)                        # [d+8, C*d]
    cnt = cnt.sum(axis=0).reshape(C)             # [C]

    gram_c = out[:d, :].reshape(d, C, d).transpose(1, 0, 2)   # [C, d, d]
    msum = out[d, :].reshape(C, d)                            # [C, d]
    return gram_c, msum, cnt


def _scatter_from_stats(gram_c, msum, cnt):
    """Sw (mean of per-class covariances) and St (total covariance) from suff stats."""
    # NOTE: single-pass "gram minus outer-product" covariance; like the PyTorch
    # reference it assumes every class appears >= 2 times (else 1/(m-1) is inf).
    n_total = jnp.sum(cnt)
    inv_m = 1.0 / cnt
    inv_m1 = 1.0 / (cnt - 1.0)
    outer_c = msum[:, :, None] * msum[:, None, :] * inv_m[:, None, None]
    covs = (gram_c - outer_c) * inv_m1[:, None, None]
    Sw = jnp.mean(covs, axis=0)

    G_total = jnp.sum(gram_c, axis=0)             # = X^T X (valid rows only)
    total_sum = jnp.sum(msum, axis=0)             # = sum_i x_i
    St = (G_total - total_sum[:, None] * total_sum[None, :] / n_total) / (n_total - 1.0)
    return Sw, St


def _generalized_eigvals(Sb, Sw):
    """Eigenvalues of Sb v = w Sw v (ascending), via Cholesky reduction."""
    # TODO(synk): generalized symmetric eigendecomposition has no Pallas
    # equivalent; done in plain JAX (cholesky + triangular solves + eigvalsh).
    L = jnp.linalg.cholesky(Sw)
    tmp = jax.scipy.linalg.solve_triangular(L, Sb, lower=True)        # L^{-1} Sb
    Cm = jax.scipy.linalg.solve_triangular(L, tmp.T, lower=True).T    # L^{-1} Sb L^{-T}
    Cm = 0.5 * (Cm + Cm.T)
    return jnp.linalg.eigvalsh(Cm)   # ascending, matching scipy.linalg.eigh(A, B)


@functools.partial(jax.jit, static_argnums=(2,))
def linear_discriminative_loss(X, y, num_classes, lambda_val=1e-3):
    """X: [N, d] features, y: [N] int labels in [0, num_classes)."""
    gram_c, msum, cnt = compute_suff_stats(X, y.reshape(-1), num_classes)
    Sw, St = _scatter_from_stats(gram_c, msum, cnt)
    Sb = St - Sw
    Sw = Sw + lambda_val * jnp.eye(Sw.shape[0], dtype=Sw.dtype)
    eigvals = _generalized_eigvals(Sb, Sw)
    # Keep only the top (num_classes - 1) eigenvalues (ascending order).
    tail = eigvals[-(num_classes - 1):]
    thresh = jnp.min(tail) + 1.0
    # PyTorch returns a dynamic-size boolean selection; with static shapes we
    # mask entries above the threshold to 0 (they contribute 0 to a summed
    # cost; NOTE this differs from a mean over the dynamic selection).
    costs = jnp.where(tail <= thresh, -tail, 0.0)
    return costs


class LinearDiscriminativeLoss:
    """JAX/Pallas port of the PyTorch LinearDiscriminativeLoss module (no parameters)."""

    def __init__(self, lambda_val=0.001, num_classes=4):
        self.lambda_value = float(lambda_val)
        self.num_classes = int(num_classes)

    def __call__(self, inputs, target):
        return linear_discriminative_loss(inputs, target, self.num_classes,
                                          self.lambda_value)


if __name__ == "__main__":
    key = jax.random.PRNGKey(0)
    N, d, C = 64, 32, 4

    kx, ko = jax.random.split(key)
    X = jax.random.normal(kx, (N, d), dtype=jnp.float32)
    y = jnp.arange(N, dtype=jnp.int32) % C                # every class has 16 members
    class_offsets = 2.0 * jax.random.normal(ko, (C, d), dtype=jnp.float32)
    X = X + class_offsets[y]                              # make classes somewhat separable

    loss_obj = LinearDiscriminativeLoss(lambda_val=0.001, num_classes=C)
    costs = loss_obj(X, y)
    jax.block_until_ready(costs)
    print("KERNEL_OK")
</pallas_src>

<mosaic_0001>
module attributes {stable_mosaic.version = 11 : i64} {
  func.func @_suffstats_kernel(%arg0: i32, %arg1: i32, %arg2: memref<64x32xf32, #tpu.memory_space<vmem>>, %arg3: memref<64x1xi32, #tpu.memory_space<vmem>>, %arg4: memref<1x40x128xf32, #tpu.memory_space<vmem>>, %arg5: memref<1x1x4xf32, #tpu.memory_space<vmem>>) attributes {dimension_semantics = [#tpu.dimension_semantics<parallel>, #tpu.dimension_semantics<arbitrary>], iteration_bounds = array<i64: 1, 1>, scalar_prefetch = 0 : i64, scratch_operands = 0 : i64, tpu.core_type = #tpu.core_type<tc>, window_params = [{transform_indices = @transform_0, window_bounds = array<i64: 64, 32>}, {transform_indices = @transform_1, window_bounds = array<i64: 64, 1>}, {transform_indices = @transform_2, window_bounds = array<i64: 1, 40, 128>}, {transform_indices = @transform_3, window_bounds = array<i64: 1, 1, 4>}]} {
    %c0_i32 = arith.constant 0 : i32
    %0 = arith.cmpi eq, %arg1, %c0_i32 : i32
    %1 = arith.extui %0 : i1 to i32
    %c0_i32_0 = arith.constant 0 : i32
    %2 = arith.cmpi ne, %1, %c0_i32_0 : i32
    scf.if %2 {
      %cst_24 = arith.constant 0.000000e+00 : f32
      %61 = vector.broadcast %cst_24 : f32 to vector<40x128xf32>
      %c0_25 = arith.constant 0 : index
      %c0_26 = arith.constant 0 : index
      %c0_27 = arith.constant 0 : index
      %62 = vector.load %arg4[%c0_25, %c0_26, %c0_27] : memref<1x40x128xf32, #tpu.memory_space<vmem>>, vector<1x40x128xf32>
      %63 = vector.shape_cast %62 : vector<1x40x128xf32> to vector<40x128xf32>
      %64 = vector.shape_cast %61 : vector<40x128xf32> to vector<1x40x128xf32>
      tpu.vector_store %arg4[%c0_25, %c0_26, %c0_27], %64 {strides = array<i32>} : memref<1x40x128xf32, #tpu.memory_space<vmem>>, vector<1x40x128xf32>,
      %cst_28 = arith.constant 0.000000e+00 : f32
      %65 = vector.broadcast %cst_28 : f32 to vector<1x4xf32>
      %c0_29 = arith.constant 0 : index
      %c0_30 = arith.constant 0 : index
      %c0_31 = arith.constant 0 : index
      %66 = vector.load %arg5[%c0_29, %c0_30, %c0_31] : memref<1x1x4xf32, #tpu.memory_space<vmem>>, vector<1x1x4xf32>
      %67 = vector.shape_cast %66 : vector<1x1x4xf32> to vector<1x4xf32>
      %68 = vector.shape_cast %65 : vector<1x4xf32> to vector<1x1x4xf32>
      tpu.vector_store %arg5[%c0_29, %c0_30, %c0_31], %68 {strides = array<i32>} : memref<1x1x4xf32, #tpu.memory_space<vmem>>, vector<1x1x4xf32>,
    } else {
    }
    %c1_i32 = arith.constant 1 : i32
    %3 = arith.muli %arg0, %c1_i32 : i32
    %4 = arith.addi %3, %arg1 : i32
    %c64_i32 = arith.constant 64 : i32
    %5 = arith.muli %4, %c64_i32 : i32
    %6 = tpu.iota {dimensions = array<i32: 0>} : vector<64x1xi32>
    %7 = vector.broadcast %5 : i32 to vector<64x1xi32>
    %8 = arith.addi %7, %6 : vector<64x1xi32>
    %c64_i32_1 = arith.constant 64 : i32
    %9 = vector.broadcast %c64_i32_1 : i32 to vector<64x1xi32>
    %10 = arith.cmpi slt, %8, %9 : vector<64x1xi32>
    %c0 = arith.constant 0 : index
    %c0_2 = arith.constant 0 : index
    %11 = vector.load %arg2[%c0, %c0_2] : memref<64x32xf32, #tpu.memory_space<vmem>>, vector<64x32xf32>
    %cst = arith.constant 0.000000e+00 : f32
    %12 = vector.shape_cast %10 : vector<64x1xi1> to vector<64x1xi1>
    %13 = vector.broadcast %12 : vector<64x1xi1> to vector<64x32xi1>
    %14 = vector.broadcast %cst : f32 to vector<64x32xf32>
    %15 = arith.select %13, %11, %14 : vector<64x32xi1>, vector<64x32xf32>
    %c0_3 = arith.constant 0 : index
    %c0_4 = arith.constant 0 : index
    %16 = vector.load %arg3[%c0_3, %c0_4] : memref<64x1xi32, #tpu.memory_space<vmem>>, vector<64x1xi32>
    %c-1_i32 = arith.constant -1 : i32
    %17 = vector.broadcast %c-1_i32 : i32 to vector<64x1xi32>
    %18 = arith.select %10, %16, %17 : vector<64x1xi1>, vector<64x1xi32>
    %19 = tpu.iota {dimensions = array<i32: 1>} : vector<64x128xi32>
    %c32_i32 = arith.constant 32 : i32
    %20 = vector.broadcast %c32_i32 : i32 to vector<64x1xi32>
    %21 = arith.muli %18, %20 : vector<64x1xi32>
    %22 = vector.broadcast %21 : vector<64x1xi32> to vector<64x128xi32>
    %23 = arith.cmpi sge, %19, %22 : vector<64x128xi32>
    %c32_i32_5 = arith.constant 32 : i32
    %24 = vector.broadcast %c32_i32_5 : i32 to vector<64x1xi32>
    %25 = arith.addi %21, %24 : vector<64x1xi32>
    %26 = vector.broadcast %25 : vector<64x1xi32> to vector<64x128xi32>
    %27 = arith.cmpi slt, %19, %26 : vector<64x128xi32>
    %28 = arith.andi %23, %27 : vector<64x128xi1>
    %29 = tpu.concatenate %15, %15, %15, %15 in 1 : vector<64x32xf32>, vector<64x32xf32>, vector<64x32xf32>, vector<64x32xf32> -> vector<64x128xf32>
    %cst_6 = arith.constant 0.000000e+00 : f32
    %30 = vector.broadcast %cst_6 : f32 to vector<64x128xf32>
    %31 = arith.select %28, %29, %30 : vector<64x128xi1>, vector<64x128xf32>
    %32 = tpu.iota {dimensions = array<i32: 1>} : vector<64x8xi32>
    %c0_i32_7 = arith.constant 0 : i32
    %33 = vector.broadcast %c0_i32_7 : i32 to vector<64x8xi32>
    %34 = arith.cmpi eq, %32, %33 : vector<64x8xi32>
    %35 = vector.broadcast %10 : vector<64x1xi1> to vector<64x8xi1>
    %36 = arith.andi %34, %35 : vector<64x8xi1>
    %cst_8 = arith.constant 1.000000e+00 : f32
    %cst_9 = arith.constant 0.000000e+00 : f32
    %37 = vector.broadcast %cst_8 : f32 to vector<64x8xf32>
    %38 = vector.broadcast %cst_9 : f32 to vector<64x8xf32>
    %39 = arith.select %36, %37, %38 : vector<64x8xi1>, vector<64x8xf32>
    %40 = tpu.concatenate %15, %39 in 1 : vector<64x32xf32>, vector<64x8xf32> -> vector<64x40xf32>
    %c0_10 = arith.constant 0 : index
    %c0_11 = arith.constant 0 : index
    %c0_12 = arith.constant 0 : index
    %41 = vector.load %arg4[%c0_10, %c0_11, %c0_12] : memref<1x40x128xf32, #tpu.memory_space<vmem>>, vector<1x40x128xf32>
    %42 = vector.shape_cast %41 : vector<1x40x128xf32> to vector<40x128xf32>
    %cst_13 = arith.constant dense<0.000000e+00> : vector<40x128xf32>
    %43 = tpu.matmul %40, %31, %cst_13 {dimension_numbers = #tpu.dot_dimension_numbers<[0], [0], [1], [1], [0, 1, 1, 1], [], []>} : vector<64x40xf32>, vector<64x128xf32>, vector<40x128xf32> -> vector<40x128xf32>
    %44 = arith.addf %42, %43 : vector<40x128xf32>
    %c0_14 = arith.constant 0 : index
    %c0_15 = arith.constant 0 : index
    %c0_16 = arith.constant 0 : index
    %45 = vector.load %arg4[%c0_14, %c0_15, %c0_16] : memref<1x40x128xf32, #tpu.memory_space<vmem>>, vector<1x40x128xf32>
    %46 = vector.shape_cast %45 : vector<1x40x128xf32> to vector<40x128xf32>
    %47 = vector.shape_cast %44 : vector<40x128xf32> to vector<1x40x128xf32>
    tpu.vector_store %arg4[%c0_14, %c0_15, %c0_16], %47 {strides = array<i32>} : memref<1x40x128xf32, #tpu.memory_space<vmem>>, vector<1x40x128xf32>,
    %48 = tpu.iota {dimensions = array<i32: 1>} : vector<64x4xi32>
    %c0_17 = arith.constant 0 : index
    %c0_18 = arith.constant 0 : index
    %c0_19 = arith.constant 0 : index
    %49 = vector.load %arg5[%c0_17, %c0_18, %c0_19] : memref<1x1x4xf32, #tpu.memory_space<vmem>>, vector<1x1x4xf32>
    %50 = vector.shape_cast %49 : vector<1x1x4xf32> to vector<1x4xf32>
    %51 = vector.broadcast %18 : vector<64x1xi32> to vector<64x4xi32>
    %52 = arith.cmpi eq, %48, %51 : vector<64x4xi32>
    %53 = arith.extui %52 : vector<64x4xi1> to vector<64x4xi32>
    %54 = arith.sitofp %53 : vector<64x4xi32> to vector<64x4xf32>
    %cst_20 = arith.constant dense<0.000000e+00> : vector<4xf32>
    %55 = vector.multi_reduction <add>, %54, %cst_20 [0] : vector<64x4xf32> to vector<4xf32>
    %56 = vector.shape_cast %55 : vector<4xf32> to vector<1x4xf32>
    %57 = arith.addf %50, %56 : vector<1x4xf32>
    %c0_21 = arith.constant 0 : index
    %c0_22 = arith.constant 0 : index
    %c0_23 = arith.constant 0 : index
    %58 = vector.load %arg5[%c0_21, %c0_22, %c0_23] : memref<1x1x4xf32, #tpu.memory_space<vmem>>, vector<1x1x4xf32>
    %59 = vector.shape_cast %58 : vector<1x1x4xf32> to vector<1x4xf32>
    %60 = vector.shape_cast %57 : vector<1x4xf32> to vector<1x1x4xf32>
    tpu.vector_store %arg5[%c0_21, %c0_22, %c0_23], %60 {strides = array<i32>} : memref<1x1x4xf32, #tpu.memory_space<vmem>>, vector<1x1x4xf32>,
    return
  }
  func.func @transform_0(%arg0: i32, %arg1: i32) -> (i32, i32) {
    %c1_i32 = arith.constant 1 : i32
    %0 = arith.muli %arg0, %c1_i32 : i32
    %1 = arith.addi %0, %arg1 : i32
    %c0_i32 = arith.constant 0 : i32
    %2 = arith.minsi %1, %c0_i32 : i32
    %c0_i32_0 = arith.constant 0 : i32
    %c0_i32_1 = arith.constant 0 : i32
    return %2, %c0_i32_0 : i32, i32
  }
  func.func @transform_1(%arg0: i32, %arg1: i32) -> (i32, i32) {
    %c1_i32 = arith.constant 1 : i32
    %0 = arith.muli %arg0, %c1_i32 : i32
    %1 = arith.addi %0, %arg1 : i32
    %c0_i32 = arith.constant 0 : i32
    %2 = arith.minsi %1, %c0_i32 : i32
    %c0_i32_0 = arith.constant 0 : i32
    %c0_i32_1 = arith.constant 0 : i32
    return %2, %c0_i32_0 : i32, i32
  }
  func.func @transform_2(%arg0: i32, %arg1: i32) -> (i32, i32, i32) {
    %c0_i32 = arith.constant 0 : i32
    %c0_i32_0 = arith.constant 0 : i32
    %c0_i32_1 = arith.constant 0 : i32
    return %arg0, %c0_i32, %c0_i32_0 : i32, i32, i32
  }
  func.func @transform_3(%arg0: i32, %arg1: i32) -> (i32, i32, i32) {
    %c0_i32 = arith.constant 0 : i32
    %c0_i32_0 = arith.constant 0 : i32
    %c0_i32_1 = arith.constant 0 : i32
    return %arg0, %c0_i32, %c0_i32_0 : i32, i32, i32
  }
}

</mosaic_0001>

<llo_original>
// kernel: mul.28
$region0: #{mul.28}
  %s0 = inlined_call_operand.vmem [shape: f32[128], index: 0, kind: input, shape index: {}]
  %s1 = inlined_call_operand.vmem [shape: f32[4,32], index: 1, kind: output, shape index: {}]
  $region1: #{mul.28} parent=0
    #allocation0 [shape = 'u8[4096]{0}', space=vmem, size = 0x1000, scoped, tag = 'scoped mem for output reshape']
    #allocation1 [shape = 'u8[4096]{0}', space=vmem, size = 0x1000, scoped, tag = 'scoped mem for input reshape']
    %s3 = ssub.s32 2, 1
    %v4 = vld [vmem:[%s0] sm:%s3]
    %5 = vst [vmem:[#allocation1] sm:%s3] %v4
    %v6 = vld [vmem:[#allocation1] sm:$0x1]
    %vm7 = vcmask 261120
    %8 = vst.msk [vmem:[#allocation0] sm:$0x1] %vm7, %v6
    %v9 = vld [vmem:[#allocation1] sm:$0x1]
    %10 = vrot.lane.b32.xlu0 %v9, 96
    %v11 = vpop.permute.xlu0 %10
    %vm12 = vcmask 261120
    %s13 = scalar_lea.vmem [#allocation0], 1
    %14 = vst.msk [vmem:[%s13] sm:$0x1] %vm12, %v11
    %v15 = vld [vmem:[#allocation1] sm:$0x1]
    %16 = vrot.lane.b32.xlu0 %v15, 64
    %v17 = vpop.permute.xlu0 %16
    %vm18 = vcmask 261120
    %s19 = scalar_lea.vmem [#allocation0], 2
    %20 = vst.msk [vmem:[%s19] sm:$0x1] %vm18, %v17
    %v21 = vld [vmem:[#allocation1] sm:$0x1]
    %22 = vrot.lane.b32.xlu0 %v21, 32
    %v23 = vpop.permute.xlu0 %22
    %vm24 = vcmask 261120
    %s25 = scalar_lea.vmem [#allocation0], 3
    %26 = vst.msk [vmem:[%s25] sm:$0x1] %vm24, %v23
    %s28 = ssub.s32 16, 1
    %v29 = vld [vmem:[#allocation0] sm:%s28]
    %s31 = ssub.s32 16, 1
    %32 = vst [vmem:[%s1] sm:%s31] %v29

// kernel: custom-call.7
$region0: #{custom-call.7}
  %s0 = inlined_call_operand.vmem [shape: f32[32,32], index: 0, kind: input, shape index: {}]
  %s1 = inlined_call_operand.vmem [shape: f32[32,32], index: 1, kind: output, shape index: {}]
  $region1: #{custom-call.7} parent=0
    #allocation0 [shape = 'u8[16384]{0}', space=vmem, size = 0x4000, scoped, tag = 'operand span for operand 0']
    #allocation1 [shape = 'u8[16384]{0}', space=vmem, size = 0x4000, scoped, tag = 'operand span for operand 1']
    // Predicated region
    $region2: #{custom-call.7} parent=1 // pred_check
      _
    $region3: #{custom-call.7} parent=1 // pred_check_branch
      %3 = sbr.rel (0) target = $region5
    $region4: #{custom-call.7} parent=1 // pred_region
      // Predicated region
      $region6: #{custom-call.7} parent=4 // pred_check
        _
      $region7: #{custom-call.7} parent=4 // pred_check_branch
        %5 = sbr.rel (0) target = $region9
      $region8: #{custom-call.7} parent=4 // pred_region
        // Predicated region
        $region21: #{custom-call.7} parent=8 // pred_check
          _
        $region22: #{custom-call.7} parent=8 // pred_check_branch
          %27 = sbr.rel (0) target = $region24
        $region23: #{custom-call.7} parent=8 // pred_region
          loop: start=0, step=1, limit=1
          $region25: #{custom-call.7} parent=23 // loop_pre_header
            _
          $region26: #{custom-call.7} parent=23 // loop_header
            %s29 = sphi 0, %s33
            %p30 = scmp.ge.s32.totalorder %s29, 1
            %s34 = sphi %s0, %s0
            %s35 = sphi [#allocation0], [#allocation0]
          $region27: #{custom-call.7} parent=23 // loop_header_branch
            %32 = sbr.rel (%p30) target = $region31
          $region28: #{custom-call.7} parent=23 // loop_body
            %v36 = vld [vmem:[%s34] sm:$0xff]
            %37 = vst [vmem:[%s35] sm:$0xff] %v36
            %v38 = vld [vmem:[%s34 + $0x8] sm:$0xff]
            %39 = vst [vmem:[%s35 + $0x8] sm:$0xff] %v38
            %v40 = vld [vmem:[%s34 + $0x10] sm:$0xff]
            %41 = vst [vmem:[%s35 + $0x10] sm:$0xff] %v40
            %v42 = vld [vmem:[%s34 + $0x18] sm:$0xff]
            %43 = vst [vmem:[%s35 + $0x18] sm:$0xff] %v42
          $region29: #{custom-call.7} parent=23 // loop_footer
            %s33 = sadd.s32 1, %s29
          $region30: #{custom-call.7} parent=23 // loop_footer_branch
            %28 = sbr.rel target = $region26
          $region31: #{custom-call.7} parent=23 // loop_exit
            _
        $region24: #{custom-call.7} parent=8 // pred_fallthru
          _
        // Predicated region
        $region32: #{custom-call.7} parent=8 // pred_check
          _
        $region33: #{custom-call.7} parent=8 // pred_check_branch
          %45 = sbr.rel target = $region35
        $region34: #{custom-call.7} parent=8 // pred_region
          _
        $region35: #{custom-call.7} parent=8 // pred_fallthru
          _
      $region9: #{custom-call.7} parent=4 // pred_fallthru
        _
      // Predicated region
      $region10: #{custom-call.7} parent=4 // pred_check
        _
      $region11: #{custom-call.7} parent=4 // pred_check_branch
        %7 = sbr.rel target = $region13
      $region12: #{custom-call.7} parent=4 // pred_region
        %s9 = ssub.s32 256, 1
        loop: start=0, step=1, limit=1
        $region14: #{custom-call.7} parent=12 // loop_pre_header
          _
        $region15: #{custom-call.7} parent=12 // loop_header
          %s11 = sphi 0, %s15
          %p12 = scmp.ge.s32.totalorder %s11, 1
          %s16 = sphi %s0, %s0
          %s17 = sphi [#allocation0], [#allocation0]
        $region16: #{custom-call.7} parent=12 // loop_header_branch
          %14 = sbr.rel (%p12) target = $region20
        $region17: #{custom-call.7} parent=12 // loop_body
          %v18 = vld [vmem:[%s16] sm:%s9]
          %19 = vst [vmem:[%s17] sm:%s9] %v18
          %v20 = vld [vmem:[%s16 + $0x8] sm:%s9]
          %21 = vst [vmem:[%s17 + $0x8] sm:%s9] %v20
          %v22 = vld [vmem:[%s16 + $0x10] sm:%s9]
          %23 = vst [vmem:[%s17 + $0x10] sm:%s9] %v22
          %v24 = vld [vmem:[%s16 + $0x18] sm:%s9]
          %25 = vst [vmem:[%s17 + $0x18] sm:%s9] %v24
        $region18: #{custom-call.7} parent=12 // loop_footer
          %s15 = sadd.s32 1, %s11
        $region19: #{custom-call.7} parent=12 // loop_footer_branch
          %10 = sbr.rel target = $region15
        $region20: #{custom-call.7} parent=12 // loop_exit
          _
      $region13: #{custom-call.7} parent=4 // pred_fallthru
        _
    $region5: #{custom-call.7} parent=1 // pred_fallthru
      _
    %46 = vnop
    %47 = vst [vmem:[#allocation1] sm:$0xff] 0.0
    %s48 = scalar_lea.vmem [#allocation1], 8
    %49 = vst [vmem:[%s48] sm:$0xff] 0.0
    %s50 = scalar_lea.vmem [#allocation1], 16
    %51 = vst [vmem:[%s50] sm:$0xff] 0.0
    %s52 = scalar_lea.vmem [#allocation1], 24
    %53 = vst [vmem:[%s52] sm:$0xff] 0.0
    %vm54 = vcmask 7168
    %v55 = vld [vmem:[#allocation1] ss:$0 sm:$0xff]
    %v56 = vld [vmem:[#allocation0] ss:$0 sm:$0xff]
    %v57 = vmul.f32 %v55, %v55
    %58 = vadd.xlane.f32.xlu0 %v57
    %v59 = vpop.xlane.xlu0 %58
    %v60 = vsub.f32 %v56, %v59
    %v61 = vrsqrt.pop %v60
    %v62 = vmul.f32 %v61, %v60
    %v63 = vmul.f32 %v62, %v61
    %v64 = vmul.f32 0.5, %v63
    %v65 = vsub.f32 1.5, %v64
    %v66 = vmul.f32 %v61, %v65
    %vm67 = vweird.f32 %v60
    %vm68 = vweird.f32 %v61
    %vm69 = vmor %vm67, %vm68
    %v70 = vsel %vm69, %v61, %v66
    %v71 = vld [vmem:[#allocation0] sm:$0xff]
    %v72 = vld [vmem:[#allocation1] sm:$0xff]
    %v73 = vmul.f32 %v72, %v55
    %74 = vadd.xlane.f32.xlu0 %v73
    %v75 = vpop.xlane.xlu0 %74
    %v76 = vsub.f32 %v71, %v75
    %v77 = vmul.f32 %v76, %v70
    %v78 = vsel %vm54, %v77, 0.0
    %v79 = vadd.f32 %v72, %v78
    %80 = vst [vmem:[#allocation1] sm:$0xff] %v79
    %s81 = scalar_lea.vmem [#allocation0], 8
    %v82 = vld [vmem:[%s81] sm:$0xff]
    %s83 = scalar_lea.vmem [#allocation1], 8
    %v84 = vld [vmem:[%s83] sm:$0xff]
    %v85 = vmul.f32 %v84, %v55
    %86 = vadd.xlane.f32.xlu0 %v85
    %v87 = vpop.xlane.xlu0 %86
    %v88 = vsub.f32 %v82, %v87
    %v89 = vmul.f32 %v88, %v70
    %v90 = vsel %vm54, %v89, 0.0
    %v91 = vadd.f32 %v84, %v90
    %s92 = scalar_lea.vmem [#allocation1], 8
    %93 = vst [vmem:[%s92] sm:$0xff] %v91
    %s94 = scalar_lea.vmem [#allocation0], 16
    %v95 = vld [vmem:[%s94] sm:$0xff]
    %s96 = scalar_lea.vmem [#allocation1], 16
    %v97 = vld [vmem:[%s96] sm:$0xff]
    %v98 = vmul.f32 %v97, %v55
    %99 = vadd.xlane.f32.xlu0 %v98
    %v100 = vpop.xlane.xlu0 %99
    %v101 = vsub.f32 %v95, %v100
    %v102 = vmul.f32 %v101, %v70
    %v103 = vsel %vm54, %v102, 0.0
    %v104 = vadd.f32 %v97, %v103
    %s105 = scalar_lea.vmem [#allocation1], 16
    %106 = vst [vmem:[%s105] sm:$0xff] %v104
    %s107 = scalar_lea.vmem [#allocation0], 24
    %v108 = vld [vmem:[%s107] sm:$0xff]
    %s109 = scalar_lea.vmem [#allocation1], 24
    %v110 = vld [vmem:[%s109] sm:$0xff]
    %v111 = vmul.f32 %v110, %v55
    %112 = vadd.xlane.f32.xlu0 %v111
    %v113 = vpop.xlane.xlu0 %112
    %v114 = vsub.f32 %v108, %v113
    %v115 = vmul.f32 %v114, %v70
    %v116 = vsel %vm54, %v115, 0.0
    %v117 = vadd.f32 %v110, %v116
    %s118 = scalar_lea.vmem [#allocation1], 24
    %119 = vst [vmem:[%s118] sm:$0xff] %v117
    %vm120 = vcmask 15368
    %s121 = scalar_lea.vmem [#allocation1], 1
    %v122 = vld [vmem:[%s121] ss:$0 sm:$0xff]
    %s123 = scalar_lea.vmem [#allocation0], 1
    %v124 = vld [vmem:[%s123] ss:$0 sm:$0xff]
    %v125 = vmul.f32 %v122, %v122
    %126 = vadd.xlane.f32.xlu0 %v125
    %v127 = vpop.xlane.xlu0 %126
    %v128 = vsub.f32 %v124, %v127
    %v129 = vrsqrt.pop %v128
    %v130 = vmul.f32 %v129, %v128
    %v131 = vmul.f32 %v130, %v129
    %v132 = vmul.f32 0.5, %v131
    %v133 = vsub.f32 1.5, %v132
    %v134 = vmul.f32 %v129, %v133
    %vm135 = vweird.f32 %v128
    %vm136 = vweird.f32 %v129
    %vm137 = vmor %vm135, %vm136
    %v138 = vsel %vm137, %v129, %v134
    %v139 = vld [vmem:[#allocation0] sm:$0xff]
    %v140 = vld [vmem:[#allocation1] sm:$0xff]
    %v141 = vmul.f32 %v140, %v122
    %142 = vadd.xlane.f32.xlu0 %v141
    %v143 = vpop.xlane.xlu0 %142
    %v144 = vsub.f32 %v139, %v143
    %v145 = vmul.f32 %v144, %v138
    %vm146 = vcmask 1047553
    %vm147 = vmand %vm120, %vm146
    %v148 = vsel %vm147, %v145, 0.0
    %v149 = vadd.f32 %v140, %v148
    %150 = vst [vmem:[#allocation1] sm:$0xff] %v149
    %s151 = scalar_lea.vmem [#allocation0], 8
    %v152 = vld [vmem:[%s151] sm:$0xff]
    %s153 = scalar_lea.vmem [#allocation1], 8
    %v154 = vld [vmem:[%s153] sm:$0xff]
    %v155 = vmul.f32 %v154, %v122
    %156 = vadd.xlane.f32.xlu0 %v155
    %v157 = vpop.xlane.xlu0 %156
    %v158 = vsub.f32 %v152, %v157
    %v159 = vmul.f32 %v158, %v138
    %v160 = vsel %vm120, %v159, 0.0
    %v161 = vadd.f32 %v154, %v160
    %s162 = scalar_lea.vmem [#allocation1], 8
    %163 = vst [vmem:[%s162] sm:$0xff] %v161
    %s164 = scalar_lea.vmem [#allocation0], 16
    %v165 = vld [vmem:[%s164] sm:$0xff]
    %s166 = scalar_lea.vmem [#allocation1], 16
    %v167 = vld [vmem:[%s166] sm:$0xff]
    %v168 = vmul.f32 %v167, %v122
    %169 = vadd.xlane.f32.xlu0 %v168
    %v170 = vpop.xlane.xlu0 %169
    %v171 = vsub.f32 %v165, %v170
    %v172 = vmul.f32 %v171, %v138
    %v173 = vsel %vm120, %v172, 0.0
    %v174 = vadd.f32 %v167, %v173
    %s175 = scalar_lea.vmem [#allocation1], 16
    %176 = vst [vmem:[%s175] sm:$0xff] %v174
    %s177 = scalar_lea.vmem [#allocation0], 24
    %v178 = vld [vmem:[%s177] sm:$0xff]
    %s179 = scalar_lea.vmem [#allocation1], 24
    %v180 = vld [vmem:[%s179] sm:$0xff]
    %v181 = vmul.f32 %v180, %v122
    %182 = vadd.xlane.f32.xlu0 %v181
    %v183 = vpop.xlane.xlu0 %182
    %v184 = vsub.f32 %v178, %v183
    %v185 = vmul.f32 %v184, %v138
    %v186 = vsel %vm120, %v185, 0.0
    %v187 = vadd.f32 %v180, %v186
    %s188 = scalar_lea.vmem [#allocation1], 24
    %189 = vst [vmem:[%s188] sm:$0xff] %v187
    %vm190 = vcmask 23568
    %s191 = scalar_lea.vmem [#allocation1], 2
    %v192 = vld [vmem:[%s191] ss:$0 sm:$0xff]
    %s193 = scalar_lea.vmem [#allocation0], 2
    %v194 = vld [vmem:[%s193] ss:$0 sm:$0xff]
    %v195 = vmul.f32 %v192, %v192
    %196 = vadd.xlane.f32.xlu0 %v195
    %v197 = vpop.xlane.xlu0 %196
    %v198 = vsub.f32 %v194, %v197
    %v199 = vrsqrt.pop %v198
    %v200 = vmul.f32 %v199, %v198
    %v201 = vmul.f32 %v200, %v199
    %v202 = vmul.f32 0.5, %v201
    %v203 = vsub.f32 1.5, %v202
    %v204 = vmul.f32 %v199, %v203
    %vm205 = vweird.f32 %v198
    %vm206 = vweird.f32 %v199
    %vm207 = vmor %vm205, %vm206
    %v208 = vsel %vm207, %v199, %v204
    %v209 = vld [vmem:[#allocation0] sm:$0xff]
    %v210 = vld [vmem:[#allocation1] sm:$0xff]
    %v211 = vmul.f32 %v210, %v192
    %212 = vadd.xlane.f32.xlu0 %v211
    %v213 = vpop.xlane.xlu0 %212
    %v214 = vsub.f32 %v209, %v213
    %v215 = vmul.f32 %v214, %v208
    %vm216 = vcmask 1047554
    %vm217 = vmand %vm190, %vm216
    %v218 = vsel %vm217, %v215, 0.0
    %v219 = vadd.f32 %v210, %v218
    %220 = vst [vmem:[#allocation1] sm:$0xff] %v219
    %s221 = scalar_lea.vmem [#allocation0], 8
    %v222 = vld [vmem:[%s221] sm:$0xff]
    %s223 = scalar_lea.vmem [#allocation1], 8
    %v224 = vld [vmem:[%s223] sm:$0xff]
    %v225 = vmul.f32 %v224, %v192
    %226 = vadd.xlane.f32.xlu0 %v225
    %v227 = vpop.xlane.xlu0 %226
    %v228 = vsub.f32 %v222, %v227
    %v229 = vmul.f32 %v228, %v208
    %v230 = vsel %vm190, %v229, 0.0
    %v231 = vadd.f32 %v224, %v230
    %s232 = scalar_lea.vmem [#allocation1], 8
    %233 = vst [vmem:[%s232] sm:$0xff] %v231
    %s234 = scalar_lea.vmem [#allocation0], 16
    %v235 = vld [vmem:[%s234] sm:$0xff]
    %s236 = scalar_lea.vmem [#allocation1], 16
    %v237 = vld [vmem:[%s236] sm:$0xff]
    %v238 = vmul.f32 %v237, %v192
    %239 = vadd.xlane.f32.xlu0 %v238
    %v240 = vpop.xlane.xlu0 %239
    %v241 = vsub.f32 %v235, %v240
    %v242 = vmul.f32 %v241, %v208
    %v243 = vsel %vm190, %v242, 0.0
    %v244 = vadd.f32 %v237, %v243
    %s245 = scalar_lea.vmem [#allocation1], 16
    %246 = vst [vmem:[%s245] sm:$0xff] %v244
    %s247 = scalar_lea.vmem [#allocation0], 24
    %v248 = vld [vmem:[%s247] sm:$0xff]
    %s249 = scalar_lea.vmem [#allocation1], 24
    %v250 = vld [vmem:[%s249] sm:$0xff]
    %v251 = vmul.f32 %v250, %v192
    %252 = vadd.xlane.f32.xlu0 %v251
    %v253 = vpop.xlane.xlu0 %252
    %v254 = vsub.f32 %v248, %v253
    %v255 = vmul.f32 %v254, %v208
    %v256 = vsel %vm190, %v255, 0.0
    %v257 = vadd.f32 %v250, %v256
    %s258 = scalar_lea.vmem [#allocation1], 24
    %259 = vst [vmem:[%s258] sm:$0xff] %v257
    %vm260 = vcmask 31768
    %s261 = scalar_lea.vmem [#allocation1], 3
    %v262 = vld [vmem:[%s261] ss:$0 sm:$0xff]
    %s263 = scalar_lea.vmem [#allocation0], 3
    %v264 = vld [vmem:[%s263] ss:$0 sm:$0xff]
    %v265 = vmul.f32 %v262, %v262
    %266 = vadd.xlane.f32.xlu0 %v265
    %v267 = vpop.xlane.xlu0 %266
    %v268 = vsub.f32 %v264, %v267
    %v269 = vrsqrt.pop %v268
    %v270 = vmul.f32 %v269, %v268
    %v271 = vmul.f32 %v270, %v269
    %v272 = vmul.f32 0.5, %v271
    %v273 = vsub.f32 1.5, %v272
    %v274 = vmul.f32 %v269, %v273
    %vm275 = vweird.f32 %v268
    %vm276 = vweird.f32 %v269
    %vm277 = vmor %vm275, %vm276
    %v278 = vsel %vm277, %v269, %v274
    %v279 = vld [vmem:[#allocation0] sm:$0xff]
    %v280 = vld [vmem:[#allocation1] sm:$0xff]
    %v281 = vmul.f32 %v280, %v262
    %282 = vadd.xlane.f32.xlu0 %v281
    %v283 = vpop.xlane.xlu0 %282
    %v284 = vsub.f32 %v279, %v283
    %v285 = vmul.f32 %v284, %v278
    %vm286 = vcmask 1047555
    %vm287 = vmand %vm260, %vm286
    %v288 = vsel %vm287, %v285, 0.0
    %v289 = vadd.f32 %v280, %v288
    %290 = vst [vmem:[#allocation1] sm:$0xff] %v289
    %s291 = scalar_lea.vmem [#allocation0], 8
    %v292 = vld [vmem:[%s291] sm:$0xff]
    %s293 = scalar_lea.vmem [#allocation1], 8
    %v294 = vld [vmem:[%s293] sm:$0xff]
    %v295 = vmul.f32 %v294, %v262
    %296 = vadd.xlane.f32.xlu0 %v295
    %v297 = vpop.xlane.xlu0 %296
    %v298 = vsub.f32 %v292, %v297
    %v299 = vmul.f32 %v298, %v278
    %v300 = vsel %vm260, %v299, 0.0
    %v301 = vadd.f32 %v294, %v300
    %s302 = scalar_lea.vmem [#allocation1], 8
    %303 = vst [vmem:[%s302] sm:$0xff] %v301
    %s304 = scalar_lea.vmem [#allocation0], 16
    %v305 = vld [vmem:[%s304] sm:$0xff]
    %s306 = scalar_lea.vmem [#allocation1], 16
    %v307 = vld [vmem:[%s306] sm:$0xff]
    %v308 = vmul.f32 %v307, %v262
    %309 = vadd.xlane.f32.xlu0 %v308
    %v310 = vpop.xlane.xlu0 %309
    %v311 = vsub.f32 %v305, %v310
    %v312 = vmul.f32 %v311, %v278
    %v313 = vsel %vm260, %v312, 0.0
    %v314 = vadd.f32 %v307, %v313
    %s315 = scalar_lea.vmem [#allocation1], 16
    %316 = vst [vmem:[%s315] sm:$0xff] %v314
    %s317 = scalar_lea.vmem [#allocation0], 24
    %v318 = vld [vmem:[%s317] sm:$0xff]
    %s319 = scalar_lea.vmem [#allocation1], 24
    %v320 = vld [vmem:[%s319] sm:$0xff]
    %v321 = vmul.f32 %v320, %v262
    %322 = vadd.xlane.f32.xlu0 %v321
    %v323 = vpop.xlane.xlu0 %322
    %v324 = vsub.f32 %v318, %v323
    %v325 = vmul.f32 %v324, %v278
    %v326 = vsel %vm260, %v325, 0.0
    %v327 = vadd.f32 %v320, %v326
    %s328 = scalar_lea.vmem [#allocation1], 24
    %329 = vst [vmem:[%s328] sm:$0xff] %v327
    %vm330 = vcmask 39968
    %s331 = scalar_lea.vmem [#allocation1], 4
    %v332 = vld [vmem:[%s331] ss:$0 sm:$0xff]
    %s333 = scalar_lea.vmem [#allocation0], 4
    %v334 = vld [vmem:[%s333] ss:$0 sm:$0xff]
    %v335 = vmul.f32 %v332, %v332
    %336 = vadd.xlane.f32.xlu0 %v335
    %v337 = vpop.xlane.xlu0 %336
    %v338 = vsub.f32 %v334, %v337
    %v339 = vrsqrt.pop %v338
    %v340 = vmul.f32 %v339, %v338
    %v341 = vmul.f32 %v340, %v339
    %v342 = vmul.f32 0.5, %v341
    %v343 = vsub.f32 1.5, %v342
    %v344 = vmul.f32 %v339, %v343
    %vm345 = vweird.f32 %v338
    %vm346 = vweird.f32 %v339
    %vm347 = vmor %vm345, %vm346
    %v348 = vsel %vm347, %v339, %v344
    %v349 = vld [vmem:[#allocation0] sm:$0xff]
    %v350 = vld [vmem:[#allocation1] sm:$0xff]
    %v351 = vmul.f32 %v350, %v332
    %352 = vadd.xlane.f32.xlu0 %v351
    %v353 = vpop.xlane.xlu0 %352
    %v354 = vsub.f32 %v349, %v353
    %v355 = vmul.f32 %v354, %v348
    %vm356 = vcmask 1047556
    %vm357 = vmand %vm330, %vm356
    %v358 = vsel %vm357, %v355, 0.0
    %v359 = vadd.f32 %v350, %v358
    %360 = vst [vmem:[#allocation1] sm:$0xff] %v359
    %s361 = scalar_lea.vmem [#allocation0], 8
    %v362 = vld [vmem:[%s361] sm:$0xff]
    %s363 = scalar_lea.vmem [#allocation1], 8
    %v364 = vld [vmem:[%s363] sm:$0xff]
    %v365 = vmul.f32 %v364, %v332
    %366 = vadd.xlane.f32.xlu0 %v365
    %v367 = vpop.xlane.xlu0 %366
    %v368 = vsub.f32 %v362, %v367
    %v369 = vmul.f32 %v368, %v348
    %v370 = vsel %vm330, %v369, 0.0
    %v371 = vadd.f32 %v364, %v370
    %s372 = scalar_lea.vmem [#allocation1], 8
    %373 = vst [vmem:[%s372] sm:$0xff] %v371
    %s374 = scalar_lea.vmem [#allocation0], 16
    %v375 = vld [vmem:[%s374] sm:$0xff]
    %s376 = scalar_lea.vmem [#allocation1], 16
    %v377 = vld [vmem:[%s376] sm:$0xff]
    %v378 = vmul.f32 %v377, %v332
    %379 = vadd.xlane.f32.xlu0 %v378
    %v380 = vpop.xlane.xlu0 %379
    %v381 = vsub.f32 %v375, %v380
    %v382 = vmul.f32 %v381, %v348
    %v383 = vsel %vm330, %v382, 0.0
    %v384 = vadd.f32 %v377, %v383
    %s385 = scalar_lea.vmem [#allocation1], 16
    %386 = vst [vmem:[%s385] sm:$0xff] %v384
    %s387 = scalar_lea.vmem [#allocation0], 24
    %v388 = vld [vmem:[%s387] sm:$0xff]
    %s389 = scalar_lea.vmem [#allocation1], 24
    %v390 = vld [vmem:[%s389] sm:$0xff]
    %v391 = vmul.f32 %v390, %v332
    %392 = vadd.xlane.f32.xlu0 %v391
    %v393 = vpop.xlane.xlu0 %392
    %v394 = vsub.f32 %v388, %v393
    %v395 = vmul.f32 %v394, %v348
    %v396 = vsel %vm330, %v395, 0.0
    %v397 = vadd.f32 %v390, %v396
    %s398 = scalar_lea.vmem [#allocation1], 24
    %399 = vst [vmem:[%s398] sm:$0xff] %v397
    %vm400 = vcmask 48168
    %s401 = scalar_lea.vmem [#allocation1], 5
    %v402 = vld [vmem:[%s401] ss:$0 sm:$0xff]
    %s403 = scalar_lea.vmem [#allocation0], 5
    %v404 = vld [vmem:[%s403] ss:$0 sm:$0xff]
    %v405 = vmul.f32 %v402, %v402
    %406 = vadd.xlane.f32.xlu0 %v405
    %v407 = vpop.xlane.xlu0 %406
    %v408 = vsub.f32 %v404, %v407
    %v409 = vrsqrt.pop %v408
    %v410 = vmul.f32 %v409, %v408
    %v411 = vmul.f32 %v410, %v409
    %v412 = vmul.f32 0.5, %v411
    %v413 = vsub.f32 1.5, %v412
    %v414 = vmul.f32 %v409, %v413
    %vm415 = vweird.f32 %v408
    %vm416 = vweird.f32 %v409
    %vm417 = vmor %vm415, %vm416
    %v418 = vsel %vm417, %v409, %v414
    %v419 = vld [vmem:[#allocation0] sm:$0xff]
    %v420 = vld [vmem:[#allocation1] sm:$0xff]
    %v421 = vmul.f32 %v420, %v402
    %422 = vadd.xlane.f32.xlu0 %v421
    %v423 = vpop.xlane.xlu0 %422
    %v424 = vsub.f32 %v419, %v423
    %v425 = vmul.f32 %v424, %v418
    %vm426 = vcmask 1047557
    %vm427 = vmand %vm400, %vm426
    %v428 = vsel %vm427, %v425, 0.0
    %v429 = vadd.f32 %v420, %v428
    %430 = vst [vmem:[#allocation1] sm:$0xff] %v429
    %s431 = scalar_lea.vmem [#allocation0], 8
    %v432 = vld [vmem:[%s431] sm:$0xff]
    %s433 = scalar_lea.vmem [#allocation1], 8
    %v434 = vld [vmem:[%s433] sm:$0xff]
    %v435 = vmul.f32 %v434, %v402
    %436 = vadd.xlane.f32.xlu0 %v435
    %v437 = vpop.xlane.xlu0 %436
    %v438 = vsub.f32 %v432, %v437
    %v439 = vmul.f32 %v438, %v418
    %v440 = vsel %vm400, %v439, 0.0
    %v441 = vadd.f32 %v434, %v440
    %s442 = scalar_lea.vmem [#allocation1], 8
    %443 = vst [vmem:[%s442] sm:$0xff] %v441
    %s444 = scalar_lea.vmem [#allocation0], 16
    %v445 = vld [vmem:[%s444] sm:$0xff]
    %s446 = scalar_lea.vmem [#allocation1], 16
    %v447 = vld [vmem:[%s446] sm:$0xff]
    %v448 = vmul.f32 %v447, %v402
    %449 = vadd.xlane.f32.xlu0 %v448
    %v450 = vpop.xlane.xlu0 %449
    %v451 = vsub.f32 %v445, %v450
    %v452 = vmul.f32 %v451, %v418
    %v453 = vsel %vm400, %v452, 0.0
    %v454 = vadd.f32 %v447, %v453
    %s455 = scalar_lea.vmem [#allocation1], 16
    %456 = vst [vmem:[%s455] sm:$0xff] %v454
    %s457 = scalar_lea.vmem [#allocation0], 24
    %v458 = vld [vmem:[%s457] sm:$0xff]
    %s459 = scalar_lea.vmem [#allocation1], 24
    %v460 = vld [vmem:[%s459] sm:$0xff]
    %v461 = vmul.f32 %v460, %v402
    %462 = vadd.xlane.f32.xlu0 %v461
    %v463 = vpop.xlane.xlu0 %462
    %v464 = vsub.f32 %v458, %v463
    %v465 = vmul.f32 %v464, %v418
    %v466 = vsel %vm400, %v465, 0.0
    %v467 = vadd.f32 %v460, %v466
    %s468 = scalar_lea.vmem [#allocation1], 24
    %469 = vst [vmem:[%s468] sm:$0xff] %v467
    %vm470 = vcmask 56368
    %s471 = scalar_lea.vmem [#allocation1], 6
    %v472 = vld [vmem:[%s471] ss:$0 sm:$0xff]
    %s473 = scalar_lea.vmem [#allocation0], 6
    %v474 = vld [vmem:[%s473] ss:$0 sm:$0xff]
    %v475 = vmul.f32 %v472, %v472
    %476 = vadd.xlane.f32.xlu0 %v475
    %v477 = vpop.xlane.xlu0 %476
    %v478 = vsub.f32 %v474, %v477
    %v479 = vrsqrt.pop %v478
    %v480 = vmul.f32 %v479, %v478
    %v481 = vmul.f32 %v480, %v479
    %v482 = vmul.f32 0.5, %v481
    %v483 = vsub.f32 1.5, %v482
    %v484 = vmul.f32 %v479, %v483
    %vm485 = vweird.f32 %v478
    %vm486 = vweird.f32 %v479
    %vm487 = vmor %vm485, %vm486
    %v488 = vsel %vm487, %v479, %v484
    %v489 = vld [vmem:[#allocation0] sm:$0xff]
    %v490 = vld [vmem:[#allocation1] sm:$0xff]
    %v491 = vmul.f32 %v490, %v472
    %492 = vadd.xlane.f32.xlu0 %v491
    %v493 = vpop.xlane.xlu0 %492
    %v494 = vsub.f32 %v489, %v493
    %v495 = vmul.f32 %v494, %v488
    %vm496 = vcmask 1047558
    %vm497 = vmand %vm470, %vm496
    %v498 = vsel %vm497, %v495, 0.0
    %v499 = vadd.f32 %v490, %v498
    %500 = vst [vmem:[#allocation1] sm:$0xff] %v499
    %s501 = scalar_lea.vmem [#allocation0], 8
    %v502 = vld [vmem:[%s501] sm:$0xff]
    %s503 = scalar_lea.vmem [#allocation1], 8
    %v504 = vld [vmem:[%s503] sm:$0xff]
    %v505 = vmul.f32 %v504, %v472
    %506 = vadd.xlane.f32.xlu0 %v505
    %v507 = vpop.xlane.xlu0 %506
    %v508 = vsub.f32 %v502, %v507
    %v509 = vmul.f32 %v508, %v488
    %v510 = vsel %vm470, %v509, 0.0
    %v511 = vadd.f32 %v504, %v510
    %s512 = scalar_lea.vmem [#allocation1], 8
    %513 = vst [vmem:[%s512] sm:$0xff] %v511
    %s514 = scalar_lea.vmem [#allocation0], 16
    %v515 = vld [vmem:[%s514] sm:$0xff]
    %s516 = scalar_lea.vmem [#allocation1], 16
    %v517 = vld [vmem:[%s516] sm:$0xff]
    %v518 = vmul.f32 %v517, %v472
    %519 = vadd.xlane.f32.xlu0 %v518
    %v520 = vpop.xlane.xlu0 %519
    %v521 = vsub.f32 %v515, %v520
    %v522 = vmul.f32 %v521, %v488
    %v523 = vsel %vm470, %v522, 0.0
    %v524 = vadd.f32 %v517, %v523
    %s525 = scalar_lea.vmem [#allocation1], 16
    %526 = vst [vmem:[%s525] sm:$0xff] %v524
    %s527 = scalar_lea.vmem [#allocation0], 24
    %v528 = vld [vmem:[%s527] sm:$0xff]
    %s529 = scalar_lea.vmem [#allocation1], 24
    %v530 = vld [vmem:[%s529] sm:$0xff]
    %v531 = vmul.f32 %v530, %v472
    %532 = vadd.xlane.f32.xlu0 %v531
    %v533 = vpop.xlane.xlu0 %532
    %v534 = vsub.f32 %v528, %v533
    %v535 = vmul.f32 %v534, %v488
    %v536 = vsel %vm470, %v535, 0.0
    %v537 = vadd.f32 %v530, %v536
    %s538 = scalar_lea.vmem [#allocation1], 24
    %539 = vst [vmem:[%s538] sm:$0xff] %v537
    %vm540 = vcmask 64568
    %s541 = scalar_lea.vmem [#allocation1], 7
    %v542 = vld [vmem:[%s541] ss:$0 sm:$0xff]
    %s543 = scalar_lea.vmem [#allocation0], 7
    %v544 = vld [vmem:[%s543] ss:$0 sm:$0xff]
    %v545 = vmul.f32 %v542, %v542
    %546 = vadd.xlane.f32.xlu0 %v545
    %v547 = vpop.xlane.xlu0 %546
    %v548 = vsub.f32 %v544, %v547
    %v549 = vrsqrt.pop %v548
    %v550 = vmul.f32 %v549, %v548
    %v551 = vmul.f32 %v550, %v549
    %v552 = vmul.f32 0.5, %v551
    %v553 = vsub.f32 1.5, %v552
    %v554 = vmul.f32 %v549, %v553
    %vm555 = vweird.f32 %v548
    %vm556 = vweird.f32 %v549
    %vm557 = vmor %vm555, %vm556
    %v558 = vsel %vm557, %v549, %v554
    %v559 = vld [vmem:[#allocation0] sm:$0xff]
    %v560 = vld [vmem:[#allocation1] sm:$0xff]
    %v561 = vmul.f32 %v560, %v542
    %562 = vadd.xlane.f32.xlu0 %v561
    %v563 = vpop.xlane.xlu0 %562
    %v564 = vsub.f32 %v559, %v563
    %v565 = vmul.f32 %v564, %v558
    %vm566 = vcmask 1047559
    %vm567 = vmand %vm540, %vm566
    %v568 = vsel %vm567, %v565, 0.0
    %v569 = vadd.f32 %v560, %v568
    %570 = vst [vmem:[#allocation1] sm:$0xff] %v569
    %s571 = scalar_lea.vmem [#allocation0], 8
    %v572 = vld [vmem:[%s571] sm:$0xff]
    %s573 = scalar_lea.vmem [#allocation1], 8
    %v574 = vld [vmem:[%s573] sm:$0xff]
    %v575 = vmul.f32 %v574, %v542
    %576 = vadd.xlane.f32.xlu0 %v575
    %v577 = vpop.xlane.xlu0 %576
    %v578 = vsub.f32 %v572, %v577
    %v579 = vmul.f32 %v578, %v558
    %v580 = vsel %vm540, %v579, 0.0
    %v581 = vadd.f32 %v574, %v580
    %s582 = scalar_lea.vmem [#allocation1], 8
    %583 = vst [vmem:[%s582] sm:$0xff] %v581
    %s584 = scalar_lea.vmem [#allocation0], 16
    %v585 = vld [vmem:[%s584] sm:$0xff]
    %s586 = scalar_lea.vmem [#allocation1], 16
    %v587 = vld [vmem:[%s586] sm:$0xff]
    %v588 = vmul.f32 %v587, %v542
    %589 = vadd.xlane.f32.xlu0 %v588
    %v590 = vpop.xlane.xlu0 %589
    %v591 = vsub.f32 %v585, %v590
    %v592 = vmul.f32 %v591, %v558
    %v593 = vsel %vm540, %v592, 0.0
    %v594 = vadd.f32 %v587, %v593
    %s595 = scalar_lea.vmem [#allocation1], 16
    %596 = vst [vmem:[%s595] sm:$0xff] %v594
    %s597 = scalar_lea.vmem [#allocation0], 24
    %v598 = vld [vmem:[%s597] sm:$0xff]
    %s599 = scalar_lea.vmem [#allocation1], 24
    %v600 = vld [vmem:[%s599] sm:$0xff]
    %v601 = vmul.f32 %v600, %v542
    %602 = vadd.xlane.f32.xlu0 %v601
    %v603 = vpop.xlane.xlu0 %602
    %v604 = vsub.f32 %v598, %v603
    %v605 = vmul.f32 %v604, %v558
    %v606 = vsel %vm540, %v605, 0.0
    %v607 = vadd.f32 %v600, %v606
    %s608 = scalar_lea.vmem [#allocation1], 24
    %609 = vst [vmem:[%s608] sm:$0xff] %v607
    %vm610 = vcmask 72768
    %s611 = scalar_lea.vmem [#allocation1], 8
    %v612 = vld [vmem:[%s611] ss:$0 sm:$0xff]
    %s613 = scalar_lea.vmem [#allocation0], 8
    %v614 = vld [vmem:[%s613] ss:$0 sm:$0xff]
    %v615 = vmul.f32 %v612, %v612
    %616 = vadd.xlane.f32.xlu0 %v615
    %v617 = vpop.xlane.xlu0 %616
    %v618 = vsub.f32 %v614, %v617
    %v619 = vrsqrt.pop %v618
    %v620 = vmul.f32 %v619, %v618
    %v621 = vmul.f32 %v620, %v619
    %v622 = vmul.f32 0.5, %v621
    %v623 = vsub.f32 1.5, %v622
    %v624 = vmul.f32 %v619, %v623
    %vm625 = vweird.f32 %v618
    %vm626 = vweird.f32 %v619
    %vm627 = vmor %vm625, %vm626
    %v628 = vsel %vm627, %v619, %v624
    %s629 = scalar_lea.vmem [#allocation0], 8
    %v630 = vld [vmem:[%s629] sm:$0xff]
    %s631 = scalar_lea.vmem [#allocation1], 8
    %v632 = vld [vmem:[%s631] sm:$0xff]
    %v633 = vmul.f32 %v632, %v612
    %634 = vadd.xlane.f32.xlu0 %v633
    %v635 = vpop.xlane.xlu0 %634
    %v636 = vsub.f32 %v630, %v635
    %v637 = vmul.f32 %v636, %v628
    %v638 = vsel %vm610, %v637, 0.0
    %v639 = vadd.f32 %v632, %v638
    %s640 = scalar_lea.vmem [#allocation1], 8
    %641 = vst [vmem:[%s640] sm:$0xff] %v639
    %s642 = scalar_lea.vmem [#allocation0], 16
    %v643 = vld [vmem:[%s642] sm:$0xff]
    %s644 = scalar_lea.vmem [#allocation1], 16
    %v645 = vld [vmem:[%s644] sm:$0xff]
    %v646 = vmul.f32 %v645, %v612
    %647 = vadd.xlane.f32.xlu0 %v646
    %v648 = vpop.xlane.xlu0 %647
    %v649 = vsub.f32 %v643, %v648
    %v650 = vmul.f32 %v649, %v628
    %v651 = vsel %vm610, %v650, 0.0
    %v652 = vadd.f32 %v645, %v651
    %s653 = scalar_lea.vmem [#allocation1], 16
    %654 = vst [vmem:[%s653] sm:$0xff] %v652
    %s655 = scalar_lea.vmem [#allocation0], 24
    %v656 = vld [vmem:[%s655] sm:$0xff]
    %s657 = scalar_lea.vmem [#allocation1], 24
    %v658 = vld [vmem:[%s657] sm:$0xff]
    %v659 = vmul.f32 %v658, %v612
    %660 = vadd.xlane.f32.xlu0 %v659
    %v661 = vpop.xlane.xlu0 %660
    %v662 = vsub.f32 %v656, %v661
    %v663 = vmul.f32 %v662, %v628
    %v664 = vsel %vm610, %v663, 0.0
    %v665 = vadd.f32 %v658, %v664
    %s666 = scalar_lea.vmem [#allocation1], 24
    %667 = vst [vmem:[%s666] sm:$0xff] %v665
    %vm668 = vcmask 80968
    %s669 = scalar_lea.vmem [#allocation1], 9
    %v670 = vld [vmem:[%s669] ss:$0 sm:$0xff]
    %s671 = scalar_lea.vmem [#allocation0], 9
    %v672 = vld [vmem:[%s671] ss:$0 sm:$0xff]
    %v673 = vmul.f32 %v670, %v670
    %674 = vadd.xlane.f32.xlu0 %v673
    %v675 = vpop.xlane.xlu0 %674
    %v676 = vsub.f32 %v672, %v675
    %v677 = vrsqrt.pop %v676
    %v678 = vmul.f32 %v677, %v676
    %v679 = vmul.f32 %v678, %v677
    %v680 = vmul.f32 0.5, %v679
    %v681 = vsub.f32 1.5, %v680
    %v682 = vmul.f32 %v677, %v681
    %vm683 = vweird.f32 %v676
    %vm684 = vweird.f32 %v677
    %vm685 = vmor %vm683, %vm684
    %v686 = vsel %vm685, %v677, %v682
    %s687 = scalar_lea.vmem [#allocation0], 8
    %v688 = vld [vmem:[%s687] sm:$0xff]
    %s689 = scalar_lea.vmem [#allocation1], 8
    %v690 = vld [vmem:[%s689] sm:$0xff]
    %v691 = vmul.f32 %v690, %v670
    %692 = vadd.xlane.f32.xlu0 %v691
    %v693 = vpop.xlane.xlu0 %692
    %v694 = vsub.f32 %v688, %v693
    %v695 = vmul.f32 %v694, %v686
    %vm696 = vcmask 1047553
    %vm697 = vmand %vm668, %vm696
    %v698 = vsel %vm697, %v695, 0.0
    %v699 = vadd.f32 %v690, %v698
    %s700 = scalar_lea.vmem [#allocation1], 8
    %701 = vst [vmem:[%s700] sm:$0xff] %v699
    %s702 = scalar_lea.vmem [#allocation0], 16
    %v703 = vld [vmem:[%s702] sm:$0xff]
    %s704 = scalar_lea.vmem [#allocation1], 16
    %v705 = vld [vmem:[%s704] sm:$0xff]
    %v706 = vmul.f32 %v705, %v670
    %707 = vadd.xlane.f32.xlu0 %v706
    %v708 = vpop.xlane.xlu0 %707
    %v709 = vsub.f32 %v703, %v708
    %v710 = vmul.f32 %v709, %v686
    %v711 = vsel %vm668, %v710, 0.0
    %v712 = vadd.f32 %v705, %v711
    %s713 = scalar_lea.vmem [#allocation1], 16
    %714 = vst [vmem:[%s713] sm:$0xff] %v712
    %s715 = scalar_lea.vmem [#allocation0], 24
    %v716 = vld [vmem:[%s715] sm:$0xff]
    %s717 = scalar_lea.vmem [#allocation1], 24
    %v718 = vld [vmem:[%s717] sm:$0xff]
    %v719 = vmul.f32 %v718, %v670
    %720 = vadd.xlane.f32.xlu0 %v719
    %v721 = vpop.xlane.xlu0 %720
    %v722 = vsub.f32 %v716, %v721
    %v723 = vmul.f32 %v722, %v686
    %v724 = vsel %vm668, %v723, 0.0
    %v725 = vadd.f32 %v718, %v724
    %s726 = scalar_lea.vmem [#allocation1], 24
    %727 = vst [vmem:[%s726] sm:$0xff] %v725
    %vm728 = vcmask 89168
    %s729 = scalar_lea.vmem [#allocation1], 10
    %v730 = vld [vmem:[%s729] ss:$0 sm:$0xff]
    %s731 = scalar_lea.vmem [#allocation0], 10
    %v732 = vld [vmem:[%s731] ss:$0 sm:$0xff]
    %v733 = vmul.f32 %v730, %v730
    %734 = vadd.xlane.f32.xlu0 %v733
    %v735 = vpop.xlane.xlu0 %734
    %v736 = vsub.f32 %v732, %v735
    %v737 = vrsqrt.pop %v736
    %v738 = vmul.f32 %v737, %v736
    %v739 = vmul.f32 %v738, %v737
    %v740 = vmul.f32 0.5, %v739
    %v741 = vsub.f32 1.5, %v740
    %v742 = vmul.f32 %v737, %v741
    %vm743 = vweird.f32 %v736
    %vm744 = vweird.f32 %v737
    %vm745 = vmor %vm743, %vm744
    %v746 = vsel %vm745, %v737, %v742
    %s747 = scalar_lea.vmem [#allocation0], 8
    %v748 = vld [vmem:[%s747] sm:$0xff]
    %s749 = scalar_lea.vmem [#allocation1], 8
    %v750 = vld [vmem:[%s749] sm:$0xff]
    %v751 = vmul.f32 %v750, %v730
    %752 = vadd.xlane.f32.xlu0 %v751
    %v753 = vpop.xlane.xlu0 %752
    %v754 = vsub.f32 %v748, %v753
    %v755 = vmul.f32 %v754, %v746
    %vm756 = vcmask 1047554
    %vm757 = vmand %vm728, %vm756
    %v758 = vsel %vm757, %v755, 0.0
    %v759 = vadd.f32 %v750, %v758
    %s760 = scalar_lea.vmem [#allocation1], 8
    %761 = vst [vmem:[%s760] sm:$0xff] %v759
    %s762 = scalar_lea.vmem [#allocation0], 16
    %v763 = vld [vmem:[%s762] sm:$0xff]
    %s764 = scalar_lea.vmem [#allocation1], 16
    %v765 = vld [vmem:[%s764] sm:$0xff]
    %v766 = vmul.f32 %v765, %v730
    %767 = vadd.xlane.f32.xlu0 %v766
    %v768 = vpop.xlane.xlu0 %767
    %v769 = vsub.f32 %v763, %v768
    %v770 = vmul.f32 %v769, %v746
    %v771 = vsel %vm728, %v770, 0.0
    %v772 = vadd.f32 %v765, %v771
    %s773 = scalar_lea.vmem [#allocation1], 16
    %774 = vst [vmem:[%s773] sm:$0xff] %v772
    %s775 = scalar_lea.vmem [#allocation0], 24
    %v776 = vld [vmem:[%s775] sm:$0xff]
    %s777 = scalar_lea.vmem [#allocation1], 24
    %v778 = vld [vmem:[%s777] sm:$0xff]
    %v779 = vmul.f32 %v778, %v730
    %780 = vadd.xlane.f32.xlu0 %v779
    %v781 = vpop.xlane.xlu0 %780
    %v782 = vsub.f32 %v776, %v781
    %v783 = vmul.f32 %v782, %v746
    %v784 = vsel %vm728, %v783, 0.0
    %v785 = vadd.f32 %v778, %v784
    %s786 = scalar_lea.vmem [#allocation1], 24
    %787 = vst [vmem:[%s786] sm:$0xff] %v785
    %vm788 = vcmask 97368
    %s789 = scalar_lea.vmem [#allocation1], 11
    %v790 = vld [vmem:[%s789] ss:$0 sm:$0xff]
    %s791 = scalar_lea.vmem [#allocation0], 11
    %v792 = vld [vmem:[%s791] ss:$0 sm:$0xff]
    %v793 = vmul.f32 %v790, %v790
    %794 = vadd.xlane.f32.xlu0 %v793
    %v795 = vpop.xlane.xlu0 %794
    %v796 = vsub.f32 %v792, %v795
    %v797 = vrsqrt.pop %v796
    %v798 = vmul.f32 %v797, %v796
    %v799 = vmul.f32 %v798, %v797
    %v800 = vmul.f32 0.5, %v799
    %v801 = vsub.f32 1.5, %v800
    %v802 = vmul.f32 %v797, %v801
    %vm803 = vweird.f32 %v796
    %vm804 = vweird.f32 %v797
    %vm805 = vmor %vm803, %vm804
    %v806 = vsel %vm805, %v797, %v802
    %s807 = scalar_lea.vmem [#allocation0], 8
    %v808 = vld [vmem:[%s807] sm:$0xff]
    %s809 = scalar_lea.vmem [#allocation1], 8
    %v810 = vld [vmem:[%s809] sm:$0xff]
    %v811 = vmul.f32 %v810, %v790
    %812 = vadd.xlane.f32.xlu0 %v811
    %v813 = vpop.xlane.xlu0 %812
    %v814 = vsub.f32 %v808, %v813
    %v815 = vmul.f32 %v814, %v806
    %vm816 = vcmask 1047555
    %vm817 = vmand %vm788, %vm816
    %v818 = vsel %vm817, %v815, 0.0
    %v819 = vadd.f32 %v810, %v818
    %s820 = scalar_lea.vmem [#allocation1], 8
    %821 = vst [vmem:[%s820] sm:$0xff] %v819
    %s822 = scalar_lea.vmem [#allocation0], 16
    %v823 = vld [vmem:[%s822] sm:$0xff]
    %s824 = scalar_lea.vmem [#allocation1], 16
    %v825 = vld [vmem:[%s824] sm:$0xff]
    %v826 = vmul.f32 %v825, %v790
    %827 = vadd.xlane.f32.xlu0 %v826
    %v828 = vpop.xlane.xlu0 %827
    %v829 = vsub.f32 %v823, %v828
    %v830 = vmul.f32 %v829, %v806
    %v831 = vsel %vm788, %v830, 0.0
    %v832 = vadd.f32 %v825, %v831
    %s833 = scalar_lea.vmem [#allocation1], 16
    %834 = vst [vmem:[%s833] sm:$0xff] %v832
    %s835 = scalar_lea.vmem [#allocation0], 24
    %v836 = vld [vmem:[%s835] sm:$0xff]
    %s837 = scalar_lea.vmem [#allocation1], 24
    %v838 = vld [vmem:[%s837] sm:$0xff]
    %v839 = vmul.f32 %v838, %v790
    %840 = vadd.xlane.f32.xlu0 %v839
    %v841 = vpop.xlane.xlu0 %840
    %v842 = vsub.f32 %v836, %v841
    %v843 = vmul.f32 %v842, %v806
    %v844 = vsel %vm788, %v843, 0.0
    %v845 = vadd.f32 %v838, %v844
    %s846 = scalar_lea.vmem [#allocation1], 24
    %847 = vst [vmem:[%s846] sm:$0xff] %v845
    %vm848 = vcmask 105568
    %s849 = scalar_lea.vmem [#allocation1], 12
    %v850 = vld [vmem:[%s849] ss:$0 sm:$0xff]
    %s851 = scalar_lea.vmem [#allocation0], 12
    %v852 = vld [vmem:[%s851] ss:$0 sm:$0xff]
    %v853 = vmul.f32 %v850, %v850
    %854 = vadd.xlane.f32.xlu0 %v853
    %v855 = vpop.xlane.xlu0 %854
    %v856 = vsub.f32 %v852, %v855
    %v857 = vrsqrt.pop %v856
    %v858 = vmul.f32 %v857, %v856
    %v859 = vmul.f32 %v858, %v857
    %v860 = vmul.f32 0.5, %v859
    %v861 = vsub.f32 1.5, %v860
    %v862 = vmul.f32 %v857, %v861
    %vm863 = vweird.f32 %v856
    %vm864 = vweird.f32 %v857
    %vm865 = vmor %vm863, %vm864
    %v866 = vsel %vm865, %v857, %v862
    %s867 = scalar_lea.vmem [#allocation0], 8
    %v868 = vld [vmem:[%s867] sm:$0xff]
    %s869 = scalar_lea.vmem [#allocation1], 8
    %v870 = vld [vmem:[%s869] sm:$0xff]
    %v871 = vmul.f32 %v870, %v850
    %872 = vadd.xlane.f32.xlu0 %v871
    %v873 = vpop.xlane.xlu0 %872
    %v874 = vsub.f32 %v868, %v873
    %v875 = vmul.f32 %v874, %v866
    %vm876 = vcmask 1047556
    %vm877 = vmand %vm848, %vm876
    %v878 = vsel %vm877, %v875, 0.0
    %v879 = vadd.f32 %v870, %v878
    %s880 = scalar_lea.vmem [#allocation1], 8
    %881 = vst [vmem:[%s880] sm:$0xff] %v879
    %s882 = scalar_lea.vmem [#allocation0], 16
    %v883 = vld [vmem:[%s882] sm:$0xff]
    %s884 = scalar_lea.vmem [#allocation1], 16
    %v885 = vld [vmem:[%s884] sm:$0xff]
    %v886 = vmul.f32 %v885, %v850
    %887 = vadd.xlane.f32.xlu0 %v886
    %v888 = vpop.xlane.xlu0 %887
    %v889 = vsub.f32 %v883, %v888
    %v890 = vmul.f32 %v889, %v866
    %v891 = vsel %vm848, %v890, 0.0
    %v892 = vadd.f32 %v885, %v891
    %s893 = scalar_lea.vmem [#allocation1], 16
    %894 = vst [vmem:[%s893] sm:$0xff] %v892
    %s895 = scalar_lea.vmem [#allocation0], 24
    %v896 = vld [vmem:[%s895] sm:$0xff]
    %s897 = scalar_lea.vmem [#allocation1], 24
    %v898 = vld [vmem:[%s897] sm:$0xff]
    %v899 = vmul.f32 %v898, %v850
    %900 = vadd.xlane.f32.xlu0 %v899
    %v901 = vpop.xlane.xlu0 %900
    %v902 = vsub.f32 %v896, %v901
    %v903 = vmul.f32 %v902, %v866
    %v904 = vsel %vm848, %v903, 0.0
    %v905 = vadd.f32 %v898, %v904
    %s906 = scalar_lea.vmem [#allocation1], 24
    %907 = vst [vmem:[%s906] sm:$0xff] %v905
    %vm908 = vcmask 113768
    %s909 = scalar_lea.vmem [#allocation1], 13
    %v910 = vld [vmem:[%s909] ss:$0 sm:$0xff]
    %s911 = scalar_lea.vmem [#allocation0], 13
    %v912 = vld [vmem:[%s911] ss:$0 sm:$0xff]
    %v913 = vmul.f32 %v910, %v910
    %914 = vadd.xlane.f32.xlu0 %v913
    %v915 = vpop.xlane.xlu0 %914
    %v916 = vsub.f32 %v912, %v915
    %v917 = vrsqrt.pop %v916
    %v918 = vmul.f32 %v917, %v916
    %v919 = vmul.f32 %v918, %v917
    %v920 = vmul.f32 0.5, %v919
    %v921 = vsub.f32 1.5, %v920
    %v922 = vmul.f32 %v917, %v921
    %vm923 = vweird.f32 %v916
    %vm924 = vweird.f32 %v917
    %vm925 = vmor %vm923, %vm924
    %v926 = vsel %vm925, %v917, %v922
    %s927 = scalar_lea.vmem [#allocation0], 8
    %v928 = vld [vmem:[%s927] sm:$0xff]
    %s929 = scalar_lea.vmem [#allocation1], 8
    %v930 = vld [vmem:[%s929] sm:$0xff]
    %v931 = vmul.f32 %v930, %v910
    %932 = vadd.xlane.f32.xlu0 %v931
    %v933 = vpop.xlane.xlu0 %932
    %v934 = vsub.f32 %v928, %v933
    %v935 = vmul.f32 %v934, %v926
    %vm936 = vcmask 1047557
    %vm937 = vmand %vm908, %vm936
    %v938 = vsel %vm937, %v935, 0.0
    %v939 = vadd.f32 %v930, %v938
    %s940 = scalar_lea.vmem [#allocation1], 8
    %941 = vst [vmem:[%s940] sm:$0xff] %v939
    %s942 = scalar_lea.vmem [#allocation0], 16
    %v943 = vld [vmem:[%s942] sm:$0xff]
    %s944 = scalar_lea.vmem [#allocation1], 16
    %v945 = vld [vmem:[%s944] sm:$0xff]
    %v946 = vmul.f32 %v945, %v910
    %947 = vadd.xlane.f32.xlu0 %v946
    %v948 = vpop.xlane.xlu0 %947
    %v949 = vsub.f32 %v943, %v948
    %v950 = vmul.f32 %v949, %v926
    %v951 = vsel %vm908, %v950, 0.0
    %v952 = vadd.f32 %v945, %v951
    %s953 = scalar_lea.vmem [#allocation1], 16
    %954 = vst [vmem:[%s953] sm:$0xff] %v952
    %s955 = scalar_lea.vmem [#allocation0], 24
    %v956 = vld [vmem:[%s955] sm:$0xff]
    %s957 = scalar_lea.vmem [#allocation1], 24
    %v958 = vld [vmem:[%s957] sm:$0xff]
    %v959 = vmul.f32 %v958, %v910
    %960 = vadd.xlane.f32.xlu0 %v959
    %v961 = vpop.xlane.xlu0 %960
    %v962 = vsub.f32 %v956, %v961
    %v963 = vmul.f32 %v962, %v926
    %v964 = vsel %vm908, %v963, 0.0
    %v965 = vadd.f32 %v958, %v964
    %s966 = scalar_lea.vmem [#allocation1], 24
    %967 = vst [vmem:[%s966] sm:$0xff] %v965
    %vm968 = vcmask 121968
    %s969 = scalar_lea.vmem [#allocation1], 14
    %v970 = vld [vmem:[%s969] ss:$0 sm:$0xff]
    %s971 = scalar_lea.vmem [#allocation0], 14
    %v972 = vld [vmem:[%s971] ss:$0 sm:$0xff]
    %v973 = vmul.f32 %v970, %v970
    %974 = vadd.xlane.f32.xlu0 %v973
    %v975 = vpop.xlane.xlu0 %974
    %v976 = vsub.f32 %v972, %v975
    %v977 = vrsqrt.pop %v976
    %v978 = vmul.f32 %v977, %v976
    %v979 = vmul.f32 %v978, %v977
    %v980 = vmul.f32 0.5, %v979
    %v981 = vsub.f32 1.5, %v980
    %v982 = vmul.f32 %v977, %v981
    %vm983 = vweird.f32 %v976
    %vm984 = vweird.f32 %v977
    %vm985 = vmor %vm983, %vm984
    %v986 = vsel %vm985, %v977, %v982
    %s987 = scalar_lea.vmem [#allocation0], 8
    %v988 = vld [vmem:[%s987] sm:$0xff]
    %s989 = scalar_lea.vmem [#allocation1], 8
    %v990 = vld [vmem:[%s989] sm:$0xff]
    %v991 = vmul.f32 %v990, %v970
    %992 = vadd.xlane.f32.xlu0 %v991
    %v993 = vpop.xlane.xlu0 %992
    %v994 = vsub.f32 %v988, %v993
    %v995 = vmul.f32 %v994, %v986
    %vm996 = vcmask 1047558
    %vm997 = vmand %vm968, %vm996
    %v998 = vsel %vm997, %v995, 0.0
    %v999 = vadd.f32 %v990, %v998
    %s1000 = scalar_lea.vmem [#allocation1], 8
    %1001 = vst [vmem:[%s1000] sm:$0xff] %v999
    %s1002 = scalar_lea.vmem [#allocation0], 16
    %v1003 = vld [vmem:[%s1002] sm:$0xff]
    %s1004 = scalar_lea.vmem [#allocation1], 16
    %v1005 = vld [vmem:[%s1004] sm:$0xff]
    %v1006 = vmul.f32 %v1005, %v970
    %1007 = vadd.xlane.f32.xlu0 %v1006
    %v1008 = vpop.xlane.xlu0 %1007
    %v1009 = vsub.f32 %v1003, %v1008
    %v1010 = vmul.f32 %v1009, %v986
    %v1011 = vsel %vm968, %v1010, 0.0
    %v1012 = vadd.f32 %v1005, %v1011
    %s1013 = scalar_lea.vmem [#allocation1], 16
    %1014 = vst [vmem:[%s1013] sm:$0xff] %v1012
    %s1015 = scalar_lea.vmem [#allocation0], 24
    %v1016 = vld [vmem:[%s1015] sm:$0xff]
    %s1017 = scalar_lea.vmem [#allocation1], 24
    %v1018 = vld [vmem:[%s1017] sm:$0xff]
    %v1019 = vmul.f32 %v1018, %v970
    %1020 = vadd.xlane.f32.xlu0 %v1019
    %v1021 = vpop.xlane.xlu0 %1020
    %v1022 = vsub.f32 %v1016, %v1021
    %v1023 = vmul.f32 %v1022, %v986
    %v1024 = vsel %vm968, %v1023, 0.0
    %v1025 = vadd.f32 %v1018, %v1024
    %s1026 = scalar_lea.vmem [#allocation1], 24
    %1027 = vst [vmem:[%s1026] sm:$0xff] %v1025
    %vm1028 = vcmask 130168
    %s1029 = scalar_lea.vmem [#allocation1], 15
    %v1030 = vld [vmem:[%s1029] ss:$0 sm:$0xff]
    %s1031 = scalar_lea.vmem [#allocation0], 15
    %v1032 = vld [vmem:[%s1031] ss:$0 sm:$0xff]
    %v1033 = vmul.f32 %v1030, %v1030
    %1034 = vadd.xlane.f32.xlu0 %v1033
    %v1035 = vpop.xlane.xlu0 %1034
    %v1036 = vsub.f32 %v1032, %v1035
    %v1037 = vrsqrt.pop %v1036
    %v1038 = vmul.f32 %v1037, %v1036
    %v1039 = vmul.f32 %v1038, %v1037
    %v1040 = vmul.f32 0.5, %v1039
    %v1041 = vsub.f32 1.5, %v1040
    %v1042 = vmul.f32 %v1037, %v1041
    %vm1043 = vweird.f32 %v1036
    %vm1044 = vweird.f32 %v1037
    %vm1045 = vmor %vm1043, %vm1044
    %v1046 = vsel %vm1045, %v1037, %v1042
    %s1047 = scalar_lea.vmem [#allocation0], 8
    %v1048 = vld [vmem:[%s1047] sm:$0xff]
    %s1049 = scalar_lea.vmem [#allocation1], 8
    %v1050 = vld [vmem:[%s1049] sm:$0xff]
    %v1051 = vmul.f32 %v1050, %v1030
    %1052 = vadd.xlane.f32.xlu0 %v1051
    %v1053 = vpop.xlane.xlu0 %1052
    %v1054 = vsub.f32 %v1048, %v1053
    %v1055 = vmul.f32 %v1054, %v1046
    %vm1056 = vcmask 1047559
    %vm1057 = vmand %vm1028, %vm1056
    %v1058 = vsel %vm1057, %v1055, 0.0
    %v1059 = vadd.f32 %v1050, %v1058
    %s1060 = scalar_lea.vmem [#allocation1], 8
    %1061 = vst [vmem:[%s1060] sm:$0xff] %v1059
    %s1062 = scalar_lea.vmem [#allocation0], 16
    %v1063 = vld [vmem:[%s1062] sm:$0xff]
    %s1064 = scalar_lea.vmem [#allocation1], 16
    %v1065 = vld [vmem:[%s1064] sm:$0xff]
    %v1066 = vmul.f32 %v1065, %v1030
    %1067 = vadd.xlane.f32.xlu0 %v1066
    %v1068 = vpop.xlane.xlu0 %1067
    %v1069 = vsub.f32 %v1063, %v1068
    %v1070 = vmul.f32 %v1069, %v1046
    %v1071 = vsel %vm1028, %v1070, 0.0
    %v1072 = vadd.f32 %v1065, %v1071
    %s1073 = scalar_lea.vmem [#allocation1], 16
    %1074 = vst [vmem:[%s1073] sm:$0xff] %v1072
    %s1075 = scalar_lea.vmem [#allocation0], 24
    %v1076 = vld [vmem:[%s1075] sm:$0xff]
    %s1077 = scalar_lea.vmem [#allocation1], 24
    %v1078 = vld [vmem:[%s1077] sm:$0xff]
    %v1079 = vmul.f32 %v1078, %v1030
    %1080 = vadd.xlane.f32.xlu0 %v1079
    %v1081 = vpop.xlane.xlu0 %1080
    %v1082 = vsub.f32 %v1076, %v1081
    %v1083 = vmul.f32 %v1082, %v1046
    %v1084 = vsel %vm1028, %v1083, 0.0
    %v1085 = vadd.f32 %v1078, %v1084
    %s1086 = scalar_lea.vmem [#allocation1], 24
    %1087 = vst [vmem:[%s1086] sm:$0xff] %v1085
    %vm1088 = vcmask 138368
    %s1089 = scalar_lea.vmem [#allocation1], 16
    %v1090 = vld [vmem:[%s1089] ss:$0 sm:$0xff]
    %s1091 = scalar_lea.vmem [#allocation0], 16
    %v1092 = vld [vmem:[%s1091] ss:$0 sm:$0xff]
    %v1093 = vmul.f32 %v1090, %v1090
    %1094 = vadd.xlane.f32.xlu0 %v1093
    %v1095 = vpop.xlane.xlu0 %1094
    %v1096 = vsub.f32 %v1092, %v1095
    %v1097 = vrsqrt.pop %v1096
    %v1098 = vmul.f32 %v1097, %v1096
    %v1099 = vmul.f32 %v1098, %v1097
    %v1100 = vmul.f32 0.5, %v1099
    %v1101 = vsub.f32 1.5, %v1100
    %v1102 = vmul.f32 %v1097, %v1101
    %vm1103 = vweird.f32 %v1096
    %vm1104 = vweird.f32 %v1097
    %vm1105 = vmor %vm1103, %vm1104
    %v1106 = vsel %vm1105, %v1097, %v1102
    %s1107 = scalar_lea.vmem [#allocation0], 16
    %v1108 = vld [vmem:[%s1107] sm:$0xff]
    %s1109 = scalar_lea.vmem [#allocation1], 16
    %v1110 = vld [vmem:[%s1109] sm:$0xff]
    %v1111 = vmul.f32 %v1110, %v1090
    %1112 = vadd.xlane.f32.xlu0 %v1111
    %v1113 = vpop.xlane.xlu0 %1112
    %v1114 = vsub.f32 %v1108, %v1113
    %v1115 = vmul.f32 %v1114, %v1106
    %v1116 = vsel %vm1088, %v1115, 0.0
    %v1117 = vadd.f32 %v1110, %v1116
    %s1118 = scalar_lea.vmem [#allocation1], 16
    %1119 = vst [vmem:[%s1118] sm:$0xff] %v1117
    %s1120 = scalar_lea.vmem [#allocation0], 24
    %v1121 = vld [vmem:[%s1120] sm:$0xff]
    %s1122 = scalar_lea.vmem [#allocation1], 24
    %v1123 = vld [vmem:[%s1122] sm:$0xff]
    %v1124 = vmul.f32 %v1123, %v1090
    %1125 = vadd.xlane.f32.xlu0 %v1124
    %v1126 = vpop.xlane.xlu0 %1125
    %v1127 = vsub.f32 %v1121, %v1126
    %v1128 = vmul.f32 %v1127, %v1106
    %v1129 = vsel %vm1088, %v1128, 0.0
    %v1130 = vadd.f32 %v1123, %v1129
    %s1131 = scalar_lea.vmem [#allocation1], 24
    %1132 = vst [vmem:[%s1131] sm:$0xff] %v1130
    %vm1133 = vcmask 146568
    %s1134 = scalar_lea.vmem [#allocation1], 17
    %v1135 = vld [vmem:[%s1134] ss:$0 sm:$0xff]
    %s1136 = scalar_lea.vmem [#allocation0], 17
    %v1137 = vld [vmem:[%s1136] ss:$0 sm:$0xff]
    %v1138 = vmul.f32 %v1135, %v1135
    %1139 = vadd.xlane.f32.xlu0 %v1138
    %v1140 = vpop.xlane.xlu0 %1139
    %v1141 = vsub.f32 %v1137, %v1140
    %v1142 = vrsqrt.pop %v1141
    %v1143 = vmul.f32 %v1142, %v1141
    %v1144 = vmul.f32 %v1143, %v1142
    %v1145 = vmul.f32 0.5, %v1144
    %v1146 = vsub.f32 1.5, %v1145
    %v1147 = vmul.f32 %v1142, %v1146
    %vm1148 = vweird.f32 %v1141
    %vm1149 = vweird.f32 %v1142
    %vm1150 = vmor %vm1148, %vm1149
    %v1151 = vsel %vm1150, %v1142, %v1147
    %s1152 = scalar_lea.vmem [#allocation0], 16
    %v1153 = vld [vmem:[%s1152] sm:$0xff]
    %s1154 = scalar_lea.vmem [#allocation1], 16
    %v1155 = vld [vmem:[%s1154] sm:$0xff]
    %v1156 = vmul.f32 %v1155, %v1135
    %1157 = vadd.xlane.f32.xlu0 %v1156
    %v1158 = vpop.xlane.xlu0 %1157
    %v1159 = vsub.f32 %v1153, %v1158
    %v1160 = vmul.f32 %v1159, %v1151
    %vm1161 = vcmask 1047553
    %vm1162 = vmand %vm1133, %vm1161
    %v1163 = vsel %vm1162, %v1160, 0.0
    %v1164 = vadd.f32 %v1155, %v1163
    %s1165 = scalar_lea.vmem [#allocation1], 16
    %1166 = vst [vmem:[%s1165] sm:$0xff] %v1164
    %s1167 = scalar_lea.vmem [#allocation0], 24
    %v1168 = vld [vmem:[%s1167] sm:$0xff]
    %s1169 = scalar_lea.vmem [#allocation1], 24
    %v1170 = vld [vmem:[%s1169] sm:$0xff]
    %v1171 = vmul.f32 %v1170, %v1135
    %1172 = vadd.xlane.f32.xlu0 %v1171
    %v1173 = vpop.xlane.xlu0 %1172
    %v1174 = vsub.f32 %v1168, %v1173
    %v1175 = vmul.f32 %v1174, %v1151
    %v1176 = vsel %vm1133, %v1175, 0.0
    %v1177 = vadd.f32 %v1170, %v1176
    %s1178 = scalar_lea.vmem [#allocation1], 24
    %1179 = vst [vmem:[%s1178] sm:$0xff] %v1177
    %vm1180 = vcmask 154768
    %s1181 = scalar_lea.vmem [#allocation1], 18
    %v1182 = vld [vmem:[%s1181] ss:$0 sm:$0xff]
    %s1183 = scalar_lea.vmem [#allocation0], 18
    %v1184 = vld [vmem:[%s1183] ss:$0 sm:$0xff]
    %v1185 = vmul.f32 %v1182, %v1182
    %1186 = vadd.xlane.f32.xlu0 %v1185
    %v1187 = vpop.xlane.xlu0 %1186
    %v1188 = vsub.f32 %v1184, %v1187
    %v1189 = vrsqrt.pop %v1188
    %v1190 = vmul.f32 %v1189, %v1188
    %v1191 = vmul.f32 %v1190, %v1189
    %v1192 = vmul.f32 0.5, %v1191
    %v1193 = vsub.f32 1.5, %v1192
    %v1194 = vmul.f32 %v1189, %v1193
    %vm1195 = vweird.f32 %v1188
    %vm1196 = vweird.f32 %v1189
    %vm1197 = vmor %vm1195, %vm1196
    %v1198 = vsel %vm1197, %v1189, %v1194
    %s1199 = scalar_lea.vmem [#allocation0], 16
    %v1200 = vld [vmem:[%s1199] sm:$0xff]
    %s1201 = scalar_lea.vmem [#allocation1], 16
    %v1202 = vld [vmem:[%s1201] sm:$0xff]
    %v1203 = vmul.f32 %v1202, %v1182
    %1204 = vadd.xlane.f32.xlu0 %v1203
    %v1205 = vpop.xlane.xlu0 %1204
    %v1206 = vsub.f32 %v1200, %v1205
    %v1207 = vmul.f32 %v1206, %v1198
    %vm1208 = vcmask 1047554
    %vm1209 = vmand %vm1180, %vm1208
    %v1210 = vsel %vm1209, %v1207, 0.0
    %v1211 = vadd.f32 %v1202, %v1210
    %s1212 = scalar_lea.vmem [#allocation1], 16
    %1213 = vst [vmem:[%s1212] sm:$0xff] %v1211
    %s1214 = scalar_lea.vmem [#allocation0], 24
    %v1215 = vld [vmem:[%s1214] sm:$0xff]
    %s1216 = scalar_lea.vmem [#allocation1], 24
    %v1217 = vld [vmem:[%s1216] sm:$0xff]
    %v1218 = vmul.f32 %v1217, %v1182
    %1219 = vadd.xlane.f32.xlu0 %v1218
    %v1220 = vpop.xlane.xlu0 %1219
    %v1221 = vsub.f32 %v1215, %v1220
    %v1222 = vmul.f32 %v1221, %v1198
    %v1223 = vsel %vm1180, %v1222, 0.0
    %v1224 = vadd.f32 %v1217, %v1223
    %s1225 = scalar_lea.vmem [#allocation1], 24
    %1226 = vst [vmem:[%s1225] sm:$0xff] %v1224
    %vm1227 = vcmask 162968
    %s1228 = scalar_lea.vmem [#allocation1], 19
    %v1229 = vld [vmem:[%s1228] ss:$0 sm:$0xff]
    %s1230 = scalar_lea.vmem [#allocation0], 19
    %v1231 = vld [vmem:[%s1230] ss:$0 sm:$0xff]
    %v1232 = vmul.f32 %v1229, %v1229
    %1233 = vadd.xlane.f32.xlu0 %v1232
    %v1234 = vpop.xlane.xlu0 %1233
    %v1235 = vsub.f32 %v1231, %v1234
    %v1236 = vrsqrt.pop %v1235
    %v1237 = vmul.f32 %v1236, %v1235
    %v1238 = vmul.f32 %v1237, %v1236
    %v1239 = vmul.f32 0.5, %v1238
    %v1240 = vsub.f32 1.5, %v1239
    %v1241 = vmul.f32 %v1236, %v1240
    %vm1242 = vweird.f32 %v1235
    %vm1243 = vweird.f32 %v1236
    %vm1244 = vmor %vm1242, %vm1243
    %v1245 = vsel %vm1244, %v1236, %v1241
    %s1246 = scalar_lea.vmem [#allocation0], 16
    %v1247 = vld [vmem:[%s1246] sm:$0xff]
    %s1248 = scalar_lea.vmem [#allocation1], 16
    %v1249 = vld [vmem:[%s1248] sm:$0xff]
    %v1250 = vmul.f32 %v1249, %v1229
    %1251 = vadd.xlane.f32.xlu0 %v1250
    %v1252 = vpop.xlane.xlu0 %1251
    %v1253 = vsub.f32 %v1247, %v1252
    %v1254 = vmul.f32 %v1253, %v1245
    %vm1255 = vcmask 1047555
    %vm1256 = vmand %vm1227, %vm1255
    %v1257 = vsel %vm1256, %v1254, 0.0
    %v1258 = vadd.f32 %v1249, %v1257
    %s1259 = scalar_lea.vmem [#allocation1], 16
    %1260 = vst [vmem:[%s1259] sm:$0xff] %v1258
    %s1261 = scalar_lea.vmem [#allocation0], 24
    %v1262 = vld [vmem:[%s1261] sm:$0xff]
    %s1263 = scalar_lea.vmem [#allocation1], 24
    %v1264 = vld [vmem:[%s1263] sm:$0xff]
    %v1265 = vmul.f32 %v1264, %v1229
    %1266 = vadd.xlane.f32.xlu0 %v1265
    %v1267 = vpop.xlane.xlu0 %1266
    %v1268 = vsub.f32 %v1262, %v1267
    %v1269 = vmul.f32 %v1268, %v1245
    %v1270 = vsel %vm1227, %v1269, 0.0
    %v1271 = vadd.f32 %v1264, %v1270
    %s1272 = scalar_lea.vmem [#allocation1], 24
    %1273 = vst [vmem:[%s1272] sm:$0xff] %v1271
    %vm1274 = vcmask 171168
    %s1275 = scalar_lea.vmem [#allocation1], 20
    %v1276 = vld [vmem:[%s1275] ss:$0 sm:$0xff]
    %s1277 = scalar_lea.vmem [#allocation0], 20
    %v1278 = vld [vmem:[%s1277] ss:$0 sm:$0xff]
    %v1279 = vmul.f32 %v1276, %v1276
    %1280 = vadd.xlane.f32.xlu0 %v1279
    %v1281 = vpop.xlane.xlu0 %1280
    %v1282 = vsub.f32 %v1278, %v1281
    %v1283 = vrsqrt.pop %v1282
    %v1284 = vmul.f32 %v1283, %v1282
    %v1285 = vmul.f32 %v1284, %v1283
    %v1286 = vmul.f32 0.5, %v1285
    %v1287 = vsub.f32 1.5, %v1286
    %v1288 = vmul.f32 %v1283, %v1287
    %vm1289 = vweird.f32 %v1282
    %vm1290 = vweird.f32 %v1283
    %vm1291 = vmor %vm1289, %vm1290
    %v1292 = vsel %vm1291, %v1283, %v1288
    %s1293 = scalar_lea.vmem [#allocation0], 16
    %v1294 = vld [vmem:[%s1293] sm:$0xff]
    %s1295 = scalar_lea.vmem [#allocation1], 16
    %v1296 = vld [vmem:[%s1295] sm:$0xff]
    %v1297 = vmul.f32 %v1296, %v1276
    %1298 = vadd.xlane.f32.xlu0 %v1297
    %v1299 = vpop.xlane.xlu0 %1298
    %v1300 = vsub.f32 %v1294, %v1299
    %v1301 = vmul.f32 %v1300, %v1292
    %vm1302 = vcmask 1047556
    %vm1303 = vmand %vm1274, %vm1302
    %v1304 = vsel %vm1303, %v1301, 0.0
    %v1305 = vadd.f32 %v1296, %v1304
    %s1306 = scalar_lea.vmem [#allocation1], 16
    %1307 = vst [vmem:[%s1306] sm:$0xff] %v1305
    %s1308 = scalar_lea.vmem [#allocation0], 24
    %v1309 = vld [vmem:[%s1308] sm:$0xff]
    %s1310 = scalar_lea.vmem [#allocation1], 24
    %v1311 = vld [vmem:[%s1310] sm:$0xff]
    %v1312 = vmul.f32 %v1311, %v1276
    %1313 = vadd.xlane.f32.xlu0 %v1312
    %v1314 = vpop.xlane.xlu0 %1313
    %v1315 = vsub.f32 %v1309, %v1314
    %v1316 = vmul.f32 %v1315, %v1292
    %v1317 = vsel %vm1274, %v1316, 0.0
    %v1318 = vadd.f32 %v1311, %v1317
    %s1319 = scalar_lea.vmem [#allocation1], 24
    %1320 = vst [vmem:[%s1319] sm:$0xff] %v1318
    %vm1321 = vcmask 179368
    %s1322 = scalar_lea.vmem [#allocation1], 21
    %v1323 = vld [vmem:[%s1322] ss:$0 sm:$0xff]
    %s1324 = scalar_lea.vmem [#allocation0], 21
    %v1325 = vld [vmem:[%s1324] ss:$0 sm:$0xff]
    %v1326 = vmul.f32 %v1323, %v1323
    %1327 = vadd.xlane.f32.xlu0 %v1326
    %v1328 = vpop.xlane.xlu0 %1327
    %v1329 = vsub.f32 %v1325, %v1328
    %v1330 = vrsqrt.pop %v1329
    %v1331 = vmul.f32 %v1330, %v1329
    %v1332 = vmul.f32 %v1331, %v1330
    %v1333 = vmul.f32 0.5, %v1332
    %v1334 = vsub.f32 1.5, %v1333
    %v1335 = vmul.f32 %v1330, %v1334
    %vm1336 = vweird.f32 %v1329
    %vm1337 = vweird.f32 %v1330
    %vm1338 = vmor %vm1336, %vm1337
    %v1339 = vsel %vm1338, %v1330, %v1335
    %s1340 = scalar_lea.vmem [#allocation0], 16
    %v1341 = vld [vmem:[%s1340] sm:$0xff]
    %s1342 = scalar_lea.vmem [#allocation1], 16
    %v1343 = vld [vmem:[%s1342] sm:$0xff]
    %v1344 = vmul.f32 %v1343, %v1323
    %1345 = vadd.xlane.f32.xlu0 %v1344
    %v1346 = vpop.xlane.xlu0 %1345
    %v1347 = vsub.f32 %v1341, %v1346
    %v1348 = vmul.f32 %v1347, %v1339
    %vm1349 = vcmask 1047557
    %vm1350 = vmand %vm1321, %vm1349
    %v1351 = vsel %vm1350, %v1348, 0.0
    %v1352 = vadd.f32 %v1343, %v1351
    %s1353 = scalar_lea.vmem [#allocation1], 16
    %1354 = vst [vmem:[%s1353] sm:$0xff] %v1352
    %s1355 = scalar_lea.vmem [#allocation0], 24
    %v1356 = vld [vmem:[%s1355] sm:$0xff]
    %s1357 = scalar_lea.vmem [#allocation1], 24
    %v1358 = vld [vmem:[%s1357] sm:$0xff]
    %v1359 = vmul.f32 %v1358, %v1323
    %1360 = vadd.xlane.f32.xlu0 %v1359
    %v1361 = vpop.xlane.xlu0 %1360
    %v1362 = vsub.f32 %v1356, %v1361
    %v1363 = vmul.f32 %v1362, %v1339
    %v1364 = vsel %vm1321, %v1363, 0.0
    %v1365 = vadd.f32 %v1358, %v1364
    %s1366 = scalar_lea.vmem [#allocation1], 24
    %1367 = vst [vmem:[%s1366] sm:$0xff] %v1365
    %vm1368 = vcmask 187568
    %s1369 = scalar_lea.vmem [#allocation1], 22
    %v1370 = vld [vmem:[%s1369] ss:$0 sm:$0xff]
    %s1371 = scalar_lea.vmem [#allocation0], 22
    %v1372 = vld [vmem:[%s1371] ss:$0 sm:$0xff]
    %v1373 = vmul.f32 %v1370, %v1370
    %1374 = vadd.xlane.f32.xlu0 %v1373
    %v1375 = vpop.xlane.xlu0 %1374
    %v1376 = vsub.f32 %v1372, %v1375
    %v1377 = vrsqrt.pop %v1376
    %v1378 = vmul.f32 %v1377, %v1376
    %v1379 = vmul.f32 %v1378, %v1377
    %v1380 = vmul.f32 0.5, %v1379
    %v1381 = vsub.f32 1.5, %v1380
    %v1382 = vmul.f32 %v1377, %v1381
    %vm1383 = vweird.f32 %v1376
    %vm1384 = vweird.f32 %v1377
    %vm1385 = vmor %vm1383, %vm1384
    %v1386 = vsel %vm1385, %v1377, %v1382
    %s1387 = scalar_lea.vmem [#allocation0], 16
    %v1388 = vld [vmem:[%s1387] sm:$0xff]
    %s1389 = scalar_lea.vmem [#allocation1], 16
    %v1390 = vld [vmem:[%s1389] sm:$0xff]
    %v1391 = vmul.f32 %v1390, %v1370
    %1392 = vadd.xlane.f32.xlu0 %v1391
    %v1393 = vpop.xlane.xlu0 %1392
    %v1394 = vsub.f32 %v1388, %v1393
    %v1395 = vmul.f32 %v1394, %v1386
    %vm1396 = vcmask 1047558
    %vm1397 = vmand %vm1368, %vm1396
    %v1398 = vsel %vm1397, %v1395, 0.0
    %v1399 = vadd.f32 %v1390, %v1398
    %s1400 = scalar_lea.vmem [#allocation1], 16
    %1401 = vst [vmem:[%s1400] sm:$0xff] %v1399
    %s1402 = scalar_lea.vmem [#allocation0], 24
    %v1403 = vld [vmem:[%s1402] sm:$0xff]
    %s1404 = scalar_lea.vmem [#allocation1], 24
    %v1405 = vld [vmem:[%s1404] sm:$0xff]
    %v1406 = vmul.f32 %v1405, %v1370
    %1407 = vadd.xlane.f32.xlu0 %v1406
    %v1408 = vpop.xlane.xlu0 %1407
    %v1409 = vsub.f32 %v1403, %v1408
    %v1410 = vmul.f32 %v1409, %v1386
    %v1411 = vsel %vm1368, %v1410, 0.0
    %v1412 = vadd.f32 %v1405, %v1411
    %s1413 = scalar_lea.vmem [#allocation1], 24
    %1414 = vst [vmem:[%s1413] sm:$0xff] %v1412
    %vm1415 = vcmask 195768
    %s1416 = scalar_lea.vmem [#allocation1], 23
    %v1417 = vld [vmem:[%s1416] ss:$0 sm:$0xff]
    %s1418 = scalar_lea.vmem [#allocation0], 23
    %v1419 = vld [vmem:[%s1418] ss:$0 sm:$0xff]
    %v1420 = vmul.f32 %v1417, %v1417
    %1421 = vadd.xlane.f32.xlu0 %v1420
    %v1422 = vpop.xlane.xlu0 %1421
    %v1423 = vsub.f32 %v1419, %v1422
    %v1424 = vrsqrt.pop %v1423
    %v1425 = vmul.f32 %v1424, %v1423
    %v1426 = vmul.f32 %v1425, %v1424
    %v1427 = vmul.f32 0.5, %v1426
    %v1428 = vsub.f32 1.5, %v1427
    %v1429 = vmul.f32 %v1424, %v1428
    %vm1430 = vweird.f32 %v1423
    %vm1431 = vweird.f32 %v1424
    %vm1432 = vmor %vm1430, %vm1431
    %v1433 = vsel %vm1432, %v1424, %v1429
    %s1434 = scalar_lea.vmem [#allocation0], 16
    %v1435 = vld [vmem:[%s1434] sm:$0xff]
    %s1436 = scalar_lea.vmem [#allocation1], 16
    %v1437 = vld [vmem:[%s1436] sm:$0xff]
    %v1438 = vmul.f32 %v1437, %v1417
    %1439 = vadd.xlane.f32.xlu0 %v1438
    %v1440 = vpop.xlane.xlu0 %1439
    %v1441 = vsub.f32 %v1435, %v1440
    %v1442 = vmul.f32 %v1441, %v1433
    %vm1443 = vcmask 1047559
    %vm1444 = vmand %vm1415, %vm1443
    %v1445 = vsel %vm1444, %v1442, 0.0
    %v1446 = vadd.f32 %v1437, %v1445
    %s1447 = scalar_lea.vmem [#allocation1], 16
    %1448 = vst [vmem:[%s1447] sm:$0xff] %v1446
    %s1449 = scalar_lea.vmem [#allocation0], 24
    %v1450 = vld [vmem:[%s1449] sm:$0xff]
    %s1451 = scalar_lea.vmem [#allocation1], 24
    %v1452 = vld [vmem:[%s1451] sm:$0xff]
    %v1453 = vmul.f32 %v1452, %v1417
    %1454 = vadd.xlane.f32.xlu0 %v1453
    %v1455 = vpop.xlane.xlu0 %1454
    %v1456 = vsub.f32 %v1450, %v1455
    %v1457 = vmul.f32 %v1456, %v1433
    %v1458 = vsel %vm1415, %v1457, 0.0
    %v1459 = vadd.f32 %v1452, %v1458
    %s1460 = scalar_lea.vmem [#allocation1], 24
    %1461 = vst [vmem:[%s1460] sm:$0xff] %v1459
    %vm1462 = vcmask 203968
    %s1463 = scalar_lea.vmem [#allocation1], 24
    %v1464 = vld [vmem:[%s1463] ss:$0 sm:$0xff]
    %s1465 = scalar_lea.vmem [#allocation0], 24
    %v1466 = vld [vmem:[%s1465] ss:$0 sm:$0xff]
    %v1467 = vmul.f32 %v1464, %v1464
    %1468 = vadd.xlane.f32.xlu0 %v1467
    %v1469 = vpop.xlane.xlu0 %1468
    %v1470 = vsub.f32 %v1466, %v1469
    %v1471 = vrsqrt.pop %v1470
    %v1472 = vmul.f32 %v1471, %v1470
    %v1473 = vmul.f32 %v1472, %v1471
    %v1474 = vmul.f32 0.5, %v1473
    %v1475 = vsub.f32 1.5, %v1474
    %v1476 = vmul.f32 %v1471, %v1475
    %vm1477 = vweird.f32 %v1470
    %vm1478 = vweird.f32 %v1471
    %vm1479 = vmor %vm1477, %vm1478
    %v1480 = vsel %vm1479, %v1471, %v1476
    %s1481 = scalar_lea.vmem [#allocation0], 24
    %v1482 = vld [vmem:[%s1481] sm:$0xff]
    %s1483 = scalar_lea.vmem [#allocation1], 24
    %v1484 = vld [vmem:[%s1483] sm:$0xff]
    %v1485 = vmul.f32 %v1484, %v1464
    %1486 = vadd.xlane.f32.xlu0 %v1485
    %v1487 = vpop.xlane.xlu0 %1486
    %v1488 = vsub.f32 %v1482, %v1487
    %v1489 = vmul.f32 %v1488, %v1480
    %v1490 = vsel %vm1462, %v1489, 0.0
    %v1491 = vadd.f32 %v1484, %v1490
    %s1492 = scalar_lea.vmem [#allocation1], 24
    %1493 = vst [vmem:[%s1492] sm:$0xff] %v1491
    %vm1494 = vcmask 212168
    %s1495 = scalar_lea.vmem [#allocation1], 25
    %v1496 = vld [vmem:[%s1495] ss:$0 sm:$0xff]
    %s1497 = scalar_lea.vmem [#allocation0], 25
    %v1498 = vld [vmem:[%s1497] ss:$0 sm:$0xff]
    %v1499 = vmul.f32 %v1496, %v1496
    %1500 = vadd.xlane.f32.xlu0 %v1499
    %v1501 = vpop.xlane.xlu0 %1500
    %v1502 = vsub.f32 %v1498, %v1501
    %v1503 = vrsqrt.pop %v1502
    %v1504 = vmul.f32 %v1503, %v1502
    %v1505 = vmul.f32 %v1504, %v1503
    %v1506 = vmul.f32 0.5, %v1505
    %v1507 = vsub.f32 1.5, %v1506
    %v1508 = vmul.f32 %v1503, %v1507
    %vm1509 = vweird.f32 %v1502
    %vm1510 = vweird.f32 %v1503
    %vm1511 = vmor %vm1509, %vm1510
    %v1512 = vsel %vm1511, %v1503, %v1508
    %s1513 = scalar_lea.vmem [#allocation0], 24
    %v1514 = vld [vmem:[%s1513] sm:$0xff]
    %s1515 = scalar_lea.vmem [#allocation1], 24
    %v1516 = vld [vmem:[%s1515] sm:$0xff]
    %v1517 = vmul.f32 %v1516, %v1496
    %1518 = vadd.xlane.f32.xlu0 %v1517
    %v1519 = vpop.xlane.xlu0 %1518
    %v1520 = vsub.f32 %v1514, %v1519
    %v1521 = vmul.f32 %v1520, %v1512
    %vm1522 = vcmask 1047553
    %vm1523 = vmand %vm1494, %vm1522
    %v1524 = vsel %vm1523, %v1521, 0.0
    %v1525 = vadd.f32 %v1516, %v1524
    %s1526 = scalar_lea.vmem [#allocation1], 24
    %1527 = vst [vmem:[%s1526] sm:$0xff] %v1525
    %vm1528 = vcmask 220368
    %s1529 = scalar_lea.vmem [#allocation1], 26
    %v1530 = vld [vmem:[%s1529] ss:$0 sm:$0xff]
    %s1531 = scalar_lea.vmem [#allocation0], 26
    %v1532 = vld [vmem:[%s1531] ss:$0 sm:$0xff]
    %v1533 = vmul.f32 %v1530, %v1530
    %1534 = vadd.xlane.f32.xlu0 %v1533
    %v1535 = vpop.xlane.xlu0 %1534
    %v1536 = vsub.f32 %v1532, %v1535
    %v1537 = vrsqrt.pop %v1536
    %v1538 = vmul.f32 %v1537, %v1536
    %v1539 = vmul.f32 %v1538, %v1537
    %v1540 = vmul.f32 0.5, %v1539
    %v1541 = vsub.f32 1.5, %v1540
    %v1542 = vmul.f32 %v1537, %v1541
    %vm1543 = vweird.f32 %v1536
    %vm1544 = vweird.f32 %v1537
    %vm1545 = vmor %vm1543, %vm1544
    %v1546 = vsel %vm1545, %v1537, %v1542
    %s1547 = scalar_lea.vmem [#allocation0], 24
    %v1548 = vld [vmem:[%s1547] sm:$0xff]
    %s1549 = scalar_lea.vmem [#allocation1], 24
    %v1550 = vld [vmem:[%s1549] sm:$0xff]
    %v1551 = vmul.f32 %v1550, %v1530
    %1552 = vadd.xlane.f32.xlu0 %v1551
    %v1553 = vpop.xlane.xlu0 %1552
    %v1554 = vsub.f32 %v1548, %v1553
    %v1555 = vmul.f32 %v1554, %v1546
    %vm1556 = vcmask 1047554
    %vm1557 = vmand %vm1528, %vm1556
    %v1558 = vsel %vm1557, %v1555, 0.0
    %v1559 = vadd.f32 %v1550, %v1558
    %s1560 = scalar_lea.vmem [#allocation1], 24
    %1561 = vst [vmem:[%s1560] sm:$0xff] %v1559
    %vm1562 = vcmask 228568
    %s1563 = scalar_lea.vmem [#allocation1], 27
    %v1564 = vld [vmem:[%s1563] ss:$0 sm:$0xff]
    %s1565 = scalar_lea.vmem [#allocation0], 27
    %v1566 = vld [vmem:[%s1565] ss:$0 sm:$0xff]
    %v1567 = vmul.f32 %v1564, %v1564
    %1568 = vadd.xlane.f32.xlu0 %v1567
    %v1569 = vpop.xlane.xlu0 %1568
    %v1570 = vsub.f32 %v1566, %v1569
    %v1571 = vrsqrt.pop %v1570
    %v1572 = vmul.f32 %v1571, %v1570
    %v1573 = vmul.f32 %v1572, %v1571
    %v1574 = vmul.f32 0.5, %v1573
    %v1575 = vsub.f32 1.5, %v1574
    %v1576 = vmul.f32 %v1571, %v1575
    %vm1577 = vweird.f32 %v1570
    %vm1578 = vweird.f32 %v1571
    %vm1579 = vmor %vm1577, %vm1578
    %v1580 = vsel %vm1579, %v1571, %v1576
    %s1581 = scalar_lea.vmem [#allocation0], 24
    %v1582 = vld [vmem:[%s1581] sm:$0xff]
    %s1583 = scalar_lea.vmem [#allocation1], 24
    %v1584 = vld [vmem:[%s1583] sm:$0xff]
    %v1585 = vmul.f32 %v1584, %v1564
    %1586 = vadd.xlane.f32.xlu0 %v1585
    %v1587 = vpop.xlane.xlu0 %1586
    %v1588 = vsub.f32 %v1582, %v1587
    %v1589 = vmul.f32 %v1588, %v1580
    %vm1590 = vcmask 1047555
    %vm1591 = vmand %vm1562, %vm1590
    %v1592 = vsel %vm1591, %v1589, 0.0
    %v1593 = vadd.f32 %v1584, %v1592
    %s1594 = scalar_lea.vmem [#allocation1], 24
    %1595 = vst [vmem:[%s1594] sm:$0xff] %v1593
    %vm1596 = vcmask 236768
    %s1597 = scalar_lea.vmem [#allocation1], 28
    %v1598 = vld [vmem:[%s1597] ss:$0 sm:$0xff]
    %s1599 = scalar_lea.vmem [#allocation0], 28
    %v1600 = vld [vmem:[%s1599] ss:$0 sm:$0xff]
    %v1601 = vmul.f32 %v1598, %v1598
    %1602 = vadd.xlane.f32.xlu0 %v1601
    %v1603 = vpop.xlane.xlu0 %1602
    %v1604 = vsub.f32 %v1600, %v1603
    %v1605 = vrsqrt.pop %v1604
    %v1606 = vmul.f32 %v1605, %v1604
    %v1607 = vmul.f32 %v1606, %v1605
    %v1608 = vmul.f32 0.5, %v1607
    %v1609 = vsub.f32 1.5, %v1608
    %v1610 = vmul.f32 %v1605, %v1609
    %vm1611 = vweird.f32 %v1604
    %vm1612 = vweird.f32 %v1605
    %vm1613 = vmor %vm1611, %vm1612
    %v1614 = vsel %vm1613, %v1605, %v1610
    %s1615 = scalar_lea.vmem [#allocation0], 24
    %v1616 = vld [vmem:[%s1615] sm:$0xff]
    %s1617 = scalar_lea.vmem [#allocation1], 24
    %v1618 = vld [vmem:[%s1617] sm:$0xff]
    %v1619 = vmul.f32 %v1618, %v1598
    %1620 = vadd.xlane.f32.xlu0 %v1619
    %v1621 = vpop.xlane.xlu0 %1620
    %v1622 = vsub.f32 %v1616, %v1621
    %v1623 = vmul.f32 %v1622, %v1614
    %vm1624 = vcmask 1047556
    %vm1625 = vmand %vm1596, %vm1624
    %v1626 = vsel %vm1625, %v1623, 0.0
    %v1627 = vadd.f32 %v1618, %v1626
    %s1628 = scalar_lea.vmem [#allocation1], 24
    %1629 = vst [vmem:[%s1628] sm:$0xff] %v1627
    %vm1630 = vcmask 244968
    %s1631 = scalar_lea.vmem [#allocation1], 29
    %v1632 = vld [vmem:[%s1631] ss:$0 sm:$0xff]
    %s1633 = scalar_lea.vmem [#allocation0], 29
    %v1634 = vld [vmem:[%s1633] ss:$0 sm:$0xff]
    %v1635 = vmul.f32 %v1632, %v1632
    %1636 = vadd.xlane.f32.xlu0 %v1635
    %v1637 = vpop.xlane.xlu0 %1636
    %v1638 = vsub.f32 %v1634, %v1637
    %v1639 = vrsqrt.pop %v1638
    %v1640 = vmul.f32 %v1639, %v1638
    %v1641 = vmul.f32 %v1640, %v1639
    %v1642 = vmul.f32 0.5, %v1641
    %v1643 = vsub.f32 1.5, %v1642
    %v1644 = vmul.f32 %v1639, %v1643
    %vm1645 = vweird.f32 %v1638
    %vm1646 = vweird.f32 %v1639
    %vm1647 = vmor %vm1645, %vm1646
    %v1648 = vsel %vm1647, %v1639, %v1644
    %s1649 = scalar_lea.vmem [#allocation0], 24
    %v1650 = vld [vmem:[%s1649] sm:$0xff]
    %s1651 = scalar_lea.vmem [#allocation1], 24
    %v1652 = vld [vmem:[%s1651] sm:$0xff]
    %v1653 = vmul.f32 %v1652, %v1632
    %1654 = vadd.xlane.f32.xlu0 %v1653
    %v1655 = vpop.xlane.xlu0 %1654
    %v1656 = vsub.f32 %v1650, %v1655
    %v1657 = vmul.f32 %v1656, %v1648
    %vm1658 = vcmask 1047557
    %vm1659 = vmand %vm1630, %vm1658
    %v1660 = vsel %vm1659, %v1657, 0.0
    %v1661 = vadd.f32 %v1652, %v1660
    %s1662 = scalar_lea.vmem [#allocation1], 24
    %1663 = vst [vmem:[%s1662] sm:$0xff] %v1661
    %vm1664 = vcmask 253168
    %s1665 = scalar_lea.vmem [#allocation1], 30
    %v1666 = vld [vmem:[%s1665] ss:$0 sm:$0xff]
    %s1667 = scalar_lea.vmem [#allocation0], 30
    %v1668 = vld [vmem:[%s1667] ss:$0 sm:$0xff]
    %v1669 = vmul.f32 %v1666, %v1666
    %1670 = vadd.xlane.f32.xlu0 %v1669
    %v1671 = vpop.xlane.xlu0 %1670
    %v1672 = vsub.f32 %v1668, %v1671
    %v1673 = vrsqrt.pop %v1672
    %v1674 = vmul.f32 %v1673, %v1672
    %v1675 = vmul.f32 %v1674, %v1673
    %v1676 = vmul.f32 0.5, %v1675
    %v1677 = vsub.f32 1.5, %v1676
    %v1678 = vmul.f32 %v1673, %v1677
    %vm1679 = vweird.f32 %v1672
    %vm1680 = vweird.f32 %v1673
    %vm1681 = vmor %vm1679, %vm1680
    %v1682 = vsel %vm1681, %v1673, %v1678
    %s1683 = scalar_lea.vmem [#allocation0], 24
    %v1684 = vld [vmem:[%s1683] sm:$0xff]
    %s1685 = scalar_lea.vmem [#allocation1], 24
    %v1686 = vld [vmem:[%s1685] sm:$0xff]
    %v1687 = vmul.f32 %v1686, %v1666
    %1688 = vadd.xlane.f32.xlu0 %v1687
    %v1689 = vpop.xlane.xlu0 %1688
    %v1690 = vsub.f32 %v1684, %v1689
    %v1691 = vmul.f32 %v1690, %v1682
    %vm1692 = vcmask 1047558
    %vm1693 = vmand %vm1664, %vm1692
    %v1694 = vsel %vm1693, %v1691, 0.0
    %v1695 = vadd.f32 %v1686, %v1694
    %s1696 = scalar_lea.vmem [#allocation1], 24
    %1697 = vst [vmem:[%s1696] sm:$0xff] %v1695
    %vm1698 = vcmask 261368
    %s1699 = scalar_lea.vmem [#allocation1], 31
    %v1700 = vld [vmem:[%s1699] ss:$0 sm:$0xff]
    %s1701 = scalar_lea.vmem [#allocation0], 31
    %v1702 = vld [vmem:[%s1701] ss:$0 sm:$0xff]
    %v1703 = vmul.f32 %v1700, %v1700
    %1704 = vadd.xlane.f32.xlu0 %v1703
    %v1705 = vpop.xlane.xlu0 %1704
    %v1706 = vsub.f32 %v1702, %v1705
    %v1707 = vrsqrt.pop %v1706
    %v1708 = vmul.f32 %v1707, %v1706
    %v1709 = vmul.f32 %v1708, %v1707
    %v1710 = vmul.f32 0.5, %v1709
    %v1711 = vsub.f32 1.5, %v1710
    %v1712 = vmul.f32 %v1707, %v1711
    %vm1713 = vweird.f32 %v1706
    %vm1714 = vweird.f32 %v1707
    %vm1715 = vmor %vm1713, %vm1714
    %v1716 = vsel %vm1715, %v1707, %v1712
    %s1717 = scalar_lea.vmem [#allocation0], 24
    %v1718 = vld [vmem:[%s1717] sm:$0xff]
    %s1719 = scalar_lea.vmem [#allocation1], 24
    %v1720 = vld [vmem:[%s1719] sm:$0xff]
    %v1721 = vmul.f32 %v1720, %v1700
    %1722 = vadd.xlane.f32.xlu0 %v1721
    %v1723 = vpop.xlane.xlu0 %1722
    %v1724 = vsub.f32 %v1718, %v1723
    %v1725 = vmul.f32 %v1724, %v1716
    %vm1726 = vcmask 1047559
    %vm1727 = vmand %vm1698, %vm1726
    %v1728 = vsel %vm1727, %v1725, 0.0
    %v1729 = vadd.f32 %v1720, %v1728
    %s1730 = scalar_lea.vmem [#allocation1], 24
    %1731 = vst [vmem:[%s1730] sm:$0xff] %v1729
    // Predicated region
    $region36: #{custom-call.7} parent=1 // pred_check
      _
    $region37: #{custom-call.7} parent=1 // pred_check_branch
      %1733 = sbr.rel (0) target = $region39
    $region38: #{custom-call.7} parent=1 // pred_region
      // Predicated region
      $region40: #{custom-call.7} parent=38 // pred_check
        _
      $region41: #{custom-call.7} parent=38 // pred_check_branch
        %1735 = sbr.rel (0) target = $region43
      $region42: #{custom-call.7} parent=38 // pred_region
        // Predicated region
        $region55: #{custom-call.7} parent=42 // pred_check
          _
        $region56: #{custom-call.7} parent=42 // pred_check_branch
          %1757 = sbr.rel (0) target = $region58
        $region57: #{custom-call.7} parent=42 // pred_region
          loop: start=0, step=1, limit=1
          $region59: #{custom-call.7} parent=57 // loop_pre_header
            _
          $region60: #{custom-call.7} parent=57 // loop_header
            %s1759 = sphi 0, %s1763
            %p1760 = scmp.ge.s32.totalorder %s1759, 1
            %s1764 = sphi [#allocation1], [#allocation1]
            %s1765 = sphi %s1, %s1
          $region61: #{custom-call.7} parent=57 // loop_header_branch
            %1762 = sbr.rel (%p1760) target = $region65
          $region62: #{custom-call.7} parent=57 // loop_body
            %v1766 = vld [vmem:[%s1764] sm:$0xff]
            %1767 = vst [vmem:[%s1765] sm:$0xff] %v1766
            %v1768 = vld [vmem:[%s1764 + $0x8] sm:$0xff]
            %1769 = vst [vmem:[%s1765 + $0x8] sm:$0xff] %v1768
            %v1770 = vld [vmem:[%s1764 + $0x10] sm:$0xff]
            %1771 = vst [vmem:[%s1765 + $0x10] sm:$0xff] %v1770
            %v1772 = vld [vmem:[%s1764 + $0x18] sm:$0xff]
            %1773 = vst [vmem:[%s1765 + $0x18] sm:$0xff] %v1772
          $region63: #{custom-call.7} parent=57 // loop_footer
            %s1763 = sadd.s32 1, %s1759
          $region64: #{custom-call.7} parent=57 // loop_footer_branch
            %1758 = sbr.rel target = $region60
          $region65: #{custom-call.7} parent=57 // loop_exit
            _
        $region58: #{custom-call.7} parent=42 // pred_fallthru
          _
        // Predicated region
        $region66: #{custom-call.7} parent=42 // pred_check
          _
        $region67: #{custom-call.7} parent=42 // pred_check_branch
          %1775 = sbr.rel target = $region69
        $region68: #{custom-call.7} parent=42 // pred_region
          _
        $region69: #{custom-call.7} parent=42 // pred_fallthru
          _
      $region43: #{custom-call.7} parent=38 // pred_fallthru
        _
      // Predicated region
      $region44: #{custom-call.7} parent=38 // pred_check
        _
      $region45: #{custom-call.7} parent=38 // pred_check_branch
        %1737 = sbr.rel target = $region47
      $region46: #{custom-call.7} parent=38 // pred_region
        %s1739 = ssub.s32 256, 1
        loop: start=0, step=1, limit=1
        $region48: #{custom-call.7} parent=46 // loop_pre_header
          _
        $region49: #{custom-call.7} parent=46 // loop_header
          %s1741 = sphi 0, %s1745
          %p1742 = scmp.ge.s32.totalorder %s1741, 1
          %s1746 = sphi [#allocation1], [#allocation1]
          %s1747 = sphi %s1, %s1
        $region50: #{custom-call.7} parent=46 // loop_header_branch
          %1744 = sbr.rel (%p1742) target = $region54
        $region51: #{custom-call.7} parent=46 // loop_body
          %v1748 = vld [vmem:[%s1746] sm:%s1739]
          %1749 = vst [vmem:[%s1747] sm:%s1739] %v1748
          %v1750 = vld [vmem:[%s1746 + $0x8] sm:%s1739]
          %1751 = vst [vmem:[%s1747 + $0x8] sm:%s1739] %v1750
          %v1752 = vld [vmem:[%s1746 + $0x10] sm:%s1739]
          %1753 = vst [vmem:[%s1747 + $0x10] sm:%s1739] %v1752
          %v1754 = vld [vmem:[%s1746 + $0x18] sm:%s1739]
          %1755 = vst [vmem:[%s1747 + $0x18] sm:%s1739] %v1754
        $region52: #{custom-call.7} parent=46 // loop_footer
          %s1745 = sadd.s32 1, %s1741
        $region53: #{custom-call.7} parent=46 // loop_footer_branch
          %1740 = sbr.rel target = $region49
        $region54: #{custom-call.7} parent=46 // loop_exit
          _
      $region47: #{custom-call.7} parent=38 // pred_fallthru
        _
    $region39: #{custom-call.7} parent=1 // pred_fallthru
      _
    %1776 = vnop

// kernel: custom-call.11
$region0: #{custom-call.11}
  %s0 = inlined_call_operand.vmem [shape: f32[1,32,32], index: 0, kind: input, shape index: {}]
  %s1 = inlined_call_operand.vmem [shape: f32[1,32,32], index: 1, kind: output, shape index: {}]
  $region1: #{custom-call.11} parent=0
    #allocation0 [shape = 'u8[16384]{0}', space=vmem, size = 0x4000, scoped, tag = 'operand span for operand 0']
    #allocation1 [shape = 'u8[16384]{0}', space=vmem, size = 0x4000, scoped, tag = 'operand span for operand 1']
    #allocation2 [shape = 'f32[32,32]{1,0}', space=vmem, size = 0x4000, scoped, tag = 'rescaled input a']
    // Predicated region
    $region2: #{custom-call.11} parent=1 // pred_check
      _
    $region3: #{custom-call.11} parent=1 // pred_check_branch
      %3 = sbr.rel (0) target = $region5
    $region4: #{custom-call.11} parent=1 // pred_region
      // Predicated region
      $region6: #{custom-call.11} parent=4 // pred_check
        _
      $region7: #{custom-call.11} parent=4 // pred_check_branch
        %5 = sbr.rel (0) target = $region9
      $region8: #{custom-call.11} parent=4 // pred_region
        // Predicated region
        $region21: #{custom-call.11} parent=8 // pred_check
          _
        $region22: #{custom-call.11} parent=8 // pred_check_branch
          %27 = sbr.rel (0) target = $region24
        $region23: #{custom-call.11} parent=8 // pred_region
          loop: start=0, step=1, limit=1
          $region25: #{custom-call.11} parent=23 // loop_pre_header
            _
          $region26: #{custom-call.11} parent=23 // loop_header
            %s29 = sphi 0, %s33
            %p30 = scmp.ge.s32.totalorder %s29, 1
            %s34 = sphi %s0, %s0
            %s35 = sphi [#allocation0], [#allocation0]
          $region27: #{custom-call.11} parent=23 // loop_header_branch
            %32 = sbr.rel (%p30) target = $region31
          $region28: #{custom-call.11} parent=23 // loop_body
            %v36 = vld [vmem:[%s34] sm:$0xff]
            %37 = vst [vmem:[%s35] sm:$0xff] %v36
            %v38 = vld [vmem:[%s34 + $0x8] sm:$0xff]
            %39 = vst [vmem:[%s35 + $0x8] sm:$0xff] %v38
            %v40 = vld [vmem:[%s34 + $0x10] sm:$0xff]
            %41 = vst [vmem:[%s35 + $0x10] sm:$0xff] %v40
            %v42 = vld [vmem:[%s34 + $0x18] sm:$0xff]
            %43 = vst [vmem:[%s35 + $0x18] sm:$0xff] %v42
          $region29: #{custom-call.11} parent=23 // loop_footer
            %s33 = sadd.s32 1, %s29
          $region30: #{custom-call.11} parent=23 // loop_footer_branch
            %28 = sbr.rel target = $region26
          $region31: #{custom-call.11} parent=23 // loop_exit
            _
        $region24: #{custom-call.11} parent=8 // pred_fallthru
          _
        // Predicated region
        $region32: #{custom-call.11} parent=8 // pred_check
          _
        $region33: #{custom-call.11} parent=8 // pred_check_branch
          %45 = sbr.rel target = $region35
        $region34: #{custom-call.11} parent=8 // pred_region
          _
        $region35: #{custom-call.11} parent=8 // pred_fallthru
          _
      $region9: #{custom-call.11} parent=4 // pred_fallthru
        _
      // Predicated region
      $region10: #{custom-call.11} parent=4 // pred_check
        _
      $region11: #{custom-call.11} parent=4 // pred_check_branch
        %7 = sbr.rel target = $region13
      $region12: #{custom-call.11} parent=4 // pred_region
        %s9 = ssub.s32 256, 1
        loop: start=0, step=1, limit=1
        $region14: #{custom-call.11} parent=12 // loop_pre_header
          _
        $region15: #{custom-call.11} parent=12 // loop_header
          %s11 = sphi 0, %s15
          %p12 = scmp.ge.s32.totalorder %s11, 1
          %s16 = sphi %s0, %s0
          %s17 = sphi [#allocation0], [#allocation0]
        $region16: #{custom-call.11} parent=12 // loop_header_branch
          %14 = sbr.rel (%p12) target = $region20
        $region17: #{custom-call.11} parent=12 // loop_body
          %v18 = vld [vmem:[%s16] sm:%s9]
          %19 = vst [vmem:[%s17] sm:%s9] %v18
          %v20 = vld [vmem:[%s16 + $0x8] sm:%s9]
          %21 = vst [vmem:[%s17 + $0x8] sm:%s9] %v20
          %v22 = vld [vmem:[%s16 + $0x10] sm:%s9]
          %23 = vst [vmem:[%s17 + $0x10] sm:%s9] %v22
          %v24 = vld [vmem:[%s16 + $0x18] sm:%s9]
          %25 = vst [vmem:[%s17 + $0x18] sm:%s9] %v24
        $region18: #{custom-call.11} parent=12 // loop_footer
          %s15 = sadd.s32 1, %s11
        $region19: #{custom-call.11} parent=12 // loop_footer_branch
          %10 = sbr.rel target = $region15
        $region20: #{custom-call.11} parent=12 // loop_exit
          _
      $region13: #{custom-call.11} parent=4 // pred_fallthru
        _
    $region5: #{custom-call.11} parent=1 // pred_fallthru
      _
    %46 = vnop
    %v47 = vlaneseq
    %v48 = vand.u32 %v47, 127
    %vm49 = vcmp.lt.s32.totalorder %v48, 32
    %v50 = vlaneseq
    %v51 = vshrl.u32 %v50, 7
    %vm53 = vcmp.eq.s32.totalorder %v51, %v48
    %v54 = vld [vmem:[#allocation0] sm:$0xff]
    %v55 = vsel %vm53, %v54, 0.0
    %56 = vadd.xlane.f32.xlu0 %v55
    %v57 = vpop.xlane.xlu0 %56
    %vm58 = vcmp.ge.s32.totalorder %v51, %v48
    %vm59 = vmand %vm58, %vm49
    %v60 = vsel %vm59, %v54, 0.0
    %v61 = vrcp.pop %v57
    %v62 = vmul.f32 %v57, %v61
    %v63 = vsub.f32 1.0, %v62
    %v64 = vmul.f32 %v61, %v63
    %v65 = vadd.f32 %v61, %v64
    %vm66 = vweird.f32 %v57
    %vm67 = vweird.f32 %v61
    %vm68 = vmor %vm66, %vm67
    %v69 = vsel %vm68, %v61, %v65
    %v70 = vand.u32 2147483647, %v57
    %vm71 = vcmp.eq.f32.partialorder %v70, 8.507059e+37
    %v72 = vand.u32 %v57, 2147483648
    %v73 = vor.u32 1.1754944e-38, %v72
    %v74 = vsel %vm71, %v73, %v69
    %v75 = vmul.f32 %v60, %v74
    %76 = vst [vmem:[#allocation2] sm:$0xff] %v75
    %s77 = scalar_lea.vmem [#allocation0], 8
    %s78 = scalar_lea.vmem [#allocation2], 8
    %v79 = vlaneseq
    %v80 = vshrl.u32 %v79, 7
    %v81 = vadd.s32 %v80, 8
    %vm82 = vcmp.eq.s32.totalorder %v81, %v48
    %v83 = vld [vmem:[%s77] sm:$0xff]
    %v84 = vsel %vm82, %v83, 0.0
    %85 = vadd.xlane.f32.xlu0 %v84
    %v86 = vpop.xlane.xlu0 %85
    %vm87 = vcmp.ge.s32.totalorder %v81, %v48
    %vm88 = vmand %vm87, %vm49
    %v89 = vsel %vm88, %v83, 0.0
    %v90 = vrcp.pop %v86
    %v91 = vmul.f32 %v86, %v90
    %v92 = vsub.f32 1.0, %v91
    %v93 = vmul.f32 %v90, %v92
    %v94 = vadd.f32 %v90, %v93
    %vm95 = vweird.f32 %v86
    %vm96 = vweird.f32 %v90
    %vm97 = vmor %vm95, %vm96
    %v98 = vsel %vm97, %v90, %v94
    %v99 = vand.u32 2147483647, %v86
    %vm100 = vcmp.eq.f32.partialorder %v99, 8.507059e+37
    %v101 = vand.u32 %v86, 2147483648
    %v102 = vor.u32 1.1754944e-38, %v101
    %v103 = vsel %vm100, %v102, %v98
    %v104 = vmul.f32 %v89, %v103
    %105 = vst [vmem:[%s78] sm:$0xff] %v104
    %s106 = scalar_lea.vmem [#allocation0], 16
    %s107 = scalar_lea.vmem [#allocation2], 16
    %v108 = vlaneseq
    %v109 = vshrl.u32 %v108, 7
    %v110 = vadd.s32 %v109, 16
    %vm111 = vcmp.eq.s32.totalorder %v110, %v48
    %v112 = vld [vmem:[%s106] sm:$0xff]
    %v113 = vsel %vm111, %v112, 0.0
    %114 = vadd.xlane.f32.xlu0 %v113
    %v115 = vpop.xlane.xlu0 %114
    %vm116 = vcmp.ge.s32.totalorder %v110, %v48
    %vm117 = vmand %vm116, %vm49
    %v118 = vsel %vm117, %v112, 0.0
    %v119 = vrcp.pop %v115
    %v120 = vmul.f32 %v115, %v119
    %v121 = vsub.f32 1.0, %v120
    %v122 = vmul.f32 %v119, %v121
    %v123 = vadd.f32 %v119, %v122
    %vm124 = vweird.f32 %v115
    %vm125 = vweird.f32 %v119
    %vm126 = vmor %vm124, %vm125
    %v127 = vsel %vm126, %v119, %v123
    %v128 = vand.u32 2147483647, %v115
    %vm129 = vcmp.eq.f32.partialorder %v128, 8.507059e+37
    %v130 = vand.u32 %v115, 2147483648
    %v131 = vor.u32 1.1754944e-38, %v130
    %v132 = vsel %vm129, %v131, %v127
    %v133 = vmul.f32 %v118, %v132
    %134 = vst [vmem:[%s107] sm:$0xff] %v133
    %s135 = scalar_lea.vmem [#allocation0], 24
    %s136 = scalar_lea.vmem [#allocation2], 24
    %v137 = vlaneseq
    %v138 = vshrl.u32 %v137, 7
    %v139 = vadd.s32 %v138, 24
    %vm140 = vcmp.eq.s32.totalorder %v139, %v48
    %v141 = vld [vmem:[%s135] sm:$0xff]
    %v142 = vsel %vm140, %v141, 0.0
    %143 = vadd.xlane.f32.xlu0 %v142
    %v144 = vpop.xlane.xlu0 %143
    %vm145 = vcmp.ge.s32.totalorder %v139, %v48
    %vm146 = vmand %vm145, %vm49
    %v147 = vsel %vm146, %v141, 0.0
    %v148 = vrcp.pop %v144
    %v149 = vmul.f32 %v144, %v148
    %v150 = vsub.f32 1.0, %v149
    %v151 = vmul.f32 %v148, %v150
    %v152 = vadd.f32 %v148, %v151
    %vm153 = vweird.f32 %v144
    %vm154 = vweird.f32 %v148
    %vm155 = vmor %vm153, %vm154
    %v156 = vsel %vm155, %v148, %v152
    %v157 = vand.u32 2147483647, %v144
    %vm158 = vcmp.eq.f32.partialorder %v157, 8.507059e+37
    %v159 = vand.u32 %v144, 2147483648
    %v160 = vor.u32 1.1754944e-38, %v159
    %v161 = vsel %vm158, %v160, %v156
    %v162 = vmul.f32 %v147, %v161
    %163 = vst [vmem:[%s136] sm:$0xff] %v162
    %v164 = vlaneseq
    %v165 = vand.u32 %v164, 127
    %v166 = vlaneseq
    %v167 = vshrl.u32 %v166, 7
    %vm169 = vcmp.eq.s32.totalorder %v165, %v167
    %v170 = vlaneseq
    %v171 = vand.u32 %v170, 127
    %vm172 = vcmp.eq.s32.totalorder %v171, 0
    %v173 = vsel %vm172, 1.0, -1.0
    %v174 = vsel %vm169, %v173, 0.0
    %v175 = vlaneseq
    %v176 = vand.u32 %v175, 127
    %v177 = vlaneseq
    %v178 = vshrl.u32 %v177, 7
    %v179 = vadd.s32 %v178, 8
    %vm180 = vcmp.eq.s32.totalorder %v176, %v179
    %v181 = vsel %vm180, -1.0, 0.0
    %v182 = vlaneseq
    %v183 = vand.u32 %v182, 127
    %v184 = vlaneseq
    %v185 = vshrl.u32 %v184, 7
    %v186 = vadd.s32 %v185, 16
    %vm187 = vcmp.eq.s32.totalorder %v183, %v186
    %v188 = vsel %vm187, -1.0, 0.0
    %v189 = vlaneseq
    %v190 = vand.u32 %v189, 127
    %v191 = vlaneseq
    %v192 = vshrl.u32 %v191, 7
    %v193 = vadd.s32 %v192, 24
    %vm194 = vcmp.eq.s32.totalorder %v190, %v193
    %v195 = vsel %vm194, -1.0, 0.0
    %s196 = scalar_lea.vmem [#allocation2], 1
    %v197 = vld [vmem:[%s196] ss:$0 sm:$0xff]
    %v198 = vxor.u32 %v197, 2147483648
    %v199 = vlaneseq
    %v200 = vand.u32 %v199, 127
    %vm201 = vcmp.eq.s32.totalorder %v200, 1
    %v202 = vmul.f32 %v198, %v174
    %203 = vadd.xlane.f32.xlu0 %v202
    %v204 = vpop.xlane.xlu0 %203
    %v205 = vsel %vm201, %v204, %v174
    %s206 = scalar_lea.vmem [#allocation2], 2
    %v207 = vld [vmem:[%s206] ss:$0 sm:$0xff]
    %v208 = vxor.u32 %v207, 2147483648
    %v209 = vlaneseq
    %v210 = vand.u32 %v209, 127
    %vm211 = vcmp.eq.s32.totalorder %v210, 2
    %v212 = vmul.f32 %v208, %v205
    %213 = vadd.xlane.f32.xlu0 %v212
    %v214 = vpop.xlane.xlu0 %213
    %v215 = vsel %vm211, %v214, %v205
    %s216 = scalar_lea.vmem [#allocation2], 3
    %v217 = vld [vmem:[%s216] ss:$0 sm:$0xff]
    %v218 = vxor.u32 %v217, 2147483648
    %v219 = vlaneseq
    %v220 = vand.u32 %v219, 127
    %vm221 = vcmp.eq.s32.totalorder %v220, 3
    %v222 = vmul.f32 %v218, %v215
    %223 = vadd.xlane.f32.xlu0 %v222
    %v224 = vpop.xlane.xlu0 %223
    %v225 = vsel %vm221, %v224, %v215
    %s226 = scalar_lea.vmem [#allocation2], 4
    %v227 = vld [vmem:[%s226] ss:$0 sm:$0xff]
    %v228 = vxor.u32 %v227, 2147483648
    %v229 = vlaneseq
    %v230 = vand.u32 %v229, 127
    %vm231 = vcmp.eq.s32.totalorder %v230, 4
    %v232 = vmul.f32 %v228, %v225
    %233 = vadd.xlane.f32.xlu0 %v232
    %v234 = vpop.xlane.xlu0 %233
    %v235 = vsel %vm231, %v234, %v225
    %s236 = scalar_lea.vmem [#allocation2], 5
    %v237 = vld [vmem:[%s236] ss:$0 sm:$0xff]
    %v238 = vxor.u32 %v237, 2147483648
    %v239 = vlaneseq
    %v240 = vand.u32 %v239, 127
    %vm241 = vcmp.eq.s32.totalorder %v240, 5
    %v242 = vmul.f32 %v238, %v235
    %243 = vadd.xlane.f32.xlu0 %v242
    %v244 = vpop.xlane.xlu0 %243
    %v245 = vsel %vm241, %v244, %v235
    %s246 = scalar_lea.vmem [#allocation2], 6
    %v247 = vld [vmem:[%s246] ss:$0 sm:$0xff]
    %v248 = vxor.u32 %v247, 2147483648
    %v249 = vlaneseq
    %v250 = vand.u32 %v249, 127
    %vm251 = vcmp.eq.s32.totalorder %v250, 6
    %v252 = vmul.f32 %v248, %v245
    %253 = vadd.xlane.f32.xlu0 %v252
    %v254 = vpop.xlane.xlu0 %253
    %v255 = vsel %vm251, %v254, %v245
    %s256 = scalar_lea.vmem [#allocation2], 7
    %v257 = vld [vmem:[%s256] ss:$0 sm:$0xff]
    %v258 = vxor.u32 %v257, 2147483648
    %v259 = vlaneseq
    %v260 = vand.u32 %v259, 127
    %vm261 = vcmp.eq.s32.totalorder %v260, 7
    %v262 = vmul.f32 %v258, %v255
    %263 = vadd.xlane.f32.xlu0 %v262
    %v264 = vpop.xlane.xlu0 %263
    %v265 = vsel %vm261, %v264, %v255
    %s266 = scalar_lea.vmem [#allocation2], 8
    %v267 = vld [vmem:[%s266] ss:$0 sm:$0xff]
    %v268 = vxor.u32 %v267, 2147483648
    %v269 = vlaneseq
    %v270 = vand.u32 %v269, 127
    %vm271 = vcmp.eq.s32.totalorder %v270, 8
    %v272 = vmul.f32 %v268, %v265
    %273 = vadd.xlane.f32.xlu0 %v272
    %v274 = vpop.xlane.xlu0 %273
    %v275 = vsel %vm271, %v274, %v265
    %v276 = vmul.f32 %v268, %v181
    %277 = vadd.xlane.f32.xlu0 %v276
    %v278 = vpop.xlane.xlu0 %277
    %v279 = vsel %vm271, %v278, %v181
    %s280 = scalar_lea.vmem [#allocation2], 9
    %v281 = vld [vmem:[%s280] ss:$0 sm:$0xff]
    %v282 = vxor.u32 %v281, 2147483648
    %v283 = vlaneseq
    %v284 = vand.u32 %v283, 127
    %vm285 = vcmp.eq.s32.totalorder %v284, 9
    %v286 = vmul.f32 %v282, %v275
    %287 = vadd.xlane.f32.xlu0 %v286
    %v288 = vpop.xlane.xlu0 %287
    %v289 = vsel %vm285, %v288, %v275
    %v290 = vmul.f32 %v282, %v279
    %291 = vadd.xlane.f32.xlu0 %v290
    %v292 = vpop.xlane.xlu0 %291
    %v293 = vsel %vm285, %v292, %v279
    %s294 = scalar_lea.vmem [#allocation2], 10
    %v295 = vld [vmem:[%s294] ss:$0 sm:$0xff]
    %v296 = vxor.u32 %v295, 2147483648
    %v297 = vlaneseq
    %v298 = vand.u32 %v297, 127
    %vm299 = vcmp.eq.s32.totalorder %v298, 10
    %v300 = vmul.f32 %v296, %v289
    %301 = vadd.xlane.f32.xlu0 %v300
    %v302 = vpop.xlane.xlu0 %301
    %v303 = vsel %vm299, %v302, %v289
    %v304 = vmul.f32 %v296, %v293
    %305 = vadd.xlane.f32.xlu0 %v304
    %v306 = vpop.xlane.xlu0 %305
    %v307 = vsel %vm299, %v306, %v293
    %s308 = scalar_lea.vmem [#allocation2], 11
    %v309 = vld [vmem:[%s308] ss:$0 sm:$0xff]
    %v310 = vxor.u32 %v309, 2147483648
    %v311 = vlaneseq
    %v312 = vand.u32 %v311, 127
    %vm313 = vcmp.eq.s32.totalorder %v312, 11
    %v314 = vmul.f32 %v310, %v303
    %315 = vadd.xlane.f32.xlu0 %v314
    %v316 = vpop.xlane.xlu0 %315
    %v317 = vsel %vm313, %v316, %v303
    %v318 = vmul.f32 %v310, %v307
    %319 = vadd.xlane.f32.xlu0 %v318
    %v320 = vpop.xlane.xlu0 %319
    %v321 = vsel %vm313, %v320, %v307
    %s322 = scalar_lea.vmem [#allocation2], 12
    %v323 = vld [vmem:[%s322] ss:$0 sm:$0xff]
    %v324 = vxor.u32 %v323, 2147483648
    %v325 = vlaneseq
    %v326 = vand.u32 %v325, 127
    %vm327 = vcmp.eq.s32.totalorder %v326, 12
    %v328 = vmul.f32 %v324, %v317
    %329 = vadd.xlane.f32.xlu0 %v328
    %v330 = vpop.xlane.xlu0 %329
    %v331 = vsel %vm327, %v330, %v317
    %v332 = vmul.f32 %v324, %v321
    %333 = vadd.xlane.f32.xlu0 %v332
    %v334 = vpop.xlane.xlu0 %333
    %v335 = vsel %vm327, %v334, %v321
    %s336 = scalar_lea.vmem [#allocation2], 13
    %v337 = vld [vmem:[%s336] ss:$0 sm:$0xff]
    %v338 = vxor.u32 %v337, 2147483648
    %v339 = vlaneseq
    %v340 = vand.u32 %v339, 127
    %vm341 = vcmp.eq.s32.totalorder %v340, 13
    %v342 = vmul.f32 %v338, %v331
    %343 = vadd.xlane.f32.xlu0 %v342
    %v344 = vpop.xlane.xlu0 %343
    %v345 = vsel %vm341, %v344, %v331
    %v346 = vmul.f32 %v338, %v335
    %347 = vadd.xlane.f32.xlu0 %v346
    %v348 = vpop.xlane.xlu0 %347
    %v349 = vsel %vm341, %v348, %v335
    %s350 = scalar_lea.vmem [#allocation2], 14
    %v351 = vld [vmem:[%s350] ss:$0 sm:$0xff]
    %v352 = vxor.u32 %v351, 2147483648
    %v353 = vlaneseq
    %v354 = vand.u32 %v353, 127
    %vm355 = vcmp.eq.s32.totalorder %v354, 14
    %v356 = vmul.f32 %v352, %v345
    %357 = vadd.xlane.f32.xlu0 %v356
    %v358 = vpop.xlane.xlu0 %357
    %v359 = vsel %vm355, %v358, %v345
    %v360 = vmul.f32 %v352, %v349
    %361 = vadd.xlane.f32.xlu0 %v360
    %v362 = vpop.xlane.xlu0 %361
    %v363 = vsel %vm355, %v362, %v349
    %s364 = scalar_lea.vmem [#allocation2], 15
    %v365 = vld [vmem:[%s364] ss:$0 sm:$0xff]
    %v366 = vxor.u32 %v365, 2147483648
    %v367 = vlaneseq
    %v368 = vand.u32 %v367, 127
    %vm369 = vcmp.eq.s32.totalorder %v368, 15
    %v370 = vmul.f32 %v366, %v359
    %371 = vadd.xlane.f32.xlu0 %v370
    %v372 = vpop.xlane.xlu0 %371
    %v373 = vsel %vm369, %v372, %v359
    %v374 = vmul.f32 %v366, %v363
    %375 = vadd.xlane.f32.xlu0 %v374
    %v376 = vpop.xlane.xlu0 %375
    %v377 = vsel %vm369, %v376, %v363
    %s378 = scalar_lea.vmem [#allocation2], 16
    %v379 = vld [vmem:[%s378] ss:$0 sm:$0xff]
    %v380 = vxor.u32 %v379, 2147483648
    %v381 = vlaneseq
    %v382 = vand.u32 %v381, 127
    %vm383 = vcmp.eq.s32.totalorder %v382, 16
    %v384 = vmul.f32 %v380, %v373
    %385 = vadd.xlane.f32.xlu0 %v384
    %v386 = vpop.xlane.xlu0 %385
    %v387 = vsel %vm383, %v386, %v373
    %v388 = vmul.f32 %v380, %v377
    %389 = vadd.xlane.f32.xlu0 %v388
    %v390 = vpop.xlane.xlu0 %389
    %v391 = vsel %vm383, %v390, %v377
    %v392 = vmul.f32 %v380, %v188
    %393 = vadd.xlane.f32.xlu0 %v392
    %v394 = vpop.xlane.xlu0 %393
    %v395 = vsel %vm383, %v394, %v188
    %s396 = scalar_lea.vmem [#allocation2], 17
    %v397 = vld [vmem:[%s396] ss:$0 sm:$0xff]
    %v398 = vxor.u32 %v397, 2147483648
    %v399 = vlaneseq
    %v400 = vand.u32 %v399, 127
    %vm401 = vcmp.eq.s32.totalorder %v400, 17
    %v402 = vmul.f32 %v398, %v387
    %403 = vadd.xlane.f32.xlu0 %v402
    %v404 = vpop.xlane.xlu0 %403
    %v405 = vsel %vm401, %v404, %v387
    %v406 = vmul.f32 %v398, %v391
    %407 = vadd.xlane.f32.xlu0 %v406
    %v408 = vpop.xlane.xlu0 %407
    %v409 = vsel %vm401, %v408, %v391
    %v410 = vmul.f32 %v398, %v395
    %411 = vadd.xlane.f32.xlu0 %v410
    %v412 = vpop.xlane.xlu0 %411
    %v413 = vsel %vm401, %v412, %v395
    %s414 = scalar_lea.vmem [#allocation2], 18
    %v415 = vld [vmem:[%s414] ss:$0 sm:$0xff]
    %v416 = vxor.u32 %v415, 2147483648
    %v417 = vlaneseq
    %v418 = vand.u32 %v417, 127
    %vm419 = vcmp.eq.s32.totalorder %v418, 18
    %v420 = vmul.f32 %v416, %v405
    %421 = vadd.xlane.f32.xlu0 %v420
    %v422 = vpop.xlane.xlu0 %421
    %v423 = vsel %vm419, %v422, %v405
    %v424 = vmul.f32 %v416, %v409
    %425 = vadd.xlane.f32.xlu0 %v424
    %v426 = vpop.xlane.xlu0 %425
    %v427 = vsel %vm419, %v426, %v409
    %v428 = vmul.f32 %v416, %v413
    %429 = vadd.xlane.f32.xlu0 %v428
    %v430 = vpop.xlane.xlu0 %429
    %v431 = vsel %vm419, %v430, %v413
    %s432 = scalar_lea.vmem [#allocation2], 19
    %v433 = vld [vmem:[%s432] ss:$0 sm:$0xff]
    %v434 = vxor.u32 %v433, 2147483648
    %v435 = vlaneseq
    %v436 = vand.u32 %v435, 127
    %vm437 = vcmp.eq.s32.totalorder %v436, 19
    %v438 = vmul.f32 %v434, %v423
    %439 = vadd.xlane.f32.xlu0 %v438
    %v440 = vpop.xlane.xlu0 %439
    %v441 = vsel %vm437, %v440, %v423
    %v442 = vmul.f32 %v434, %v427
    %443 = vadd.xlane.f32.xlu0 %v442
    %v444 = vpop.xlane.xlu0 %443
    %v445 = vsel %vm437, %v444, %v427
    %v446 = vmul.f32 %v434, %v431
    %447 = vadd.xlane.f32.xlu0 %v446
    %v448 = vpop.xlane.xlu0 %447
    %v449 = vsel %vm437, %v448, %v431
    %s450 = scalar_lea.vmem [#allocation2], 20
    %v451 = vld [vmem:[%s450] ss:$0 sm:$0xff]
    %v452 = vxor.u32 %v451, 2147483648
    %v453 = vlaneseq
    %v454 = vand.u32 %v453, 127
    %vm455 = vcmp.eq.s32.totalorder %v454, 20
    %v456 = vmul.f32 %v452, %v441
    %457 = vadd.xlane.f32.xlu0 %v456
    %v458 = vpop.xlane.xlu0 %457
    %v459 = vsel %vm455, %v458, %v441
    %v460 = vmul.f32 %v452, %v445
    %461 = vadd.xlane.f32.xlu0 %v460
    %v462 = vpop.xlane.xlu0 %461
    %v463 = vsel %vm455, %v462, %v445
    %v464 = vmul.f32 %v452, %v449
    %465 = vadd.xlane.f32.xlu0 %v464
    %v466 = vpop.xlane.xlu0 %465
    %v467 = vsel %vm455, %v466, %v449
    %s468 = scalar_lea.vmem [#allocation2], 21
    %v469 = vld [vmem:[%s468] ss:$0 sm:$0xff]
    %v470 = vxor.u32 %v469, 2147483648
    %v471 = vlaneseq
    %v472 = vand.u32 %v471, 127
    %vm473 = vcmp.eq.s32.totalorder %v472, 21
    %v474 = vmul.f32 %v470, %v459
    %475 = vadd.xlane.f32.xlu0 %v474
    %v476 = vpop.xlane.xlu0 %475
    %v477 = vsel %vm473, %v476, %v459
    %v478 = vmul.f32 %v470, %v463
    %479 = vadd.xlane.f32.xlu0 %v478
    %v480 = vpop.xlane.xlu0 %479
    %v481 = vsel %vm473, %v480, %v463
    %v482 = vmul.f32 %v470, %v467
    %483 = vadd.xlane.f32.xlu0 %v482
    %v484 = vpop.xlane.xlu0 %483
    %v485 = vsel %vm473, %v484, %v467
    %s486 = scalar_lea.vmem [#allocation2], 22
    %v487 = vld [vmem:[%s486] ss:$0 sm:$0xff]
    %v488 = vxor.u32 %v487, 2147483648
    %v489 = vlaneseq
    %v490 = vand.u32 %v489, 127
    %vm491 = vcmp.eq.s32.totalorder %v490, 22
    %v492 = vmul.f32 %v488, %v477
    %493 = vadd.xlane.f32.xlu0 %v492
    %v494 = vpop.xlane.xlu0 %493
    %v495 = vsel %vm491, %v494, %v477
    %v496 = vmul.f32 %v488, %v481
    %497 = vadd.xlane.f32.xlu0 %v496
    %v498 = vpop.xlane.xlu0 %497
    %v499 = vsel %vm491, %v498, %v481
    %v500 = vmul.f32 %v488, %v485
    %501 = vadd.xlane.f32.xlu0 %v500
    %v502 = vpop.xlane.xlu0 %501
    %v503 = vsel %vm491, %v502, %v485
    %s504 = scalar_lea.vmem [#allocation2], 23
    %v505 = vld [vmem:[%s504] ss:$0 sm:$0xff]
    %v506 = vxor.u32 %v505, 2147483648
    %v507 = vlaneseq
    %v508 = vand.u32 %v507, 127
    %vm509 = vcmp.eq.s32.totalorder %v508, 23
    %v510 = vmul.f32 %v506, %v495
    %511 = vadd.xlane.f32.xlu0 %v510
    %v512 = vpop.xlane.xlu0 %511
    %v513 = vsel %vm509, %v512, %v495
    %v514 = vmul.f32 %v506, %v499
    %515 = vadd.xlane.f32.xlu0 %v514
    %v516 = vpop.xlane.xlu0 %515
    %v517 = vsel %vm509, %v516, %v499
    %v518 = vmul.f32 %v506, %v503
    %519 = vadd.xlane.f32.xlu0 %v518
    %v520 = vpop.xlane.xlu0 %519
    %v521 = vsel %vm509, %v520, %v503
    %s522 = scalar_lea.vmem [#allocation2], 24
    %v523 = vld [vmem:[%s522] ss:$0 sm:$0xff]
    %v524 = vxor.u32 %v523, 2147483648
    %v525 = vlaneseq
    %v526 = vand.u32 %v525, 127
    %vm527 = vcmp.eq.s32.totalorder %v526, 24
    %v528 = vmul.f32 %v524, %v513
    %529 = vadd.xlane.f32.xlu0 %v528
    %v530 = vpop.xlane.xlu0 %529
    %v531 = vsel %vm527, %v530, %v513
    %v532 = vmul.f32 %v524, %v517
    %533 = vadd.xlane.f32.xlu0 %v532
    %v534 = vpop.xlane.xlu0 %533
    %v535 = vsel %vm527, %v534, %v517
    %v536 = vmul.f32 %v524, %v521
    %537 = vadd.xlane.f32.xlu0 %v536
    %v538 = vpop.xlane.xlu0 %537
    %v539 = vsel %vm527, %v538, %v521
    %v540 = vmul.f32 %v524, %v195
    %541 = vadd.xlane.f32.xlu0 %v540
    %v542 = vpop.xlane.xlu0 %541
    %v543 = vsel %vm527, %v542, %v195
    %s544 = scalar_lea.vmem [#allocation2], 25
    %v545 = vld [vmem:[%s544] ss:$0 sm:$0xff]
    %v546 = vxor.u32 %v545, 2147483648
    %v547 = vlaneseq
    %v548 = vand.u32 %v547, 127
    %vm549 = vcmp.eq.s32.totalorder %v548, 25
    %v550 = vmul.f32 %v546, %v531
    %551 = vadd.xlane.f32.xlu0 %v550
    %v552 = vpop.xlane.xlu0 %551
    %v553 = vsel %vm549, %v552, %v531
    %v554 = vmul.f32 %v546, %v535
    %555 = vadd.xlane.f32.xlu0 %v554
    %v556 = vpop.xlane.xlu0 %555
    %v557 = vsel %vm549, %v556, %v535
    %v558 = vmul.f32 %v546, %v539
    %559 = vadd.xlane.f32.xlu0 %v558
    %v560 = vpop.xlane.xlu0 %559
    %v561 = vsel %vm549, %v560, %v539
    %v562 = vmul.f32 %v546, %v543
    %563 = vadd.xlane.f32.xlu0 %v562
    %v564 = vpop.xlane.xlu0 %563
    %v565 = vsel %vm549, %v564, %v543
    %s566 = scalar_lea.vmem [#allocation2], 26
    %v567 = vld [vmem:[%s566] ss:$0 sm:$0xff]
    %v568 = vxor.u32 %v567, 2147483648
    %v569 = vlaneseq
    %v570 = vand.u32 %v569, 127
    %vm571 = vcmp.eq.s32.totalorder %v570, 26
    %v572 = vmul.f32 %v568, %v553
    %573 = vadd.xlane.f32.xlu0 %v572
    %v574 = vpop.xlane.xlu0 %573
    %v575 = vsel %vm571, %v574, %v553
    %v576 = vmul.f32 %v568, %v557
    %577 = vadd.xlane.f32.xlu0 %v576
    %v578 = vpop.xlane.xlu0 %577
    %v579 = vsel %vm571, %v578, %v557
    %v580 = vmul.f32 %v568, %v561
    %581 = vadd.xlane.f32.xlu0 %v580
    %v582 = vpop.xlane.xlu0 %581
    %v583 = vsel %vm571, %v582, %v561
    %v584 = vmul.f32 %v568, %v565
    %585 = vadd.xlane.f32.xlu0 %v584
    %v586 = vpop.xlane.xlu0 %585
    %v587 = vsel %vm571, %v586, %v565
    %s588 = scalar_lea.vmem [#allocation2], 27
    %v589 = vld [vmem:[%s588] ss:$0 sm:$0xff]
    %v590 = vxor.u32 %v589, 2147483648
    %v591 = vlaneseq
    %v592 = vand.u32 %v591, 127
    %vm593 = vcmp.eq.s32.totalorder %v592, 27
    %v594 = vmul.f32 %v590, %v575
    %595 = vadd.xlane.f32.xlu0 %v594
    %v596 = vpop.xlane.xlu0 %595
    %v597 = vsel %vm593, %v596, %v575
    %v598 = vmul.f32 %v590, %v579
    %599 = vadd.xlane.f32.xlu0 %v598
    %v600 = vpop.xlane.xlu0 %599
    %v601 = vsel %vm593, %v600, %v579
    %v602 = vmul.f32 %v590, %v583
    %603 = vadd.xlane.f32.xlu0 %v602
    %v604 = vpop.xlane.xlu0 %603
    %v605 = vsel %vm593, %v604, %v583
    %v606 = vmul.f32 %v590, %v587
    %607 = vadd.xlane.f32.xlu0 %v606
    %v608 = vpop.xlane.xlu0 %607
    %v609 = vsel %vm593, %v608, %v587
    %s610 = scalar_lea.vmem [#allocation2], 28
    %v611 = vld [vmem:[%s610] ss:$0 sm:$0xff]
    %v612 = vxor.u32 %v611, 2147483648
    %v613 = vlaneseq
    %v614 = vand.u32 %v613, 127
    %vm615 = vcmp.eq.s32.totalorder %v614, 28
    %v616 = vmul.f32 %v612, %v597
    %617 = vadd.xlane.f32.xlu0 %v616
    %v618 = vpop.xlane.xlu0 %617
    %v619 = vsel %vm615, %v618, %v597
    %v620 = vmul.f32 %v612, %v601
    %621 = vadd.xlane.f32.xlu0 %v620
    %v622 = vpop.xlane.xlu0 %621
    %v623 = vsel %vm615, %v622, %v601
    %v624 = vmul.f32 %v612, %v605
    %625 = vadd.xlane.f32.xlu0 %v624
    %v626 = vpop.xlane.xlu0 %625
    %v627 = vsel %vm615, %v626, %v605
    %v628 = vmul.f32 %v612, %v609
    %629 = vadd.xlane.f32.xlu0 %v628
    %v630 = vpop.xlane.xlu0 %629
    %v631 = vsel %vm615, %v630, %v609
    %s632 = scalar_lea.vmem [#allocation2], 29
    %v633 = vld [vmem:[%s632] ss:$0 sm:$0xff]
    %v634 = vxor.u32 %v633, 2147483648
    %v635 = vlaneseq
    %v636 = vand.u32 %v635, 127
    %vm637 = vcmp.eq.s32.totalorder %v636, 29
    %v638 = vmul.f32 %v634, %v619
    %639 = vadd.xlane.f32.xlu0 %v638
    %v640 = vpop.xlane.xlu0 %639
    %v641 = vsel %vm637, %v640, %v619
    %v642 = vmul.f32 %v634, %v623
    %643 = vadd.xlane.f32.xlu0 %v642
    %v644 = vpop.xlane.xlu0 %643
    %v645 = vsel %vm637, %v644, %v623
    %v646 = vmul.f32 %v634, %v627
    %647 = vadd.xlane.f32.xlu0 %v646
    %v648 = vpop.xlane.xlu0 %647
    %v649 = vsel %vm637, %v648, %v627
    %v650 = vmul.f32 %v634, %v631
    %651 = vadd.xlane.f32.xlu0 %v650
    %v652 = vpop.xlane.xlu0 %651
    %v653 = vsel %vm637, %v652, %v631
    %s654 = scalar_lea.vmem [#allocation2], 30
    %v655 = vld [vmem:[%s654] ss:$0 sm:$0xff]
    %v656 = vxor.u32 %v655, 2147483648
    %v657 = vlaneseq
    %v658 = vand.u32 %v657, 127
    %vm659 = vcmp.eq.s32.totalorder %v658, 30
    %v660 = vmul.f32 %v656, %v641
    %661 = vadd.xlane.f32.xlu0 %v660
    %v662 = vpop.xlane.xlu0 %661
    %v663 = vsel %vm659, %v662, %v641
    %v664 = vmul.f32 %v656, %v645
    %665 = vadd.xlane.f32.xlu0 %v664
    %v666 = vpop.xlane.xlu0 %665
    %v667 = vsel %vm659, %v666, %v645
    %v668 = vmul.f32 %v656, %v649
    %669 = vadd.xlane.f32.xlu0 %v668
    %v670 = vpop.xlane.xlu0 %669
    %v671 = vsel %vm659, %v670, %v649
    %v672 = vmul.f32 %v656, %v653
    %673 = vadd.xlane.f32.xlu0 %v672
    %v674 = vpop.xlane.xlu0 %673
    %v675 = vsel %vm659, %v674, %v653
    %s676 = scalar_lea.vmem [#allocation2], 31
    %v677 = vld [vmem:[%s676] ss:$0 sm:$0xff]
    %v678 = vxor.u32 %v677, 2147483648
    %v679 = vlaneseq
    %v680 = vand.u32 %v679, 127
    %vm681 = vcmp.eq.s32.totalorder %v680, 31
    %v682 = vmul.f32 %v678, %v663
    %683 = vadd.xlane.f32.xlu0 %v682
    %v684 = vpop.xlane.xlu0 %683
    %v685 = vsel %vm681, %v684, %v663
    %v686 = vmul.f32 %v678, %v667
    %687 = vadd.xlane.f32.xlu0 %v686
    %v688 = vpop.xlane.xlu0 %687
    %v689 = vsel %vm681, %v688, %v667
    %v690 = vmul.f32 %v678, %v671
    %691 = vadd.xlane.f32.xlu0 %v690
    %v692 = vpop.xlane.xlu0 %691
    %v693 = vsel %vm681, %v692, %v671
    %v694 = vmul.f32 %v678, %v675
    %695 = vadd.xlane.f32.xlu0 %v694
    %v696 = vpop.xlane.xlu0 %695
    %v697 = vsel %vm681, %v696, %v675
    %v698 = vrcp.pop %v57
    %v699 = vmul.f32 %v57, %v698
    %v700 = vsub.f32 1.0, %v699
    %v701 = vmul.f32 %v698, %v700
    %v702 = vadd.f32 %v698, %v701
    %vm703 = vweird.f32 %v57
    %vm704 = vweird.f32 %v698
    %vm705 = vmor %vm703, %vm704
    %v706 = vsel %vm705, %v698, %v702
    %v707 = vand.u32 2147483647, %v57
    %vm708 = vcmp.eq.f32.partialorder %v707, 8.507059e+37
    %v709 = vand.u32 %v57, 2147483648
    %v710 = vor.u32 1.1754944e-38, %v709
    %v711 = vsel %vm708, %v710, %v706
    %v712 = vmul.f32 %v685, %v711
    %vm713 = vweird.f32 %v57
    %v714 = vsel %vm713, %v685, %v712
    %715 = vst [vmem:[#allocation1] sm:$0xff] %v714
    %v716 = vrcp.pop %v86
    %v717 = vmul.f32 %v86, %v716
    %v718 = vsub.f32 1.0, %v717
    %v719 = vmul.f32 %v716, %v718
    %v720 = vadd.f32 %v716, %v719
    %vm721 = vweird.f32 %v86
    %vm722 = vweird.f32 %v716
    %vm723 = vmor %vm721, %vm722
    %v724 = vsel %vm723, %v716, %v720
    %v725 = vand.u32 2147483647, %v86
    %vm726 = vcmp.eq.f32.partialorder %v725, 8.507059e+37
    %v727 = vand.u32 %v86, 2147483648
    %v728 = vor.u32 1.1754944e-38, %v727
    %v729 = vsel %vm726, %v728, %v724
    %v730 = vmul.f32 %v689, %v729
    %vm731 = vweird.f32 %v86
    %v732 = vsel %vm731, %v689, %v730
    %s733 = scalar_lea.vmem [#allocation1], 8
    %734 = vst [vmem:[%s733] sm:$0xff] %v732
    %v735 = vrcp.pop %v115
    %v736 = vmul.f32 %v115, %v735
    %v737 = vsub.f32 1.0, %v736
    %v738 = vmul.f32 %v735, %v737
    %v739 = vadd.f32 %v735, %v738
    %vm740 = vweird.f32 %v115
    %vm741 = vweird.f32 %v735
    %vm742 = vmor %vm740, %vm741
    %v743 = vsel %vm742, %v735, %v739
    %v744 = vand.u32 2147483647, %v115
    %vm745 = vcmp.eq.f32.partialorder %v744, 8.507059e+37
    %v746 = vand.u32 %v115, 2147483648
    %v747 = vor.u32 1.1754944e-38, %v746
    %v748 = vsel %vm745, %v747, %v743
    %v749 = vmul.f32 %v693, %v748
    %vm750 = vweird.f32 %v115
    %v751 = vsel %vm750, %v693, %v749
    %s752 = scalar_lea.vmem [#allocation1], 16
    %753 = vst [vmem:[%s752] sm:$0xff] %v751
    %v754 = vrcp.pop %v144
    %v755 = vmul.f32 %v144, %v754
    %v756 = vsub.f32 1.0, %v755
    %v757 = vmul.f32 %v754, %v756
    %v758 = vadd.f32 %v754, %v757
    %vm759 = vweird.f32 %v144
    %vm760 = vweird.f32 %v754
    %vm761 = vmor %vm759, %vm760
    %v762 = vsel %vm761, %v754, %v758
    %v763 = vand.u32 2147483647, %v144
    %vm764 = vcmp.eq.f32.partialorder %v763, 8.507059e+37
    %v765 = vand.u32 %v144, 2147483648
    %v766 = vor.u32 1.1754944e-38, %v765
    %v767 = vsel %vm764, %v766, %v762
    %v768 = vmul.f32 %v697, %v767
    %vm769 = vweird.f32 %v144
    %v770 = vsel %vm769, %v697, %v768
    %s771 = scalar_lea.vmem [#allocation1], 24
    %772 = vst [vmem:[%s771] sm:$0xff] %v770
    // Predicated region
    $region36: #{custom-call.11} parent=1 // pred_check
      _
    $region37: #{custom-call.11} parent=1 // pred_check_branch
      %774 = sbr.rel (0) target = $region39
    $region38: #{custom-call.11} parent=1 // pred_region
      // Predicated region
      $region40: #{custom-call.11} parent=38 // pred_check
        _
      $region41: #{custom-call.11} parent=38 // pred_check_branch
        %776 = sbr.rel (0) target = $region43
      $region42: #{custom-call.11} parent=38 // pred_region
        // Predicated region
        $region55: #{custom-call.11} parent=42 // pred_check
          _
        $region56: #{custom-call.11} parent=42 // pred_check_branch
          %798 = sbr.rel (0) target = $region58
        $region57: #{custom-call.11} parent=42 // pred_region
          loop: start=0, step=1, limit=1
          $region59: #{custom-call.11} parent=57 // loop_pre_header
            _
          $region60: #{custom-call.11} parent=57 // loop_header
            %s800 = sphi 0, %s804
            %p801 = scmp.ge.s32.totalorder %s800, 1
            %s805 = sphi [#allocation1], [#allocation1]
            %s806 = sphi %s1, %s1
          $region61: #{custom-call.11} parent=57 // loop_header_branch
            %803 = sbr.rel (%p801) target = $region65
          $region62: #{custom-call.11} parent=57 // loop_body
            %v807 = vld [vmem:[%s805] sm:$0xff]
            %808 = vst [vmem:[%s806] sm:$0xff] %v807
            %v809 = vld [vmem:[%s805 + $0x8] sm:$0xff]
            %810 = vst [vmem:[%s806 + $0x8] sm:$0xff] %v809
            %v811 = vld [vmem:[%s805 + $0x10] sm:$0xff]
            %812 = vst [vmem:[%s806 + $0x10] sm:$0xff] %v811
            %v813 = vld [vmem:[%s805 + $0x18] sm:$0xff]
            %814 = vst [vmem:[%s806 + $0x18] sm:$0xff] %v813
          $region63: #{custom-call.11} parent=57 // loop_footer
            %s804 = sadd.s32 1, %s800
          $region64: #{custom-call.11} parent=57 // loop_footer_branch
            %799 = sbr.rel target = $region60
          $region65: #{custom-call.11} parent=57 // loop_exit
            _
        $region58: #{custom-call.11} parent=42 // pred_fallthru
          _
        // Predicated region
        $region66: #{custom-call.11} parent=42 // pred_check
          _
        $region67: #{custom-call.11} parent=42 // pred_check_branch
          %816 = sbr.rel target = $region69
        $region68: #{custom-call.11} parent=42 // pred_region
          _
        $region69: #{custom-call.11} parent=42 // pred_fallthru
          _
      $region43: #{custom-call.11} parent=38 // pred_fallthru
        _
      // Predicated region
      $region44: #{custom-call.11} parent=38 // pred_check
        _
      $region45: #{custom-call.11} parent=38 // pred_check_branch
        %778 = sbr.rel target = $region47
      $region46: #{custom-call.11} parent=38 // pred_region
        %s780 = ssub.s32 256, 1
        loop: start=0, step=1, limit=1
        $region48: #{custom-call.11} parent=46 // loop_pre_header
          _
        $region49: #{custom-call.11} parent=46 // loop_header
          %s782 = sphi 0, %s786
          %p783 = scmp.ge.s32.totalorder %s782, 1
          %s787 = sphi [#allocation1], [#allocation1]
          %s788 = sphi %s1, %s1
        $region50: #{custom-call.11} parent=46 // loop_header_branch
          %785 = sbr.rel (%p783) target = $region54
        $region51: #{custom-call.11} parent=46 // loop_body
          %v789 = vld [vmem:[%s787] sm:%s780]
          %790 = vst [vmem:[%s788] sm:%s780] %v789
          %v791 = vld [vmem:[%s787 + $0x8] sm:%s780]
          %792 = vst [vmem:[%s788 + $0x8] sm:%s780] %v791
          %v793 = vld [vmem:[%s787 + $0x10] sm:%s780]
          %794 = vst [vmem:[%s788 + $0x10] sm:%s780] %v793
          %v795 = vld [vmem:[%s787 + $0x18] sm:%s780]
          %796 = vst [vmem:[%s788 + $0x18] sm:%s780] %v795
        $region52: #{custom-call.11} parent=46 // loop_footer
          %s786 = sadd.s32 1, %s782
        $region53: #{custom-call.11} parent=46 // loop_footer_branch
          %781 = sbr.rel target = $region49
        $region54: #{custom-call.11} parent=46 // loop_exit
          _
      $region47: #{custom-call.11} parent=38 // pred_fallthru
        _
    $region39: #{custom-call.11} parent=1 // pred_fallthru
      _
    %817 = vnop

// kernel: linear_discriminative_loss.1
$region0: #{linear_discriminative_loss.1}
  #allocation0 [shape = 'u32[]', space=smem, size = 0x4, offset = 0x4, fixed_abs, tag = 'smem constant byte address 0x4 - core index']
  #allocation1 [shape = 'u32[72,128]{1,0:T(1,128)}', space=vmem, size = 0x9000, scoped, tag = 'internal scratch']
  %s0 = inlined_call_operand.vmem [shape: f32[64,32], index: 0, kind: input, shape index: {}]
  %s1 = inlined_call_operand.vmem [shape: s32[64,1], index: 1, kind: input, shape index: {}]
  %s2 = inlined_call_operand.vmem [shape: f32[1,40,128], index: 2, kind: output, shape index: {0}]
  %s3 = inlined_call_operand.vmem [shape: f32[1,1,4], index: 3, kind: output, shape index: {1}]
  %4 = xla_tuple %s2, %s3
  %s5 = sld [smem:[#allocation0]]
  $region30: #{linear_discriminative_loss.1} parent=0
    _
  %s7 = ssub.s32 1, %s5
  %s8 = scalar_select 0, %s7, %s5
  // Predicated region
  $region2: #{linear_discriminative_loss.1} parent=0 // pred_check
    _
  $region3: #{linear_discriminative_loss.1} parent=0 // pred_check_branch
    %10 = sbr.rel (0) target = $region5
  $region4: #{linear_discriminative_loss.1} parent=0 // pred_region
    %s11 = sadd.s32 0, 0
    %p12 = scmp.lt.s32.totalorder %s11, 0
    %s13 = scalar_select %p12, %s11, 0
    %s14 = smul.u32 8, %s13
    %p15 = scmp.lt.s32.totalorder %s14, 7
    %s16 = scalar_select %p15, %s14, 7
    %s17 = smul.addr %s16, 8
    %s18 = scalar_lea.vmem %s0, %s17
    %s19 = sadd.s32 0, 0
    %p20 = scmp.lt.s32.totalorder %s19, 0
    %s21 = scalar_select %p20, %s19, 0
    %s22 = smul.u32 8, %s21
  $region5: #{linear_discriminative_loss.1} parent=0 // pred_fallthru
    _
  // Predicated region
  $region6: #{linear_discriminative_loss.1} parent=0 // pred_check
    _
  $region7: #{linear_discriminative_loss.1} parent=0 // pred_check_branch
    %24 = sbr.rel (0) target = $region9
  $region8: #{linear_discriminative_loss.1} parent=0 // pred_region
    %s25 = sadd.s32 0, 0
    %p26 = scmp.lt.s32.totalorder %s25, 0
    %s27 = scalar_select %p26, %s25, 0
    %s28 = smul.u32 8, %s27
    %p29 = scmp.lt.s32.totalorder %s28, 7
    %s30 = scalar_select %p29, %s28, 7
    %s31 = smul.addr %s30, 8
    %s32 = scalar_lea.vmem %s1, %s31
    %s33 = sadd.s32 0, 0
    %p34 = scmp.lt.s32.totalorder %s33, 0
    %s35 = scalar_select %p34, %s33, 0
    %s36 = smul.u32 8, %s35
  $region9: #{linear_discriminative_loss.1} parent=0 // pred_fallthru
    _
  %s37 = sadd.s32 0, 0
  %p38 = scmp.lt.s32.totalorder %s37, 0
  %s39 = scalar_select %p38, %s37, 0
  %s40 = smul.u32 8, %s39
  %p41 = scmp.lt.s32.totalorder %s40, 7
  %s42 = scalar_select %p41, %s40, 7
  %s43 = smul.addr %s42, 8
  %s44 = scalar_lea.vmem %s0, %s43
  %s45 = sadd.s32 0, 0
  %p46 = scmp.lt.s32.totalorder %s45, 0
  %s47 = scalar_select %p46, %s45, 0
  %s48 = smul.u32 8, %s47
  %p49 = scmp.lt.s32.totalorder %s48, 7
  %s50 = scalar_select %p49, %s48, 7
  %s51 = smul.addr %s50, 8
  %s52 = scalar_lea.vmem %s1, %s51
  %s53 = sadd.s32 0, 0
  %p54 = scmp.lt.s32.totalorder %s53, 0
  %s55 = scalar_select %p54, %s53, 0
  %s56 = smul.u32 8, %s55
  %p57 = scmp.lt.s32.totalorder %s56, 7
  %s58 = scalar_select %p57, %s56, 7
  %s59 = smul.addr %s58, 8
  %s60 = scalar_lea.vmem %s0, %s59
  %s61 = sadd.s32 0, 0
  %p62 = scmp.lt.s32.totalorder %s61, 0
  %s63 = scalar_select %p62, %s61, 0
  %s64 = smul.u32 8, %s63
  %s65 = sadd.s32 0, 0
  %p66 = scmp.lt.s32.totalorder %s65, 0
  %s67 = scalar_select %p66, %s65, 0
  %s68 = smul.u32 8, %s67
  %p69 = scmp.lt.s32.totalorder %s68, 7
  %s70 = scalar_select %p69, %s68, 7
  %s71 = smul.addr %s70, 8
  %s72 = scalar_lea.vmem %s1, %s71
  %s73 = sadd.s32 0, 0
  %p74 = scmp.lt.s32.totalorder %s73, 0
  %s75 = scalar_select %p74, %s73, 0
  %s76 = smul.u32 8, %s75
  %p77 = scmp.eq.s32.totalorder 0, 0
  // Predicated region
  $region10: #{linear_discriminative_loss.1} parent=0 // pred_check
    %p78 = pneg %p77
  $region11: #{linear_discriminative_loss.1} parent=0 // pred_check_branch
    %80 = sbr.rel (%p78) target = $region13
  $region12: #{linear_discriminative_loss.1} parent=0 // pred_region
    %81 = vst [vmem:[%s2] sm:$0xff] 0.0
    %82 = vst [vmem:[%s2 + $0x8] sm:$0xff] 0.0
    %83 = vst [vmem:[%s2 + $0x10] sm:$0xff] 0.0
    %84 = vst [vmem:[%s2 + $0x18] sm:$0xff] 0.0
    %85 = vst [vmem:[%s2 + $0x20] sm:$0xff] 0.0
    %vm86 = vcmask 24576
    %87 = vst.msk [vmem:[%s3] sm:$0x1] %vm86, 0.0
  $region13: #{linear_discriminative_loss.1} parent=0 // pred_fallthru
    _
  %s88 = sadd.s32 0, 0
  %s89 = smul.u32 %s88, 64
  %v90 = vlaneseq
  %v91 = vshrl.u32 %v90, 7
  %v92 = vadd.s32 %v91, 8
  %v93 = vadd.s32 %v91, 16
  %v94 = vadd.s32 %v91, 24
  %v95 = vadd.s32 %v91, 32
  %v96 = vadd.s32 %v91, 40
  %v97 = vadd.s32 %v91, 48
  %v98 = vadd.s32 %v91, 56
  %v99 = vstv %s89
  %v100 = vadd.s32 %v99, %v91
  %v101 = vadd.s32 %v99, %v92
  %v102 = vadd.s32 %v99, %v93
  %v103 = vadd.s32 %v99, %v94
  %v104 = vadd.s32 %v99, %v95
  %v105 = vadd.s32 %v99, %v96
  %v106 = vadd.s32 %v99, %v97
  %v107 = vadd.s32 %v99, %v98
  %vm108 = vcmp.lt.s32.totalorder %v100, 64
  %vm109 = vcmp.lt.s32.totalorder %v101, 64
  %vm110 = vcmp.lt.s32.totalorder %v102, 64
  %vm111 = vcmp.lt.s32.totalorder %v103, 64
  %vm112 = vcmp.lt.s32.totalorder %v104, 64
  %vm113 = vcmp.lt.s32.totalorder %v105, 64
  %vm114 = vcmp.lt.s32.totalorder %v106, 64
  %vm115 = vcmp.lt.s32.totalorder %v107, 64
  %v116 = vld [vmem:[%s60] sm:$0xff]
  %v117 = vld [vmem:[%s60 + $0x8] sm:$0xff]
  %v118 = vld [vmem:[%s60 + $0x10] sm:$0xff]
  %v119 = vld [vmem:[%s60 + $0x18] sm:$0xff]
  %v120 = vld [vmem:[%s60 + $0x20] sm:$0xff]
  %v121 = vld [vmem:[%s60 + $0x28] sm:$0xff]
  %v122 = vld [vmem:[%s60 + $0x30] sm:$0xff]
  %v123 = vld [vmem:[%s60 + $0x38] sm:$0xff]
  %v124 = vsel %vm108, 1, 0
  %v125 = vsel %vm109, 1, 0
  %v126 = vsel %vm110, 1, 0
  %v127 = vsel %vm111, 1, 0
  %v128 = vsel %vm112, 1, 0
  %v129 = vsel %vm113, 1, 0
  %v130 = vsel %vm114, 1, 0
  %v131 = vsel %vm115, 1, 0
  %vm132 = vcmp.eq.s32.totalorder %v124, 1
  %vm133 = vcmp.eq.s32.totalorder %v125, 1
  %vm134 = vcmp.eq.s32.totalorder %v126, 1
  %vm135 = vcmp.eq.s32.totalorder %v127, 1
  %vm136 = vcmp.eq.s32.totalorder %v128, 1
  %vm137 = vcmp.eq.s32.totalorder %v129, 1
  %vm138 = vcmp.eq.s32.totalorder %v130, 1
  %vm139 = vcmp.eq.s32.totalorder %v131, 1
  %v140 = vsel %vm132, %v116, 0.0
  %v141 = vsel %vm133, %v117, 0.0
  %v142 = vsel %vm134, %v118, 0.0
  %v143 = vsel %vm135, %v119, 0.0
  %v144 = vsel %vm136, %v120, 0.0
  %v145 = vsel %vm137, %v121, 0.0
  %v146 = vsel %vm138, %v122, 0.0
  %v147 = vsel %vm139, %v123, 0.0
  %v148 = vld [vmem:[%s72] sm:$0xff]
  %v149 = vld [vmem:[%s72 + $0x8] sm:$0xff]
  %v150 = vld [vmem:[%s72 + $0x10] sm:$0xff]
  %v151 = vld [vmem:[%s72 + $0x18] sm:$0xff]
  %v152 = vld [vmem:[%s72 + $0x20] sm:$0xff]
  %v153 = vld [vmem:[%s72 + $0x28] sm:$0xff]
  %v154 = vld [vmem:[%s72 + $0x30] sm:$0xff]
  %v155 = vld [vmem:[%s72 + $0x38] sm:$0xff]
  %v156 = vsel %vm108, %v148, 4294967295
  %v157 = vsel %vm109, %v149, 4294967295
  %v158 = vsel %vm110, %v150, 4294967295
  %v159 = vsel %vm111, %v151, 4294967295
  %v160 = vsel %vm112, %v152, 4294967295
  %v161 = vsel %vm113, %v153, 4294967295
  %v162 = vsel %vm114, %v154, 4294967295
  %v163 = vsel %vm115, %v155, 4294967295
  %v164 = vlaneseq
  %v165 = vand.u32 %v164, 127
  %v166 = vmul.u32 %v156, 32
  %v167 = vmul.u32 %v157, 32
  %v168 = vmul.u32 %v158, 32
  %v169 = vmul.u32 %v159, 32
  %v170 = vmul.u32 %v160, 32
  %v171 = vmul.u32 %v161, 32
  %v172 = vmul.u32 %v162, 32
  %v173 = vmul.u32 %v163, 32
  %174 = vset.pattern.permute.xlu0 0
  %175 = vperm.xlu0 %174, %v166
  %v176 = vpop.permute.xlu0 %175
  %177 = vset.pattern.permute.xlu0 0
  %178 = vperm.xlu0 %177, %v167
  %v179 = vpop.permute.xlu0 %178
  %180 = vset.pattern.permute.xlu0 0
  %181 = vperm.xlu0 %180, %v168
  %v182 = vpop.permute.xlu0 %181
  %183 = vset.pattern.permute.xlu0 0
  %184 = vperm.xlu0 %183, %v169
  %v185 = vpop.permute.xlu0 %184
  %186 = vset.pattern.permute.xlu0 0
  %187 = vperm.xlu0 %186, %v170
  %v188 = vpop.permute.xlu0 %187
  %189 = vset.pattern.permute.xlu0 0
  %190 = vperm.xlu0 %189, %v171
  %v191 = vpop.permute.xlu0 %190
  %192 = vset.pattern.permute.xlu0 0
  %193 = vperm.xlu0 %192, %v172
  %v194 = vpop.permute.xlu0 %193
  %195 = vset.pattern.permute.xlu0 0
  %196 = vperm.xlu0 %195, %v173
  %v197 = vpop.permute.xlu0 %196
  %vm198 = vcmp.ge.s32.totalorder %v165, %v176
  %vm199 = vcmp.ge.s32.totalorder %v165, %v179
  %vm200 = vcmp.ge.s32.totalorder %v165, %v182
  %vm201 = vcmp.ge.s32.totalorder %v165, %v185
  %vm202 = vcmp.ge.s32.totalorder %v165, %v188
  %vm203 = vcmp.ge.s32.totalorder %v165, %v191
  %vm204 = vcmp.ge.s32.totalorder %v165, %v194
  %vm205 = vcmp.ge.s32.totalorder %v165, %v197
  %v206 = vadd.s32 %v166, 32
  %v207 = vadd.s32 %v167, 32
  %v208 = vadd.s32 %v168, 32
  %v209 = vadd.s32 %v169, 32
  %v210 = vadd.s32 %v170, 32
  %v211 = vadd.s32 %v171, 32
  %v212 = vadd.s32 %v172, 32
  %v213 = vadd.s32 %v173, 32
  %214 = vset.pattern.permute.xlu0 0
  %215 = vperm.xlu0 %214, %v206
  %v216 = vpop.permute.xlu0 %215
  %217 = vset.pattern.permute.xlu0 0
  %218 = vperm.xlu0 %217, %v207
  %v219 = vpop.permute.xlu0 %218
  %220 = vset.pattern.permute.xlu0 0
  %221 = vperm.xlu0 %220, %v208
  %v222 = vpop.permute.xlu0 %221
  %223 = vset.pattern.permute.xlu0 0
  %224 = vperm.xlu0 %223, %v209
  %v225 = vpop.permute.xlu0 %224
  %226 = vset.pattern.permute.xlu0 0
  %227 = vperm.xlu0 %226, %v210
  %v228 = vpop.permute.xlu0 %227
  %229 = vset.pattern.permute.xlu0 0
  %230 = vperm.xlu0 %229, %v211
  %v231 = vpop.permute.xlu0 %230
  %232 = vset.pattern.permute.xlu0 0
  %233 = vperm.xlu0 %232, %v212
  %v234 = vpop.permute.xlu0 %233
  %235 = vset.pattern.permute.xlu0 0
  %236 = vperm.xlu0 %235, %v213
  %v237 = vpop.permute.xlu0 %236
  %vm238 = vcmp.lt.s32.totalorder %v165, %v216
  %vm239 = vcmp.lt.s32.totalorder %v165, %v219
  %vm240 = vcmp.lt.s32.totalorder %v165, %v222
  %vm241 = vcmp.lt.s32.totalorder %v165, %v225
  %vm242 = vcmp.lt.s32.totalorder %v165, %v228
  %vm243 = vcmp.lt.s32.totalorder %v165, %v231
  %vm244 = vcmp.lt.s32.totalorder %v165, %v234
  %vm245 = vcmp.lt.s32.totalorder %v165, %v237
  %vm246 = vmand %vm198, %vm238
  %vm247 = vmand %vm199, %vm239
  %vm248 = vmand %vm200, %vm240
  %vm249 = vmand %vm201, %vm241
  %vm250 = vmand %vm202, %vm242
  %vm251 = vmand %vm203, %vm243
  %vm252 = vmand %vm204, %vm244
  %vm253 = vmand %vm205, %vm245
  %262 = vrot.lane.b32.xlu0 %v140, 32
  %v263 = vpop.permute.xlu0 %262
  %264 = vrot.lane.b32.xlu0 %v141, 32
  %v265 = vpop.permute.xlu0 %264
  %266 = vrot.lane.b32.xlu0 %v142, 32
  %v267 = vpop.permute.xlu0 %266
  %268 = vrot.lane.b32.xlu0 %v143, 32
  %v269 = vpop.permute.xlu0 %268
  %270 = vrot.lane.b32.xlu0 %v144, 32
  %v271 = vpop.permute.xlu0 %270
  %272 = vrot.lane.b32.xlu0 %v145, 32
  %v273 = vpop.permute.xlu0 %272
  %274 = vrot.lane.b32.xlu0 %v146, 32
  %v275 = vpop.permute.xlu0 %274
  %276 = vrot.lane.b32.xlu0 %v147, 32
  %v277 = vpop.permute.xlu0 %276
  %286 = vrot.lane.b32.xlu0 %v140, 64
  %v287 = vpop.permute.xlu0 %286
  %288 = vrot.lane.b32.xlu0 %v141, 64
  %v289 = vpop.permute.xlu0 %288
  %290 = vrot.lane.b32.xlu0 %v142, 64
  %v291 = vpop.permute.xlu0 %290
  %292 = vrot.lane.b32.xlu0 %v143, 64
  %v293 = vpop.permute.xlu0 %292
  %294 = vrot.lane.b32.xlu0 %v144, 64
  %v295 = vpop.permute.xlu0 %294
  %296 = vrot.lane.b32.xlu0 %v145, 64
  %v297 = vpop.permute.xlu0 %296
  %298 = vrot.lane.b32.xlu0 %v146, 64
  %v299 = vpop.permute.xlu0 %298
  %300 = vrot.lane.b32.xlu0 %v147, 64
  %v301 = vpop.permute.xlu0 %300
  %310 = vrot.lane.b32.xlu0 %v140, 96
  %v311 = vpop.permute.xlu0 %310
  %312 = vrot.lane.b32.xlu0 %v141, 96
  %v313 = vpop.permute.xlu0 %312
  %314 = vrot.lane.b32.xlu0 %v142, 96
  %v315 = vpop.permute.xlu0 %314
  %316 = vrot.lane.b32.xlu0 %v143, 96
  %v317 = vpop.permute.xlu0 %316
  %318 = vrot.lane.b32.xlu0 %v144, 96
  %v319 = vpop.permute.xlu0 %318
  %320 = vrot.lane.b32.xlu0 %v145, 96
  %v321 = vpop.permute.xlu0 %320
  %322 = vrot.lane.b32.xlu0 %v146, 96
  %v323 = vpop.permute.xlu0 %322
  %324 = vrot.lane.b32.xlu0 %v147, 96
  %v325 = vpop.permute.xlu0 %324
  %vm334 = vcmask 261120
  %v335 = vsel %vm334, %v140, %v263
  %v336 = vsel %vm334, %v141, %v265
  %v337 = vsel %vm334, %v142, %v267
  %v338 = vsel %vm334, %v143, %v269
  %v339 = vsel %vm334, %v144, %v271
  %v340 = vsel %vm334, %v145, %v273
  %v341 = vsel %vm334, %v146, %v275
  %v342 = vsel %vm334, %v147, %v277
  %vm343 = vcmask 523264
  %v344 = vsel %vm343, %v335, %v287
  %v345 = vsel %vm343, %v336, %v289
  %v346 = vsel %vm343, %v337, %v291
  %v347 = vsel %vm343, %v338, %v293
  %v348 = vsel %vm343, %v339, %v295
  %v349 = vsel %vm343, %v340, %v297
  %v350 = vsel %vm343, %v341, %v299
  %v351 = vsel %vm343, %v342, %v301
  %vm352 = vcmask 785408
  %v353 = vsel %vm352, %v344, %v311
  %v354 = vsel %vm352, %v345, %v313
  %v355 = vsel %vm352, %v346, %v315
  %v356 = vsel %vm352, %v347, %v317
  %v357 = vsel %vm352, %v348, %v319
  %v358 = vsel %vm352, %v349, %v321
  %v359 = vsel %vm352, %v350, %v323
  %v360 = vsel %vm352, %v351, %v325
  %v361 = vsel %vm246, %v353, 0.0
  %v362 = vsel %vm247, %v354, 0.0
  %v363 = vsel %vm248, %v355, 0.0
  %v364 = vsel %vm249, %v356, 0.0
  %v365 = vsel %vm250, %v357, 0.0
  %v366 = vsel %vm251, %v358, 0.0
  %v367 = vsel %vm252, %v359, 0.0
  %v368 = vsel %vm253, %v360, 0.0
  %vm369 = vcmp.eq.s32.totalorder %v165, 0
  %vm370 = vmand %vm369, %vm132
  %vm371 = vmand %vm369, %vm133
  %vm372 = vmand %vm369, %vm134
  %vm373 = vmand %vm369, %vm135
  %vm374 = vmand %vm369, %vm136
  %vm375 = vmand %vm369, %vm137
  %vm376 = vmand %vm369, %vm138
  %vm377 = vmand %vm369, %vm139
  %v378 = vsel %vm370, 1.0, 0.0
  %v379 = vsel %vm371, 1.0, 0.0
  %v380 = vsel %vm372, 1.0, 0.0
  %v381 = vsel %vm373, 1.0, 0.0
  %v382 = vsel %vm374, 1.0, 0.0
  %v383 = vsel %vm375, 1.0, 0.0
  %v384 = vsel %vm376, 1.0, 0.0
  %v385 = vsel %vm377, 1.0, 0.0
  %394 = vrot.lane.b32.xlu0 %v378, 32
  %v395 = vpop.permute.xlu0 %394
  %396 = vrot.lane.b32.xlu0 %v379, 32
  %v397 = vpop.permute.xlu0 %396
  %398 = vrot.lane.b32.xlu0 %v380, 32
  %v399 = vpop.permute.xlu0 %398
  %400 = vrot.lane.b32.xlu0 %v381, 32
  %v401 = vpop.permute.xlu0 %400
  %402 = vrot.lane.b32.xlu0 %v382, 32
  %v403 = vpop.permute.xlu0 %402
  %404 = vrot.lane.b32.xlu0 %v383, 32
  %v405 = vpop.permute.xlu0 %404
  %406 = vrot.lane.b32.xlu0 %v384, 32
  %v407 = vpop.permute.xlu0 %406
  %408 = vrot.lane.b32.xlu0 %v385, 32
  %v409 = vpop.permute.xlu0 %408
  %v418 = vsel %vm334, %v140, %v395
  %v419 = vsel %vm334, %v141, %v397
  %v420 = vsel %vm334, %v142, %v399
  %v421 = vsel %vm334, %v143, %v401
  %v422 = vsel %vm334, %v144, %v403
  %v423 = vsel %vm334, %v145, %v405
  %v424 = vsel %vm334, %v146, %v407
  %v425 = vsel %vm334, %v147, %v409
  %v426 = vld [vmem:[%s2] sm:$0xff]
  %v427 = vld [vmem:[%s2 + $0x8] sm:$0xff]
  %v428 = vld [vmem:[%s2 + $0x10] sm:$0xff]
  %v429 = vld [vmem:[%s2 + $0x18] sm:$0xff]
  %v430 = vld [vmem:[%s2 + $0x20] sm:$0xff]
  %431 = vxpose.xlu0.b32.start [1/16] %v418, 128
  %432 = vxpose.xlu0.b32.cont [2/16] %v419, 128
  %433 = vxpose.xlu0.b32.cont [3/16] %v420, 128
  %434 = vxpose.xlu0.b32.cont [4/16] %v421, 128
  %435 = vxpose.xlu0.b32.cont [5/16] %v422, 128
  %436 = vxpose.xlu0.b32.cont [6/16] %v423, 128
  %437 = vxpose.xlu0.b32.cont [7/16] %v424, 128
  %438 = vxpose.xlu0.b32.cont [8/16] %v425, 128
  %439 = vxpose.xlu0.b32.cont [9/16] 0.0, 128
  %440 = vxpose.xlu0.b32.cont [10/16] 0.0, 128
  %441 = vxpose.xlu0.b32.cont [11/16] 0.0, 128
  %442 = vxpose.xlu0.b32.cont [12/16] 0.0, 128
  %443 = vxpose.xlu0.b32.cont [13/16] 0.0, 128
  %444 = vxpose.xlu0.b32.cont [14/16] 0.0, 128
  %445 = vxpose.xlu0.b32.cont [15/16] 0.0, 128
  %446 = vxpose.xlu0.b32.end [16/16] 0.0, 128
  %v447 = vpop.trf.xlu0
  %v448 = vpop.trf.xlu0
  %v449 = vpop.trf.xlu0
  %v450 = vpop.trf.xlu0
  %v451 = vpop.trf.xlu0
  %v452 = vpop.trf.xlu0
  %v453 = vpop.trf.xlu0
  %v454 = vpop.trf.xlu0
  %v455 = vpop.trf.xlu0
  %v456 = vpop.trf.xlu0
  %v457 = vpop.trf.xlu0
  %v458 = vpop.trf.xlu0
  %v459 = vpop.trf.xlu0
  %v460 = vpop.trf.xlu0
  %v461 = vpop.trf.xlu0
  %v462 = vpop.trf.xlu0
  %v464 = vsel %vm343, %v447, 0
  %v467 = vsel %vm343, %v448, 0
  %v470 = vsel %vm343, %v449, 0
  %v473 = vsel %vm343, %v450, 0
  %v476 = vsel %vm343, %v451, 0
  %478 = vmatpush.msra.mxu0 0.0
  %479 = vmatpush.msra.mxu0 0.0
  %480 = vmatpush.msra.mxu0 0.0
  %481 = vmatpush.msra.mxu0 0.0
  %482 = vmatpush.msra.mxu0 0.0
  %483 = vmatpush.msra.mxu0 0.0
  %484 = vmatpush.msra.mxu0 0.0
  %485 = vmatpush.msra.mxu0 0.0
  %486 = vmatpush.msra.mxu0 %v368
  %487 = vmatpush.msra.mxu0 %v367
  %488 = vmatpush.msra.mxu0 %v366
  %489 = vmatpush.msra.mxu0 %v365
  %490 = vmatpush.msra.mxu0 %v364
  %491 = vmatpush.msra.mxu0 %v363
  %492 = vmatpush.msra.mxu0 %v362
  %493 = vmatpush.msra.mxu0 %v361
  %494 = vmatmul.f32.gmra.mxu0 %v464
  %v495 = vpop.f32.mrf.mxu0
  %v496 = vadd.f32 0.0, %v495
  %497 = vmatmul.f32.gmra.mxu0 %v467
  %v498 = vpop.f32.mrf.mxu0
  %v499 = vadd.f32 0.0, %v498
  %500 = vmatmul.f32.gmra.mxu0 %v470
  %v501 = vpop.f32.mrf.mxu0
  %v502 = vadd.f32 0.0, %v501
  %503 = vmatmul.f32.gmra.mxu0 %v473
  %v504 = vpop.f32.mrf.mxu0
  %v505 = vadd.f32 0.0, %v504
  %506 = vmatmul.f32.gmra.mxu0 %v476
  %v507 = vpop.f32.mrf.mxu0
  %v508 = vadd.f32 0.0, %v507
  %509 = vdwg.mxu0
  %v510 = vadd.f32 %v426, %v496
  %v511 = vadd.f32 %v427, %v499
  %v512 = vadd.f32 %v428, %v502
  %v513 = vadd.f32 %v429, %v505
  %v514 = vadd.f32 %v430, %v508
  %515 = vst [vmem:[%s2] sm:$0xff] %v510
  %516 = vst [vmem:[%s2 + $0x8] sm:$0xff] %v511
  %517 = vst [vmem:[%s2 + $0x10] sm:$0xff] %v512
  %518 = vst [vmem:[%s2 + $0x18] sm:$0xff] %v513
  %519 = vst [vmem:[%s2 + $0x20] sm:$0xff] %v514
  %v520 = vld [vmem:[%s3] sm:$0x1]
  %521 = vset.pattern.permute.xlu0 0
  %522 = vperm.xlu0 %521, %v156
  %v523 = vpop.permute.xlu0 %522
  %524 = vset.pattern.permute.xlu0 0
  %525 = vperm.xlu0 %524, %v157
  %v526 = vpop.permute.xlu0 %525
  %527 = vset.pattern.permute.xlu0 0
  %528 = vperm.xlu0 %527, %v158
  %v529 = vpop.permute.xlu0 %528
  %530 = vset.pattern.permute.xlu0 0
  %531 = vperm.xlu0 %530, %v159
  %v532 = vpop.permute.xlu0 %531
  %533 = vset.pattern.permute.xlu0 0
  %534 = vperm.xlu0 %533, %v160
  %v535 = vpop.permute.xlu0 %534
  %536 = vset.pattern.permute.xlu0 0
  %537 = vperm.xlu0 %536, %v161
  %v538 = vpop.permute.xlu0 %537
  %539 = vset.pattern.permute.xlu0 0
  %540 = vperm.xlu0 %539, %v162
  %v541 = vpop.permute.xlu0 %540
  %542 = vset.pattern.permute.xlu0 0
  %543 = vperm.xlu0 %542, %v163
  %v544 = vpop.permute.xlu0 %543
  %vm545 = vcmp.eq.s32.totalorder %v165, %v523
  %vm546 = vcmp.eq.s32.totalorder %v165, %v526
  %vm547 = vcmp.eq.s32.totalorder %v165, %v529
  %vm548 = vcmp.eq.s32.totalorder %v165, %v532
  %vm549 = vcmp.eq.s32.totalorder %v165, %v535
  %vm550 = vcmp.eq.s32.totalorder %v165, %v538
  %vm551 = vcmp.eq.s32.totalorder %v165, %v541
  %vm552 = vcmp.eq.s32.totalorder %v165, %v544
  %v553 = vsel %vm545, 1, 0
  %v554 = vsel %vm546, 1, 0
  %v555 = vsel %vm547, 1, 0
  %v556 = vsel %vm548, 1, 0
  %v557 = vsel %vm549, 1, 0
  %v558 = vsel %vm550, 1, 0
  %v559 = vsel %vm551, 1, 0
  %v560 = vsel %vm552, 1, 0
  %v561 = vcvt.s32.f32 %v553
  %v562 = vcvt.s32.f32 %v554
  %v563 = vcvt.s32.f32 %v555
  %v564 = vcvt.s32.f32 %v556
  %v565 = vcvt.s32.f32 %v557
  %v566 = vcvt.s32.f32 %v558
  %v567 = vcvt.s32.f32 %v559
  %v568 = vcvt.s32.f32 %v560
  %vm569 = vcmask 31744
  %v570 = vsel %vm569, %v561, 0.0
  %v571 = vsel %vm569, %v562, 0.0
  %v572 = vadd.f32 %v570, %v571
  %v573 = vsel %vm569, %v563, 0.0
  %v574 = vadd.f32 %v572, %v573
  %v575 = vsel %vm569, %v564, 0.0
  %v576 = vadd.f32 %v574, %v575
  %v577 = vsel %vm569, %v565, 0.0
  %v578 = vadd.f32 %v576, %v577
  %v579 = vsel %vm569, %v566, 0.0
  %v580 = vadd.f32 %v578, %v579
  %v581 = vsel %vm569, %v567, 0.0
  %v582 = vadd.f32 %v580, %v581
  %v583 = vsel %vm569, %v568, 0.0
  %v584 = vadd.f32 %v582, %v583
  %v585 = vrot.slane %v584, 4
  %v586 = vadd.f32 %v584, %v585
  %v587 = vrot.slane %v586, 2
  %v588 = vadd.f32 %v586, %v587
  %v589 = vrot.slane %v588, 1
  %v590 = vadd.f32 %v588, %v589
  %v591 = vadd.f32 %v520, %v590
  %vm592 = vcmask 24576
  %593 = vst.msk [vmem:[%s3] sm:$0x1] %vm592, %v591
  // Predicated region
  $region14: #{linear_discriminative_loss.1} parent=0 // pred_check
    _
  $region15: #{linear_discriminative_loss.1} parent=0 // pred_check_branch
    %595 = sbr.rel (0) target = $region17
  $region16: #{linear_discriminative_loss.1} parent=0 // pred_region
    _
  $region17: #{linear_discriminative_loss.1} parent=0 // pred_fallthru
    _
  // Predicated region
  $region18: #{linear_discriminative_loss.1} parent=0 // pred_check
    _
  $region19: #{linear_discriminative_loss.1} parent=0 // pred_check_branch
    %597 = sbr.rel (0) target = $region21
  $region20: #{linear_discriminative_loss.1} parent=0 // pred_region
    _
  $region21: #{linear_discriminative_loss.1} parent=0 // pred_fallthru
    _
  // Predicated region
  $region22: #{linear_discriminative_loss.1} parent=0 // pred_check
    _
  $region23: #{linear_discriminative_loss.1} parent=0 // pred_check_branch
    %599 = sbr.rel (0) target = $region25
  $region24: #{linear_discriminative_loss.1} parent=0 // pred_region
    _
  $region25: #{linear_discriminative_loss.1} parent=0 // pred_fallthru
    _
  // Predicated region
  $region26: #{linear_discriminative_loss.1} parent=0 // pred_check
    _
  $region27: #{linear_discriminative_loss.1} parent=0 // pred_check_branch
    %601 = sbr.rel (0) target = $region29
  $region28: #{linear_discriminative_loss.1} parent=0 // pred_region
    _
  $region29: #{linear_discriminative_loss.1} parent=0 // pred_fallthru
    _

// kernel: custom-call.8
$region0: #{custom-call.8}
  %s0 = inlined_call_operand.vmem [shape: f32[16,16], index: 0, kind: input, shape index: {}]
  %s1 = inlined_call_operand.vmem [shape: f32[16,16], index: 1, kind: input, shape index: {}]
  %s2 = inlined_call_operand.vmem [shape: f32[16,16], index: 2, kind: input, shape index: {}]
  %s3 = inlined_call_operand.vmem [shape: f32[16,16], index: 3, kind: input, shape index: {}]
  %s4 = inlined_call_operand.vmem [shape: f32[16], index: 4, kind: output, shape index: {0}]
  %s5 = inlined_call_operand.vmem [shape: f32[16], index: 5, kind: output, shape index: {1}]
  %s6 = inlined_call_operand.hbm [shape: f32[16,16], index: 6, kind: output, shape index: {2}]
  %s7 = inlined_call_operand.hbm [shape: f32[16,16], index: 7, kind: output, shape index: {3}]
  %s8 = inlined_call_operand.hbm [shape: f32[16,16], index: 8, kind: output, shape index: {4}]
  %s9 = inlined_call_operand.hbm [shape: f32[16,16], index: 9, kind: output, shape index: {5}]
  %10 = xla_tuple %s4, %s5, %s6, %s7, %s8, %s9
  $region1: #{custom-call.8} parent=0
    #allocation0 [shape = 'u8[8192]{0}', space=vmem, size = 0x2000, scoped, tag = 'operand span for operand 0']
    #allocation1 [shape = 'u8[8192]{0}', space=vmem, size = 0x2000, scoped, tag = 'operand span for operand 1']
    #allocation2 [shape = 'u8[8192]{0}', space=vmem, size = 0x2000, scoped, tag = 'operand span for operand 2']
    #allocation3 [shape = 'u8[8192]{0}', space=vmem, size = 0x2000, scoped, tag = 'operand span for operand 3']
    #allocation4 [shape = 'u8[4096]{0}', space=vmem, size = 0x1000, scoped, tag = 'operand span for operand 4']
    #allocation5 [shape = 'u8[512]{0}', space=vmem, size = 0x400, scoped, tag = 'packed  for operand 4']
    #allocation6 [shape = 'u8[4096]{0}', space=vmem, size = 0x1000, scoped, tag = 'operand span for operand 5']
    #allocation7 [shape = 'u8[512]{0}', space=vmem, size = 0x400, scoped, tag = 'packed  for operand 5']
    #allocation8 [shape = 'u8[8192]{0}', space=vmem, size = 0x2000, scoped, tag = 'operand span for operand 6']
    #allocation9 [shape = 's32[1]{0}', space=sflag, size = 0x4, scoped, tag = 'scoped memory for custom-call.8']
    #allocation10 [shape = 'u8[8192]{0}', space=vmem, size = 0x2000, scoped, tag = 'operand span for operand 7']
    #allocation11 [shape = 's32[1]{0}', space=sflag, size = 0x4, scoped, tag = 'scoped memory for custom-call.8']
    #allocation12 [shape = 'u8[8192]{0}', space=vmem, size = 0x2000, scoped, tag = 'operand span for operand 8']
    #allocation13 [shape = 'u8[8192]{0}', space=vmem, size = 0x2000, scoped, tag = 'operand span for operand 9']
    #allocation14 [shape = 's32[1]{0}', space=sflag, size = 0x4, scoped, tag = 'scoped memory for custom-call.8']
    #allocation15 [shape = 'f32[16,16]{1,0}', space=vmem, size = 0x2000, scoped, tag = 'a top-left matrix']
    #allocation16 [shape = 'f32[16,16]{1,0}', space=vmem, size = 0x2000, scoped, tag = 'a top-right matrix']
    #allocation17 [shape = 'f32[16,16]{1,0}', space=vmem, size = 0x2000, scoped, tag = 'a bottom-left matrix']
    #allocation18 [shape = 'f32[16,16]{1,0}', space=vmem, size = 0x2000, scoped, tag = 'a bottom-right matrix']
    %11 = vsyncpa [#allocation9], 0
    %12 = vsyncpa [#allocation11], 0
    %13 = vsyncpa [#allocation14], 0
    // Predicated region
    $region2: #{custom-call.8} parent=1 // pred_check
      _
    $region3: #{custom-call.8} parent=1 // pred_check_branch
      %15 = sbr.rel (0) target = $region5
    $region4: #{custom-call.8} parent=1 // pred_region
      %p17 = scmp.gt.s32.totalorder 2, 0
      // Predicated region
      $region6: #{custom-call.8} parent=4 // pred_check
        %p18 = pneg %p17
      $region7: #{custom-call.8} parent=4 // pred_check_branch
        %20 = sbr.rel (%p18) target = $region9
      $region8: #{custom-call.8} parent=4 // pred_region
        %s21 = ssub.s32 2, 1
        %s22 = smul.u32 %s21, 8
        %s23 = scalar_lea.vmem %s0, %s22
        %v24 = vld [vmem:[%s0] sm:$0xff]
        // While loop
        $region10: #{custom-call.8} parent=8 // loop_pre_header
          _
        $region11: #{custom-call.8} parent=8 // loop_header
          %s25 = sphi %s0, %s47
          %s26 = sphi [#allocation0], %s48
          %v27 = vphi %v24, %v49
          %s28 = ssub.s32 %s23, 64
          %p29 = scmp.gt.s32.totalorder %s25, %s28
        $region12: #{custom-call.8} parent=8 // loop_header_branch
          %31 = sbr.rel (%p29) target = $region16
        $region13: #{custom-call.8} parent=8 // loop_body
          %32 = vst [vmem:[%s26] sm:$0xff] %v27
          %v33 = vld [vmem:[%s25 + $0x8] sm:$0xff]
          %34 = vst [vmem:[%s26 + $0x8] sm:$0xff] %v33
          %v35 = vld [vmem:[%s25 + $0x10] sm:$0xff]
          %36 = vst [vmem:[%s26 + $0x10] sm:$0xff] %v35
          %v37 = vld [vmem:[%s25 + $0x18] sm:$0xff]
          %38 = vst [vmem:[%s26 + $0x18] sm:$0xff] %v37
          %v39 = vld [vmem:[%s25 + $0x20] sm:$0xff]
          %40 = vst [vmem:[%s26 + $0x20] sm:$0xff] %v39
          %v41 = vld [vmem:[%s25 + $0x28] sm:$0xff]
          %42 = vst [vmem:[%s26 + $0x28] sm:$0xff] %v41
          %v43 = vld [vmem:[%s25 + $0x30] sm:$0xff]
          %44 = vst [vmem:[%s26 + $0x30] sm:$0xff] %v43
          %v45 = vld [vmem:[%s25 + $0x38] sm:$0xff]
          %46 = vst [vmem:[%s26 + $0x38] sm:$0xff] %v45
        $region14: #{custom-call.8} parent=8 // loop_footer
          %s47 = scalar_lea.vmem %s25, 64
          %s48 = scalar_lea.vmem %s26, 64
          %v49 = vld [vmem:[%s25 + $0x40] sm:$0xff]
        $region15: #{custom-call.8} parent=8 // loop_footer_branch
          %50 = sbr.rel target = $region11
        $region16: #{custom-call.8} parent=8 // loop_exit
          _
        // While loop
        $region17: #{custom-call.8} parent=8 // loop_pre_header
          _
        $region18: #{custom-call.8} parent=8 // loop_header
          %s51 = sphi %s25, %s59
          %s52 = sphi %s26, %s60
          %v53 = vphi %v27, %v53
          %p54 = scmp.gt.s32.totalorder %s51, %s23
        $region19: #{custom-call.8} parent=8 // loop_header_branch
          %56 = sbr.rel (%p54) target = $region23
        $region20: #{custom-call.8} parent=8 // loop_body
          %v57 = vld [vmem:[%s51] sm:$0xff]
          %58 = vst [vmem:[%s52] sm:$0xff] %v57
        $region21: #{custom-call.8} parent=8 // loop_footer
          %s59 = scalar_lea.vmem %s51, 8
          %s60 = scalar_lea.vmem %s52, 8
        $region22: #{custom-call.8} parent=8 // loop_footer_branch
          %61 = sbr.rel target = $region18
        $region23: #{custom-call.8} parent=8 // loop_exit
          _
      $region9: #{custom-call.8} parent=4 // pred_fallthru
        _
      %s63 = ssub.s32 1, 1
      %s64 = smul.u32 2, 8
      %s65 = scalar_lea.vmem [#allocation0], %s64
      %s66 = smul.u32 2, 8
      %s67 = scalar_lea.vmem %s0, %s66
      %v68 = vld [vmem:[%s67] sm:%s63]
      %69 = vst [vmem:[%s65] sm:%s63] %v68
    $region5: #{custom-call.8} parent=1 // pred_fallthru
      _
    // Predicated region
    $region24: #{custom-call.8} parent=1 // pred_check
      _
    $region25: #{custom-call.8} parent=1 // pred_check_branch
      %71 = sbr.rel (0) target = $region27
    $region26: #{custom-call.8} parent=1 // pred_region
      %p73 = scmp.gt.s32.totalorder 2, 0
      // Predicated region
      $region28: #{custom-call.8} parent=26 // pred_check
        %p74 = pneg %p73
      $region29: #{custom-call.8} parent=26 // pred_check_branch
        %76 = sbr.rel (%p74) target = $region31
      $region30: #{custom-call.8} parent=26 // pred_region
        %s77 = ssub.s32 2, 1
        %s78 = smul.u32 %s77, 8
        %s79 = scalar_lea.vmem %s1, %s78
        %v80 = vld [vmem:[%s1] sm:$0xff]
        // While loop
        $region32: #{custom-call.8} parent=30 // loop_pre_header
          _
        $region33: #{custom-call.8} parent=30 // loop_header
          %s81 = sphi %s1, %s103
          %s82 = sphi [#allocation1], %s104
          %v83 = vphi %v80, %v105
          %s84 = ssub.s32 %s79, 64
          %p85 = scmp.gt.s32.totalorder %s81, %s84
        $region34: #{custom-call.8} parent=30 // loop_header_branch
          %87 = sbr.rel (%p85) target = $region38
        $region35: #{custom-call.8} parent=30 // loop_body
          %88 = vst [vmem:[%s82] sm:$0xff] %v83
          %v89 = vld [vmem:[%s81 + $0x8] sm:$0xff]
          %90 = vst [vmem:[%s82 + $0x8] sm:$0xff] %v89
          %v91 = vld [vmem:[%s81 + $0x10] sm:$0xff]
          %92 = vst [vmem:[%s82 + $0x10] sm:$0xff] %v91
          %v93 = vld [vmem:[%s81 + $0x18] sm:$0xff]
          %94 = vst [vmem:[%s82 + $0x18] sm:$0xff] %v93
          %v95 = vld [vmem:[%s81 + $0x20] sm:$0xff]
          %96 = vst [vmem:[%s82 + $0x20] sm:$0xff] %v95
          %v97 = vld [vmem:[%s81 + $0x28] sm:$0xff]
          %98 = vst [vmem:[%s82 + $0x28] sm:$0xff] %v97
          %v99 = vld [vmem:[%s81 + $0x30] sm:$0xff]
          %100 = vst [vmem:[%s82 + $0x30] sm:$0xff] %v99
          %v101 = vld [vmem:[%s81 + $0x38] sm:$0xff]
          %102 = vst [vmem:[%s82 + $0x38] sm:$0xff] %v101
        $region36: #{custom-call.8} parent=30 // loop_footer
          %s103 = scalar_lea.vmem %s81, 64
          %s104 = scalar_lea.vmem %s82, 64
          %v105 = vld [vmem:[%s81 + $0x40] sm:$0xff]
        $region37: #{custom-call.8} parent=30 // loop_footer_branch
          %106 = sbr.rel target = $region33
        $region38: #{custom-call.8} parent=30 // loop_exit
          _
        // While loop
        $region39: #{custom-call.8} parent=30 // loop_pre_header
          _
        $region40: #{custom-call.8} parent=30 // loop_header
          %s107 = sphi %s81, %s115
          %s108 = sphi %s82, %s116
          %v109 = vphi %v83, %v109
          %p110 = scmp.gt.s32.totalorder %s107, %s79
        $region41: #{custom-call.8} parent=30 // loop_header_branch
          %112 = sbr.rel (%p110) target = $region45
        $region42: #{custom-call.8} parent=30 // loop_body
          %v113 = vld [vmem:[%s107] sm:$0xff]
          %114 = vst [vmem:[%s108] sm:$0xff] %v113
        $region43: #{custom-call.8} parent=30 // loop_footer
          %s115 = scalar_lea.vmem %s107, 8
          %s116 = scalar_lea.vmem %s108, 8
        $region44: #{custom-call.8} parent=30 // loop_footer_branch
          %117 = sbr.rel target = $region40
        $region45: #{custom-call.8} parent=30 // loop_exit
          _
      $region31: #{custom-call.8} parent=26 // pred_fallthru
        _
      %s119 = ssub.s32 1, 1
      %s120 = smul.u32 2, 8
      %s121 = scalar_lea.vmem [#allocation1], %s120
      %s122 = smul.u32 2, 8
      %s123 = scalar_lea.vmem %s1, %s122
      %v124 = vld [vmem:[%s123] sm:%s119]
      %125 = vst [vmem:[%s121] sm:%s119] %v124
    $region27: #{custom-call.8} parent=1 // pred_fallthru
      _
    // Predicated region
    $region46: #{custom-call.8} parent=1 // pred_check
      _
    $region47: #{custom-call.8} parent=1 // pred_check_branch
      %127 = sbr.rel (0) target = $region49
    $region48: #{custom-call.8} parent=1 // pred_region
      %p129 = scmp.gt.s32.totalorder 2, 0
      // Predicated region
      $region50: #{custom-call.8} parent=48 // pred_check
        %p130 = pneg %p129
      $region51: #{custom-call.8} parent=48 // pred_check_branch
        %132 = sbr.rel (%p130) target = $region53
      $region52: #{custom-call.8} parent=48 // pred_region
        %s133 = ssub.s32 2, 1
        %s134 = smul.u32 %s133, 8
        %s135 = scalar_lea.vmem %s2, %s134
        %v136 = vld [vmem:[%s2] sm:$0xff]
        // While loop
        $region54: #{custom-call.8} parent=52 // loop_pre_header
          _
        $region55: #{custom-call.8} parent=52 // loop_header
          %s137 = sphi %s2, %s159
          %s138 = sphi [#allocation2], %s160
          %v139 = vphi %v136, %v161
          %s140 = ssub.s32 %s135, 64
          %p141 = scmp.gt.s32.totalorder %s137, %s140
        $region56: #{custom-call.8} parent=52 // loop_header_branch
          %143 = sbr.rel (%p141) target = $region60
        $region57: #{custom-call.8} parent=52 // loop_body
          %144 = vst [vmem:[%s138] sm:$0xff] %v139
          %v145 = vld [vmem:[%s137 + $0x8] sm:$0xff]
          %146 = vst [vmem:[%s138 + $0x8] sm:$0xff] %v145
          %v147 = vld [vmem:[%s137 + $0x10] sm:$0xff]
          %148 = vst [vmem:[%s138 + $0x10] sm:$0xff] %v147
          %v149 = vld [vmem:[%s137 + $0x18] sm:$0xff]
          %150 = vst [vmem:[%s138 + $0x18] sm:$0xff] %v149
          %v151 = vld [vmem:[%s137 + $0x20] sm:$0xff]
          %152 = vst [vmem:[%s138 + $0x20] sm:$0xff] %v151
          %v153 = vld [vmem:[%s137 + $0x28] sm:$0xff]
          %154 = vst [vmem:[%s138 + $0x28] sm:$0xff] %v153
          %v155 = vld [vmem:[%s137 + $0x30] sm:$0xff]
          %156 = vst [vmem:[%s138 + $0x30] sm:$0xff] %v155
          %v157 = vld [vmem:[%s137 + $0x38] sm:$0xff]
          %158 = vst [vmem:[%s138 + $0x38] sm:$0xff] %v157
        $region58: #{custom-call.8} parent=52 // loop_footer
          %s159 = scalar_lea.vmem %s137, 64
          %s160 = scalar_lea.vmem %s138, 64
          %v161 = vld [vmem:[%s137 + $0x40] sm:$0xff]
        $region59: #{custom-call.8} parent=52 // loop_footer_branch
          %162 = sbr.rel target = $region55
        $region60: #{custom-call.8} parent=52 // loop_exit
          _
        // While loop
        $region61: #{custom-call.8} parent=52 // loop_pre_header
          _
        $region62: #{custom-call.8} parent=52 // loop_header
          %s163 = sphi %s137, %s171
          %s164 = sphi %s138, %s172
          %v165 = vphi %v139, %v165
          %p166 = scmp.gt.s32.totalorder %s163, %s135
        $region63: #{custom-call.8} parent=52 // loop_header_branch
          %168 = sbr.rel (%p166) target = $region67
        $region64: #{custom-call.8} parent=52 // loop_body
          %v169 = vld [vmem:[%s163] sm:$0xff]
          %170 = vst [vmem:[%s164] sm:$0xff] %v169
        $region65: #{custom-call.8} parent=52 // loop_footer
          %s171 = scalar_lea.vmem %s163, 8
          %s172 = scalar_lea.vmem %s164, 8
        $region66: #{custom-call.8} parent=52 // loop_footer_branch
          %173 = sbr.rel target = $region62
        $region67: #{custom-call.8} parent=52 // loop_exit
          _
      $region53: #{custom-call.8} parent=48 // pred_fallthru
        _
      %s175 = ssub.s32 1, 1
      %s176 = smul.u32 2, 8
      %s177 = scalar_lea.vmem [#allocation2], %s176
      %s178 = smul.u32 2, 8
      %s179 = scalar_lea.vmem %s2, %s178
      %v180 = vld [vmem:[%s179] sm:%s175]
      %181 = vst [vmem:[%s177] sm:%s175] %v180
    $region49: #{custom-call.8} parent=1 // pred_fallthru
      _
    // Predicated region
    $region68: #{custom-call.8} parent=1 // pred_check
      _
    $region69: #{custom-call.8} parent=1 // pred_check_branch
      %183 = sbr.rel (0) target = $region71
    $region70: #{custom-call.8} parent=1 // pred_region
      %p185 = scmp.gt.s32.totalorder 2, 0
      // Predicated region
      $region72: #{custom-call.8} parent=70 // pred_check
        %p186 = pneg %p185
      $region73: #{custom-call.8} parent=70 // pred_check_branch
        %188 = sbr.rel (%p186) target = $region75
      $region74: #{custom-call.8} parent=70 // pred_region
        %s189 = ssub.s32 2, 1
        %s190 = smul.u32 %s189, 8
        %s191 = scalar_lea.vmem %s3, %s190
        %v192 = vld [vmem:[%s3] sm:$0xff]
        // While loop
        $region76: #{custom-call.8} parent=74 // loop_pre_header
          _
        $region77: #{custom-call.8} parent=74 // loop_header
          %s193 = sphi %s3, %s215
          %s194 = sphi [#allocation3], %s216
          %v195 = vphi %v192, %v217
          %s196 = ssub.s32 %s191, 64
          %p197 = scmp.gt.s32.totalorder %s193, %s196
        $region78: #{custom-call.8} parent=74 // loop_header_branch
          %199 = sbr.rel (%p197) target = $region82
        $region79: #{custom-call.8} parent=74 // loop_body
          %200 = vst [vmem:[%s194] sm:$0xff] %v195
          %v201 = vld [vmem:[%s193 + $0x8] sm:$0xff]
          %202 = vst [vmem:[%s194 + $0x8] sm:$0xff] %v201
          %v203 = vld [vmem:[%s193 + $0x10] sm:$0xff]
          %204 = vst [vmem:[%s194 + $0x10] sm:$0xff] %v203
          %v205 = vld [vmem:[%s193 + $0x18] sm:$0xff]
          %206 = vst [vmem:[%s194 + $0x18] sm:$0xff] %v205
          %v207 = vld [vmem:[%s193 + $0x20] sm:$0xff]
          %208 = vst [vmem:[%s194 + $0x20] sm:$0xff] %v207
          %v209 = vld [vmem:[%s193 + $0x28] sm:$0xff]
          %210 = vst [vmem:[%s194 + $0x28] sm:$0xff] %v209
          %v211 = vld [vmem:[%s193 + $0x30] sm:$0xff]
          %212 = vst [vmem:[%s194 + $0x30] sm:$0xff] %v211
          %v213 = vld [vmem:[%s193 + $0x38] sm:$0xff]
          %214 = vst [vmem:[%s194 + $0x38] sm:$0xff] %v213
        $region80: #{custom-call.8} parent=74 // loop_footer
          %s215 = scalar_lea.vmem %s193, 64
          %s216 = scalar_lea.vmem %s194, 64
          %v217 = vld [vmem:[%s193 + $0x40] sm:$0xff]
        $region81: #{custom-call.8} parent=74 // loop_footer_branch
          %218 = sbr.rel target = $region77
        $region82: #{custom-call.8} parent=74 // loop_exit
          _
        // While loop
        $region83: #{custom-call.8} parent=74 // loop_pre_header
          _
        $region84: #{custom-call.8} parent=74 // loop_header
          %s219 = sphi %s193, %s227
          %s220 = sphi %s194, %s228
          %v221 = vphi %v195, %v221
          %p222 = scmp.gt.s32.totalorder %s219, %s191
        $region85: #{custom-call.8} parent=74 // loop_header_branch
          %224 = sbr.rel (%p222) target = $region89
        $region86: #{custom-call.8} parent=74 // loop_body
          %v225 = vld [vmem:[%s219] sm:$0xff]
          %226 = vst [vmem:[%s220] sm:$0xff] %v225
        $region87: #{custom-call.8} parent=74 // loop_footer
          %s227 = scalar_lea.vmem %s219, 8
          %s228 = scalar_lea.vmem %s220, 8
        $region88: #{custom-call.8} parent=74 // loop_footer_branch
          %229 = sbr.rel target = $region84
        $region89: #{custom-call.8} parent=74 // loop_exit
          _
      $region75: #{custom-call.8} parent=70 // pred_fallthru
        _
      %s231 = ssub.s32 1, 1
      %s232 = smul.u32 2, 8
      %s233 = scalar_lea.vmem [#allocation3], %s232
      %s234 = smul.u32 2, 8
      %s235 = scalar_lea.vmem %s3, %s234
      %v236 = vld [vmem:[%s235] sm:%s231]
      %237 = vst [vmem:[%s233] sm:%s231] %v236
    $region71: #{custom-call.8} parent=1 // pred_fallthru
      _
    %s238 = smov [#allocation15]
    %v239 = vld [vmem:[#allocation0] sm:$0xff]
    %240 = vst [vmem:[%s238] sm:$0xff] %v239
    %s241 = scalar_lea.vmem %s238, 8
    %s242 = scalar_lea.vmem [#allocation0], 8
    %v243 = vld [vmem:[%s242] sm:$0xff]
    %244 = vst [vmem:[%s241] sm:$0xff] %v243
    %s245 = smov [#allocation16]
    %v246 = vld [vmem:[#allocation1] sm:$0xff]
    %247 = vst [vmem:[%s245] sm:$0xff] %v246
    %s248 = scalar_lea.vmem %s245, 8
    %s249 = scalar_lea.vmem [#allocation1], 8
    %v250 = vld [vmem:[%s249] sm:$0xff]
    %251 = vst [vmem:[%s248] sm:$0xff] %v250
    %s252 = smov [#allocation17]
    %v253 = vld [vmem:[#allocation2] sm:$0xff]
    %254 = vst [vmem:[%s252] sm:$0xff] %v253
    %s255 = scalar_lea.vmem %s252, 8
    %s256 = scalar_lea.vmem [#allocation2], 8
    %v257 = vld [vmem:[%s256] sm:$0xff]
    %258 = vst [vmem:[%s255] sm:$0xff] %v257
    %s259 = smov [#allocation18]
    %v260 = vld [vmem:[#allocation3] sm:$0xff]
    %261 = vst [vmem:[%s259] sm:$0xff] %v260
    %s262 = scalar_lea.vmem %s259, 8
    %s263 = scalar_lea.vmem [#allocation3], 8
    %v264 = vld [vmem:[%s263] sm:$0xff]
    %265 = vst [vmem:[%s262] sm:$0xff] %v264
    %266 = vst [vmem:[#allocation8] sm:$0xff] 0.0
    %s267 = scalar_lea.vmem [#allocation8], 8
    %268 = vst [vmem:[%s267] sm:$0xff] 0.0
    %269 = vst [vmem:[#allocation10] sm:$0xff] 0.0
    %s270 = scalar_lea.vmem [#allocation10], 8
    %271 = vst [vmem:[%s270] sm:$0xff] 0.0
    %272 = vst [vmem:[#allocation12] sm:$0xff] 0.0
    %s273 = scalar_lea.vmem [#allocation12], 8
    %274 = vst [vmem:[%s273] sm:$0xff] 0.0
    %275 = vst [vmem:[#allocation13] sm:$0xff] 0.0
    %s276 = scalar_lea.vmem [#allocation13], 8
    %277 = vst [vmem:[%s276] sm:$0xff] 0.0
    %s278 = smov [#allocation8]
    %v279 = vlaneseq
    %v280 = vand.u32 %v279, 127
    %v281 = vmov %v280
    %v282 = vlaneseq
    %v283 = vshrl.u32 %v282, 7
    %v284 = vmov %v283
    %v285 = vld [vmem:[%s278] sm:$0xff]
    %vm288 = vcmp.eq.s32.totalorder %v284, %v281
    %v289 = vsel %vm288, 1.0, %v285
    %290 = vst [vmem:[%s278] sm:$0xff] %v289
    %s291 = scalar_lea.vmem %s278, 8
    %v292 = vld [vmem:[%s291] sm:$0xff]
    %v294 = vadd.s32 %v284, 8
    %vm295 = vcmp.eq.s32.totalorder %v294, %v281
    %v296 = vsel %vm295, 1.0, %v292
    %297 = vst [vmem:[%s291] sm:$0xff] %v296
    %s298 = smov [#allocation13]
    %v299 = vlaneseq
    %v300 = vand.u32 %v299, 127
    %v301 = vmov %v300
    %v302 = vlaneseq
    %v303 = vshrl.u32 %v302, 7
    %v304 = vmov %v303
    %v305 = vld [vmem:[%s298] sm:$0xff]
    %vm308 = vcmp.eq.s32.totalorder %v304, %v301
    %v309 = vsel %vm308, 1.0, %v305
    %310 = vst [vmem:[%s298] sm:$0xff] %v309
    %s311 = scalar_lea.vmem %s298, 8
    %v312 = vld [vmem:[%s311] sm:$0xff]
    %v314 = vadd.s32 %v304, 8
    %vm315 = vcmp.eq.s32.totalorder %v314, %v301
    %v316 = vsel %vm315, 1.0, %v312
    %317 = vst [vmem:[%s311] sm:$0xff] %v316
    // While loop
    $region90: #{custom-call.8} parent=1 // loop_pre_header
      _
    $region91: #{custom-call.8} parent=1 // loop_header
      %s319 = sphi 0, %s1257
      %v320 = vlaneseq
      %v321 = vand.u32 %v320, 127
      %v322 = vmov %v321
      %v323 = vlaneseq
      %v324 = vshrl.u32 %v323, 7
      %v325 = vmov %v324
      %s326 = smov [#allocation15]
      %v327 = vlaneseq
      %v328 = vand.u32 %v327, 127
      %vm329 = vcmp.ge.s32.totalorder %v328, 0
      %vm330 = vcmp.lt.s32.totalorder %v328, 16
      %vm331 = vmand %vm329, %vm330
      %v332 = vld [vmem:[%s326] sm:$0xff]
      %v333 = vsel %vm331, %v332, 0.0
      %v334 = vmul.f32 %v333, %v333
      %vm337 = vcmp.eq.s32.totalorder %v325, %v322
      %v338 = vsel %vm337, 0.0, %v334
      %s339 = scalar_lea.vmem %s326, 8
      %v340 = vld [vmem:[%s339] sm:$0xff]
      %v341 = vsel %vm331, %v340, 0.0
      %v342 = vmul.f32 %v341, %v341
      %v344 = vadd.s32 %v325, 8
      %vm345 = vcmp.eq.s32.totalorder %v344, %v322
      %v346 = vsel %vm345, 0.0, %v342
      %v347 = vadd.f32 %v338, %v346
      %v348 = vadd.f32 %v334, %v342
      %v349 = vlaneseq
      %v350 = vand.u32 %v349, 127
      %v351 = vmov %v350
      %v352 = vlaneseq
      %v353 = vshrl.u32 %v352, 7
      %v354 = vmov %v353
      %s355 = smov [#allocation16]
      %v356 = vlaneseq
      %v357 = vand.u32 %v356, 127
      %vm358 = vcmp.ge.s32.totalorder %v357, 0
      %vm359 = vcmp.lt.s32.totalorder %v357, 16
      %vm360 = vmand %vm358, %vm359
      %v361 = vld [vmem:[%s355] sm:$0xff]
      %v362 = vsel %vm360, %v361, 0.0
      %v363 = vmul.f32 %v362, %v362
      %v364 = vadd.f32 %v347, %v363
      %v365 = vadd.f32 %v348, %v363
      %s366 = scalar_lea.vmem %s355, 8
      %v367 = vld [vmem:[%s366] sm:$0xff]
      %v368 = vsel %vm360, %v367, 0.0
      %v369 = vmul.f32 %v368, %v368
      %v370 = vadd.f32 %v364, %v369
      %v371 = vadd.f32 %v365, %v369
      %v372 = vlaneseq
      %v373 = vand.u32 %v372, 127
      %v374 = vmov %v373
      %v375 = vlaneseq
      %v376 = vshrl.u32 %v375, 7
      %v377 = vmov %v376
      %s378 = smov [#allocation17]
      %v379 = vlaneseq
      %v380 = vand.u32 %v379, 127
      %vm381 = vcmp.ge.s32.totalorder %v380, 0
      %vm382 = vcmp.lt.s32.totalorder %v380, 16
      %vm383 = vmand %vm381, %vm382
      %v384 = vld [vmem:[%s378] sm:$0xff]
      %v385 = vsel %vm383, %v384, 0.0
      %v386 = vmul.f32 %v385, %v385
      %v387 = vadd.f32 %v370, %v386
      %v388 = vadd.f32 %v371, %v386
      %s389 = scalar_lea.vmem %s378, 8
      %v390 = vld [vmem:[%s389] sm:$0xff]
      %v391 = vsel %vm383, %v390, 0.0
      %v392 = vmul.f32 %v391, %v391
      %v393 = vadd.f32 %v387, %v392
      %v394 = vadd.f32 %v388, %v392
      %v395 = vlaneseq
      %v396 = vand.u32 %v395, 127
      %v397 = vmov %v396
      %v398 = vlaneseq
      %v399 = vshrl.u32 %v398, 7
      %v400 = vmov %v399
      %s401 = smov [#allocation18]
      %v402 = vlaneseq
      %v403 = vand.u32 %v402, 127
      %vm404 = vcmp.ge.s32.totalorder %v403, 0
      %vm405 = vcmp.lt.s32.totalorder %v403, 16
      %vm406 = vmand %vm404, %vm405
      %v407 = vld [vmem:[%s401] sm:$0xff]
      %v408 = vsel %vm406, %v407, 0.0
      %v409 = vmul.f32 %v408, %v408
      %vm412 = vcmp.eq.s32.totalorder %v400, %v397
      %v413 = vsel %vm412, 0.0, %v409
      %v414 = vadd.f32 %v393, %v413
      %v415 = vadd.f32 %v394, %v409
      %s416 = scalar_lea.vmem %s401, 8
      %v417 = vld [vmem:[%s416] sm:$0xff]
      %v418 = vsel %vm406, %v417, 0.0
      %v419 = vmul.f32 %v418, %v418
      %v421 = vadd.s32 %v400, 8
      %vm422 = vcmp.eq.s32.totalorder %v421, %v397
      %v423 = vsel %vm422, 0.0, %v419
      %v424 = vadd.f32 %v414, %v423
      %v425 = vadd.f32 %v415, %v419
      %426 = vadd.xlane.f32.xlu0 %v425
      %v427 = vpop.xlane.xlu0 %426
      %v428 = vrot.slane %v427, 4
      %v429 = vadd.f32 %v427, %v428
      %v430 = vrot.slane %v429, 2
      %v431 = vadd.f32 %v429, %v430
      %v432 = vrot.slane %v431, 1
      %v433 = vadd.f32 %v431, %v432
      %434 = vadd.xlane.f32.xlu0 %v424
      %v435 = vpop.xlane.xlu0 %434
      %v436 = vrot.slane %v435, 4
      %v437 = vadd.f32 %v435, %v436
      %v438 = vrot.slane %v437, 2
      %v439 = vadd.f32 %v437, %v438
      %v440 = vrot.slane %v439, 1
      %v441 = vadd.f32 %v439, %v440
      %s442 = vtos %v441
      %s443 = vtos %v433
      %s444 = smul.f32 1e-10, %s443
      %p445 = scmp.le.f32.partialorder %s442, %s444
      %p446 = scmp.ge.s32.totalorder %s319, 15
      %p447 = por %p445, %p446
    $region92: #{custom-call.8} parent=1 // loop_header_branch
      %1259 = sbr.rel (%p447) target = $region96
    $region93: #{custom-call.8} parent=1 // loop_body
      loop: start=0, step=1, limit=31
      $region97: #{custom-call.8} parent=93 // loop_pre_header
        _
      $region98: #{custom-call.8} parent=93 // loop_header
        %s449 = sphi 0, %s453
        %p450 = scmp.ge.s32.totalorder %s449, 31
      $region99: #{custom-call.8} parent=93 // loop_header_branch
        %452 = sbr.rel (%p450) target = $region103
      $region100: #{custom-call.8} parent=93 // loop_body
        #allocation19 [shape = 'f32[1024]{0}', space=vmem, size = 0x1000, scoped, tag = 'a_tl_diag vmem']
        #allocation20 [shape = 'f32[1024]{0}', space=vmem, size = 0x1000, scoped, tag = 'a_tr_diag vmem']
        #allocation21 [shape = 'f32[1024]{0}', space=vmem, size = 0x1000, scoped, tag = 'a_br_diag vmem']
        #allocation22 [shape = 'f32[1024]{0}', space=vmem, size = 0x1000, scoped, tag = 'rt1 vmem']
        #allocation23 [shape = 'f32[1024]{0}', space=vmem, size = 0x1000, scoped, tag = 'rt2 vmem']
        #allocation24 [shape = 'f32[1024]{0}', space=vmem, size = 0x1000, scoped, tag = 'c vmem']
        #allocation25 [shape = 'f32[1024]{0}', space=vmem, size = 0x1000, scoped, tag = 's vmem']
        #allocation26 [shape = 'f32[8192]{0}', space=vmem, size = 0x8000, scoped, tag = 'c broadcast']
        #allocation27 [shape = 'f32[8192]{0}', space=vmem, size = 0x8000, scoped, tag = 's broadcast']
        %s454 = smov [#allocation15]
        %s455 = smov [#allocation19]
        %v456 = vlaneseq
        %v457 = vand.u32 %v456, 127
        %v458 = vmov %v457
        %v459 = vlaneseq
        %v460 = vshrl.u32 %v459, 7
        %v461 = vmov %v460
        %v462 = vld [vmem:[%s454] sm:$0xff]
        %vm465 = vcmp.eq.s32.totalorder %v461, %v458
        %v466 = vsel %vm465, %v462, 0.0
        %s467 = scalar_lea.vmem %s454, 8
        %v468 = vld [vmem:[%s467] sm:$0xff]
        %v470 = vadd.s32 %v461, 8
        %vm471 = vcmp.eq.s32.totalorder %v470, %v458
        %v472 = vsel %vm471, %v468, %v466
        %v473 = vrot.slane %v472, 4
        %v474 = vadd.f32 %v472, %v473
        %v475 = vrot.slane %v474, 2
        %v476 = vadd.f32 %v474, %v475
        %v477 = vrot.slane %v476, 1
        %v478 = vadd.f32 %v476, %v477
        %479 = vst [vmem:[%s455] sm:$0x1] %v478
        %s480 = smov [#allocation16]
        %s481 = smov [#allocation20]
        %v482 = vlaneseq
        %v483 = vand.u32 %v482, 127
        %v484 = vmov %v483
        %v485 = vlaneseq
        %v486 = vshrl.u32 %v485, 7
        %v487 = vmov %v486
        %v488 = vld [vmem:[%s480] sm:$0xff]
        %vm491 = vcmp.eq.s32.totalorder %v487, %v484
        %v492 = vsel %vm491, %v488, 0.0
        %s493 = scalar_lea.vmem %s480, 8
        %v494 = vld [vmem:[%s493] sm:$0xff]
        %v496 = vadd.s32 %v487, 8
        %vm497 = vcmp.eq.s32.totalorder %v496, %v484
        %v498 = vsel %vm497, %v494, %v492
        %v499 = vrot.slane %v498, 4
        %v500 = vadd.f32 %v498, %v499
        %v501 = vrot.slane %v500, 2
        %v502 = vadd.f32 %v500, %v501
        %v503 = vrot.slane %v502, 1
        %v504 = vadd.f32 %v502, %v503
        %505 = vst [vmem:[%s481] sm:$0x1] %v504
        %s506 = smov [#allocation18]
        %s507 = smov [#allocation21]
        %v508 = vlaneseq
        %v509 = vand.u32 %v508, 127
        %v510 = vmov %v509
        %v511 = vlaneseq
        %v512 = vshrl.u32 %v511, 7
        %v513 = vmov %v512
        %v514 = vld [vmem:[%s506] sm:$0xff]
        %vm517 = vcmp.eq.s32.totalorder %v513, %v510
        %v518 = vsel %vm517, %v514, 0.0
        %s519 = scalar_lea.vmem %s506, 8
        %v520 = vld [vmem:[%s519] sm:$0xff]
        %v522 = vadd.s32 %v513, 8
        %vm523 = vcmp.eq.s32.totalorder %v522, %v510
        %v524 = vsel %vm523, %v520, %v518
        %v525 = vrot.slane %v524, 4
        %v526 = vadd.f32 %v524, %v525
        %v527 = vrot.slane %v526, 2
        %v528 = vadd.f32 %v526, %v527
        %v529 = vrot.slane %v528, 1
        %v530 = vadd.f32 %v528, %v529
        %531 = vst [vmem:[%s507] sm:$0x1] %v530
        %s532 = smov [#allocation24]
        %s533 = smov [#allocation25]
        %s534 = smov [#allocation19]
        %v535 = vld [vmem:[%s534] sm:$0xff]
        %s536 = smov [#allocation20]
        %v537 = vld [vmem:[%s536] sm:$0xff]
        %s538 = smov [#allocation21]
        %v539 = vld [vmem:[%s538] sm:$0xff]
        %v540 = vsub.f32 %v539, %v535
        %v541 = vmul.f32 2.0, %v537
        %v542 = vrcp.pop %v541
        %v543 = vmul.f32 %v541, %v542
        %v544 = vsub.f32 1.0, %v543
        %v545 = vmul.f32 %v542, %v544
        %v546 = vadd.f32 %v542, %v545
        %vm547 = vweird.f32 %v541
        %vm548 = vweird.f32 %v542
        %vm549 = vmor %vm547, %vm548
        %v550 = vsel %vm549, %v542, %v546
        %v551 = vand.u32 2147483647, %v541
        %vm552 = vcmp.eq.f32.partialorder %v551, 8.507059e+37
        %v553 = vand.u32 %v541, 2147483648
        %v554 = vor.u32 1.1754944e-38, %v553
        %v555 = vsel %vm552, %v554, %v550
        %v556 = vmul.f32 %v540, %v555
        %vm557 = vcmp.ge.f32.partialorder %v556, 0.0
        %v558 = vmul.f32 %v556, %v556
        %v559 = vadd.f32 1.0, %v558
        %v560 = vrsqrt.pop %v559
        %v561 = vmul.f32 %v560, %v559
        %v562 = vmul.f32 %v561, %v560
        %v563 = vmul.f32 0.5, %v562
        %v564 = vsub.f32 1.5, %v563
        %v565 = vmul.f32 %v560, %v564
        %v566 = vmul.f32 %v559, %v565
        %vm567 = vcmp.eq.f32.partialorder %v559, inf
        %v568 = vsel %vm567, %v559, %v566
        %vm569 = vcmp.eq.f32.partialorder %v559, 0.0
        %v570 = vand.u32 %v559, 2147483648
        %v571 = vsel %vm569, %v570, %v568
        %v572 = vxor.u32 %v571, 2147483648
        %v573 = vsel %vm557, %v571, %v572
        %v574 = vadd.f32 %v556, %v573
        %v575 = vrcp.pop %v574
        %v576 = vmul.f32 %v574, %v575
        %v577 = vsub.f32 1.0, %v576
        %v578 = vmul.f32 %v575, %v577
        %v579 = vadd.f32 %v575, %v578
        %vm580 = vweird.f32 %v574
        %vm581 = vweird.f32 %v575
        %vm582 = vmor %vm580, %vm581
        %v583 = vsel %vm582, %v575, %v579
        %v584 = vand.u32 2147483647, %v574
        %vm585 = vcmp.eq.f32.partialorder %v584, 8.507059e+37
        %v586 = vand.u32 %v574, 2147483648
        %v587 = vor.u32 1.1754944e-38, %v586
        %v588 = vsel %vm585, %v587, %v583
        %v589 = vand.u32 2147483647, %v535
        %v590 = vand.u32 2147483647, %v537
        %v591 = vand.u32 2147483647, %v539
        %v592 = vmin.f32 %v589, %v591
        %v593 = vmul.f32 1.1920929e-08, %v592
        %vm594 = vcmp.le.f32.partialorder %v590, %v593
        %v595 = vsel %vm594, 0.0, %v588
        %v596 = vmul.f32 %v595, %v595
        %v597 = vadd.f32 1.0, %v596
        %v598 = vrsqrt.pop %v597
        %v599 = vmul.f32 %v598, %v597
        %v600 = vmul.f32 %v599, %v598
        %v601 = vmul.f32 0.5, %v600
        %v602 = vsub.f32 1.5, %v601
        %v603 = vmul.f32 %v598, %v602
        %vm604 = vweird.f32 %v597
        %vm605 = vweird.f32 %v598
        %vm606 = vmor %vm604, %vm605
        %v607 = vsel %vm606, %v598, %v603
        %v608 = vmul.f32 %v595, %v607
        %v609 = vmul.f32 %v595, %v537
        %v610 = vsub.f32 %v535, %v609
        %v611 = vmul.f32 %v595, %v537
        %v612 = vadd.f32 %v539, %v611
        %s613 = smov [#allocation22]
        %614 = vst [vmem:[%s613] sm:$0xff] %v610
        %s615 = smov [#allocation23]
        %616 = vst [vmem:[%s615] sm:$0xff] %v612
        %s617 = smov %s532
        %618 = vst [vmem:[%s617] sm:$0xff] %v607
        %s619 = smov %s533
        %620 = vst [vmem:[%s619] sm:$0xff] %v608
        %s621 = smov [#allocation24]
        %v622 = vld [vmem:[%s621] ss:$0 sm:$0xff]
        %v623 = vlaneseq
        %v624 = vand.u32 %v623, 127
        %v625 = vmov %v624
        %v626 = vlaneseq
        %v627 = vshrl.u32 %v626, 7
        %v628 = vmov %v627
        %vm630 = vcmp.eq.s32.totalorder %v628, %v625
        %v631 = vsel %vm630, %v622, 0.0
        %632 = vadd.xlane.f32.xlu0 %v631
        %v633 = vpop.xlane.xlu0 %632
        %s634 = smov [#allocation26]
        %635 = vst [vmem:[%s634] sm:$0xff] %v633
        %s636 = smov [#allocation24]
        %v637 = vld [vmem:[%s636] ss:$0 sm:$0xff]
        %v638 = vlaneseq
        %v639 = vand.u32 %v638, 127
        %v640 = vmov %v639
        %v641 = vlaneseq
        %v642 = vshrl.u32 %v641, 7
        %v643 = vmov %v642
        %v644 = vadd.s32 %v643, 8
        %vm645 = vcmp.eq.s32.totalorder %v644, %v640
        %v646 = vsel %vm645, %v637, 0.0
        %647 = vadd.xlane.f32.xlu0 %v646
        %v648 = vpop.xlane.xlu0 %647
        %s649 = smov [#allocation26]
        %s650 = scalar_lea.vmem %s649, 8
        %651 = vst [vmem:[%s650] sm:$0xff] %v648
        %s652 = smov [#allocation25]
        %v653 = vld [vmem:[%s652] ss:$0 sm:$0xff]
        %v654 = vlaneseq
        %v655 = vand.u32 %v654, 127
        %v656 = vmov %v655
        %v657 = vlaneseq
        %v658 = vshrl.u32 %v657, 7
        %v659 = vmov %v658
        %vm661 = vcmp.eq.s32.totalorder %v659, %v656
        %v662 = vsel %vm661, %v653, 0.0
        %663 = vadd.xlane.f32.xlu0 %v662
        %v664 = vpop.xlane.xlu0 %663
        %s665 = smov [#allocation27]
        %666 = vst [vmem:[%s665] sm:$0xff] %v664
        %s667 = smov [#allocation25]
        %v668 = vld [vmem:[%s667] ss:$0 sm:$0xff]
        %v669 = vlaneseq
        %v670 = vand.u32 %v669, 127
        %v671 = vmov %v670
        %v672 = vlaneseq
        %v673 = vshrl.u32 %v672, 7
        %v674 = vmov %v673
        %v675 = vadd.s32 %v674, 8
        %vm676 = vcmp.eq.s32.totalorder %v675, %v671
        %v677 = vsel %vm676, %v668, 0.0
        %678 = vadd.xlane.f32.xlu0 %v677
        %v679 = vpop.xlane.xlu0 %678
        %s680 = smov [#allocation27]
        %s681 = scalar_lea.vmem %s680, 8
        %682 = vst [vmem:[%s681] sm:$0xff] %v679
        %s683 = smov [#allocation26]
        %v684 = vld [vmem:[%s683] sm:$0xff]
        %s685 = smov [#allocation27]
        %v686 = vld [vmem:[%s685] sm:$0xff]
        %s687 = smov [#allocation15]
        %s688 = smov [#allocation16]
        %s689 = smov [#allocation17]
        %s690 = smov [#allocation18]
        %v691 = vld [vmem:[%s687] sm:$0xff]
        %v692 = vld [vmem:[%s688] sm:$0xff]
        %v693 = vld [vmem:[%s689] sm:$0xff]
        %v694 = vld [vmem:[%s690] sm:$0xff]
        %v695 = vmul.f32 %v684, %v691
        %v696 = vmul.f32 %v686, %v693
        %v697 = vsub.f32 %v695, %v696
        %v698 = vmul.f32 %v684, %v692
        %v699 = vmul.f32 %v686, %v694
        %v700 = vsub.f32 %v698, %v699
        %v701 = vmul.f32 %v686, %v691
        %v702 = vmul.f32 %v684, %v693
        %v703 = vadd.f32 %v701, %v702
        %v704 = vmul.f32 %v686, %v692
        %v705 = vmul.f32 %v684, %v694
        %v706 = vadd.f32 %v704, %v705
        %707 = vst [vmem:[%s687] sm:$0xff] %v697
        %708 = vst [vmem:[%s688] sm:$0xff] %v700
        %709 = vst [vmem:[%s689] sm:$0xff] %v703
        %710 = vst [vmem:[%s690] sm:$0xff] %v706
        %s711 = smov [#allocation26]
        %s712 = scalar_lea.vmem %s711, 8
        %v713 = vld [vmem:[%s712] sm:$0xff]
        %s714 = smov [#allocation27]
        %s715 = scalar_lea.vmem %s714, 8
        %v716 = vld [vmem:[%s715] sm:$0xff]
        %s717 = smov [#allocation15]
        %s718 = scalar_lea.vmem %s717, 8
        %s719 = smov [#allocation16]
        %s720 = scalar_lea.vmem %s719, 8
        %s721 = smov [#allocation17]
        %s722 = scalar_lea.vmem %s721, 8
        %s723 = smov [#allocation18]
        %s724 = scalar_lea.vmem %s723, 8
        %v725 = vld [vmem:[%s718] sm:$0xff]
        %v726 = vld [vmem:[%s720] sm:$0xff]
        %v727 = vld [vmem:[%s722] sm:$0xff]
        %v728 = vld [vmem:[%s724] sm:$0xff]
        %v729 = vmul.f32 %v713, %v725
        %v730 = vmul.f32 %v716, %v727
        %v731 = vsub.f32 %v729, %v730
        %v732 = vmul.f32 %v713, %v726
        %v733 = vmul.f32 %v716, %v728
        %v734 = vsub.f32 %v732, %v733
        %v735 = vmul.f32 %v716, %v725
        %v736 = vmul.f32 %v713, %v727
        %v737 = vadd.f32 %v735, %v736
        %v738 = vmul.f32 %v716, %v726
        %v739 = vmul.f32 %v713, %v728
        %v740 = vadd.f32 %v738, %v739
        %741 = vst [vmem:[%s718] sm:$0xff] %v731
        %742 = vst [vmem:[%s720] sm:$0xff] %v734
        %743 = vst [vmem:[%s722] sm:$0xff] %v737
        %744 = vst [vmem:[%s724] sm:$0xff] %v740
        %s745 = smov [#allocation24]
        %v746 = vld [vmem:[%s745] ss:$0 sm:$0xff]
        %s747 = smov [#allocation25]
        %v748 = vld [vmem:[%s747] ss:$0 sm:$0xff]
        %s749 = smov [#allocation15]
        %s750 = smov [#allocation16]
        %s751 = smov [#allocation17]
        %s752 = smov [#allocation18]
        %v753 = vld [vmem:[%s749] sm:$0xff]
        %v754 = vld [vmem:[%s750] sm:$0xff]
        %v755 = vld [vmem:[%s751] sm:$0xff]
        %v756 = vld [vmem:[%s752] sm:$0xff]
        %v757 = vmul.f32 %v746, %v753
        %v758 = vmul.f32 %v748, %v754
        %v759 = vsub.f32 %v757, %v758
        %v760 = vmul.f32 %v748, %v753
        %v761 = vmul.f32 %v746, %v754
        %v762 = vadd.f32 %v760, %v761
        %v763 = vmul.f32 %v746, %v755
        %v764 = vmul.f32 %v748, %v756
        %v765 = vsub.f32 %v763, %v764
        %v766 = vmul.f32 %v748, %v755
        %v767 = vmul.f32 %v746, %v756
        %v768 = vadd.f32 %v766, %v767
        %769 = vst [vmem:[%s749] sm:$0xff] %v759
        %770 = vst [vmem:[%s750] sm:$0xff] %v762
        %771 = vst [vmem:[%s751] sm:$0xff] %v765
        %772 = vst [vmem:[%s752] sm:$0xff] %v768
        %s773 = smov [#allocation15]
        %s774 = scalar_lea.vmem %s773, 8
        %s775 = smov [#allocation16]
        %s776 = scalar_lea.vmem %s775, 8
        %s777 = smov [#allocation17]
        %s778 = scalar_lea.vmem %s777, 8
        %s779 = smov [#allocation18]
        %s780 = scalar_lea.vmem %s779, 8
        %v781 = vld [vmem:[%s774] sm:$0xff]
        %v782 = vld [vmem:[%s776] sm:$0xff]
        %v783 = vld [vmem:[%s778] sm:$0xff]
        %v784 = vld [vmem:[%s780] sm:$0xff]
        %v785 = vmul.f32 %v746, %v781
        %v786 = vmul.f32 %v748, %v782
        %v787 = vsub.f32 %v785, %v786
        %v788 = vmul.f32 %v748, %v781
        %v789 = vmul.f32 %v746, %v782
        %v790 = vadd.f32 %v788, %v789
        %v791 = vmul.f32 %v746, %v783
        %v792 = vmul.f32 %v748, %v784
        %v793 = vsub.f32 %v791, %v792
        %v794 = vmul.f32 %v748, %v783
        %v795 = vmul.f32 %v746, %v784
        %v796 = vadd.f32 %v794, %v795
        %797 = vst [vmem:[%s774] sm:$0xff] %v787
        %798 = vst [vmem:[%s776] sm:$0xff] %v790
        %799 = vst [vmem:[%s778] sm:$0xff] %v793
        %800 = vst [vmem:[%s780] sm:$0xff] %v796
        %s801 = smov [#allocation15]
        %s802 = smov [#allocation22]
        %v803 = vlaneseq
        %v804 = vand.u32 %v803, 127
        %v805 = vmov %v804
        %v806 = vlaneseq
        %v807 = vshrl.u32 %v806, 7
        %v808 = vmov %v807
        %v809 = vld [vmem:[%s802] ss:$0 sm:$0xff]
        %v810 = vld [vmem:[%s801] sm:$0xff]
        %vm813 = vcmp.eq.s32.totalorder %v808, %v805
        %v814 = vsel %vm813, %v809, %v810
        %815 = vst [vmem:[%s801] sm:$0xff] %v814
        %v816 = vld [vmem:[%s802] ss:$0 sm:$0xff]
        %s817 = scalar_lea.vmem %s801, 8
        %v818 = vld [vmem:[%s817] sm:$0xff]
        %v820 = vadd.s32 %v808, 8
        %vm821 = vcmp.eq.s32.totalorder %v820, %v805
        %v822 = vsel %vm821, %v816, %v818
        %823 = vst [vmem:[%s817] sm:$0xff] %v822
        %s824 = smov [#allocation16]
        %v825 = vlaneseq
        %v826 = vand.u32 %v825, 127
        %v827 = vmov %v826
        %v828 = vlaneseq
        %v829 = vshrl.u32 %v828, 7
        %v830 = vmov %v829
        %v831 = vld [vmem:[%s824] sm:$0xff]
        %vm834 = vcmp.eq.s32.totalorder %v830, %v827
        %v835 = vsel %vm834, 0.0, %v831
        %836 = vst [vmem:[%s824] sm:$0xff] %v835
        %s837 = scalar_lea.vmem %s824, 8
        %v838 = vld [vmem:[%s837] sm:$0xff]
        %v840 = vadd.s32 %v830, 8
        %vm841 = vcmp.eq.s32.totalorder %v840, %v827
        %v842 = vsel %vm841, 0.0, %v838
        %843 = vst [vmem:[%s837] sm:$0xff] %v842
        %s844 = smov [#allocation17]
        %v845 = vlaneseq
        %v846 = vand.u32 %v845, 127
        %v847 = vmov %v846
        %v848 = vlaneseq
        %v849 = vshrl.u32 %v848, 7
        %v850 = vmov %v849
        %v851 = vld [vmem:[%s844] sm:$0xff]
        %vm854 = vcmp.eq.s32.totalorder %v850, %v847
        %v855 = vsel %vm854, 0.0, %v851
        %856 = vst [vmem:[%s844] sm:$0xff] %v855
        %s857 = scalar_lea.vmem %s844, 8
        %v858 = vld [vmem:[%s857] sm:$0xff]
        %v860 = vadd.s32 %v850, 8
        %vm861 = vcmp.eq.s32.totalorder %v860, %v847
        %v862 = vsel %vm861, 0.0, %v858
        %863 = vst [vmem:[%s857] sm:$0xff] %v862
        %s864 = smov [#allocation18]
        %s865 = smov [#allocation23]
        %v866 = vlaneseq
        %v867 = vand.u32 %v866, 127
        %v868 = vmov %v867
        %v869 = vlaneseq
        %v870 = vshrl.u32 %v869, 7
        %v871 = vmov %v870
        %v872 = vld [vmem:[%s865] ss:$0 sm:$0xff]
        %v873 = vld [vmem:[%s864] sm:$0xff]
        %vm876 = vcmp.eq.s32.totalorder %v871, %v868
        %v877 = vsel %vm876, %v872, %v873
        %878 = vst [vmem:[%s864] sm:$0xff] %v877
        %v879 = vld [vmem:[%s865] ss:$0 sm:$0xff]
        %s880 = scalar_lea.vmem %s864, 8
        %v881 = vld [vmem:[%s880] sm:$0xff]
        %v883 = vadd.s32 %v871, 8
        %vm884 = vcmp.eq.s32.totalorder %v883, %v868
        %v885 = vsel %vm884, %v879, %v881
        %886 = vst [vmem:[%s880] sm:$0xff] %v885
        %s887 = smov [#allocation15]
        %s888 = smov [#allocation16]
        %v889 = vld [vmem:[%s888] sm:$0xff]
        %890 = vrot.lane.b32.xlu0 %v889, 1
        %v891 = vpop.permute.xlu0 %890
        %v892 = vld [vmem:[%s887] sm:$0xff]
        %v893 = vld [vmem:[%s887] sm:$0xff]
        %894 = vrot.lane.b32.xlu0 %v893, 1
        %v895 = vpop.permute.xlu0 %894
        %v896 = vlaneseq
        %v897 = vand.u32 %v896, 127
        %vm898 = vcmp.eq.s32.totalorder %v897, 0
        %v899 = vsel %vm898, %v893, %v895
        %v900 = vlaneseq
        %v901 = vand.u32 %v900, 127
        %vm902 = vcmp.eq.s32.totalorder %v901, 1
        %v903 = vsel %vm902, %v891, %v899
        %v904 = vlaneseq
        %v905 = vand.u32 %v904, 127
        %vm906 = vcmp.ge.s32.totalorder %v905, 0
        %vm907 = vcmp.lt.s32.totalorder %v905, 16
        %vm908 = vmand %vm906, %vm907
        %v909 = vsel %vm908, %v903, 0.0
        %v910 = vld [vmem:[%s888] sm:$0xff]
        %911 = vrot.lane.b32.xlu0 %v910, 127
        %v912 = vpop.permute.xlu0 %911
        %v913 = vlaneseq
        %v914 = vand.u32 %v913, 127
        %vm915 = vcmp.eq.s32.totalorder %v914, 15
        %v916 = vsel %vm915, %v892, %v912
        %s917 = smov [#allocation15]
        %s918 = scalar_lea.vmem %s917, 8
        %s919 = smov [#allocation16]
        %s920 = scalar_lea.vmem %s919, 8
        %v921 = vld [vmem:[%s920] sm:$0xff]
        %922 = vrot.lane.b32.xlu0 %v921, 1
        %v923 = vpop.permute.xlu0 %922
        %v924 = vld [vmem:[%s918] sm:$0xff]
        %v925 = vld [vmem:[%s918] sm:$0xff]
        %926 = vrot.lane.b32.xlu0 %v925, 1
        %v927 = vpop.permute.xlu0 %926
        %v928 = vlaneseq
        %v929 = vand.u32 %v928, 127
        %vm930 = vcmp.eq.s32.totalorder %v929, 0
        %v931 = vsel %vm930, %v925, %v927
        %v932 = vlaneseq
        %v933 = vand.u32 %v932, 127
        %vm934 = vcmp.eq.s32.totalorder %v933, 1
        %v935 = vsel %vm934, %v923, %v931
        %v936 = vlaneseq
        %v937 = vand.u32 %v936, 127
        %vm938 = vcmp.ge.s32.totalorder %v937, 0
        %vm939 = vcmp.lt.s32.totalorder %v937, 16
        %vm940 = vmand %vm938, %vm939
        %v941 = vsel %vm940, %v935, 0.0
        %v942 = vld [vmem:[%s920] sm:$0xff]
        %943 = vrot.lane.b32.xlu0 %v942, 127
        %v944 = vpop.permute.xlu0 %943
        %v945 = vlaneseq
        %v946 = vand.u32 %v945, 127
        %vm947 = vcmp.eq.s32.totalorder %v946, 15
        %v948 = vsel %vm947, %v924, %v944
        %949 = vst [vmem:[%s887] sm:$0xff] %v909
        %950 = vst [vmem:[%s888] sm:$0xff] %v916
        %951 = vst [vmem:[%s918] sm:$0xff] %v941
        %952 = vst [vmem:[%s920] sm:$0xff] %v948
        %s953 = smov [#allocation17]
        %s954 = smov [#allocation18]
        %v955 = vld [vmem:[%s954] sm:$0xff]
        %956 = vrot.lane.b32.xlu0 %v955, 1
        %v957 = vpop.permute.xlu0 %956
        %v958 = vld [vmem:[%s953] sm:$0xff]
        %v959 = vld [vmem:[%s953] sm:$0xff]
        %960 = vrot.lane.b32.xlu0 %v959, 1
        %v961 = vpop.permute.xlu0 %960
        %v962 = vlaneseq
        %v963 = vand.u32 %v962, 127
        %vm964 = vcmp.eq.s32.totalorder %v963, 0
        %v965 = vsel %vm964, %v959, %v961
        %v966 = vlaneseq
        %v967 = vand.u32 %v966, 127
        %vm968 = vcmp.eq.s32.totalorder %v967, 1
        %v969 = vsel %vm968, %v957, %v965
        %v970 = vlaneseq
        %v971 = vand.u32 %v970, 127
        %vm972 = vcmp.ge.s32.totalorder %v971, 0
        %vm973 = vcmp.lt.s32.totalorder %v971, 16
        %vm974 = vmand %vm972, %vm973
        %v975 = vsel %vm974, %v969, 0.0
        %v976 = vld [vmem:[%s954] sm:$0xff]
        %977 = vrot.lane.b32.xlu0 %v976, 127
        %v978 = vpop.permute.xlu0 %977
        %v979 = vlaneseq
        %v980 = vand.u32 %v979, 127
        %vm981 = vcmp.eq.s32.totalorder %v980, 15
        %v982 = vsel %vm981, %v958, %v978
        %s983 = smov [#allocation17]
        %s984 = scalar_lea.vmem %s983, 8
        %s985 = smov [#allocation18]
        %s986 = scalar_lea.vmem %s985, 8
        %v987 = vld [vmem:[%s986] sm:$0xff]
        %988 = vrot.lane.b32.xlu0 %v987, 1
        %v989 = vpop.permute.xlu0 %988
        %v990 = vld [vmem:[%s984] sm:$0xff]
        %v991 = vld [vmem:[%s984] sm:$0xff]
        %992 = vrot.lane.b32.xlu0 %v991, 1
        %v993 = vpop.permute.xlu0 %992
        %v994 = vlaneseq
        %v995 = vand.u32 %v994, 127
        %vm996 = vcmp.eq.s32.totalorder %v995, 0
        %v997 = vsel %vm996, %v991, %v993
        %v998 = vlaneseq
        %v999 = vand.u32 %v998, 127
        %vm1000 = vcmp.eq.s32.totalorder %v999, 1
        %v1001 = vsel %vm1000, %v989, %v997
        %v1002 = vlaneseq
        %v1003 = vand.u32 %v1002, 127
        %vm1004 = vcmp.ge.s32.totalorder %v1003, 0
        %vm1005 = vcmp.lt.s32.totalorder %v1003, 16
        %vm1006 = vmand %vm1004, %vm1005
        %v1007 = vsel %vm1006, %v1001, 0.0
        %v1008 = vld [vmem:[%s986] sm:$0xff]
        %1009 = vrot.lane.b32.xlu0 %v1008, 127
        %v1010 = vpop.permute.xlu0 %1009
        %v1011 = vlaneseq
        %v1012 = vand.u32 %v1011, 127
        %vm1013 = vcmp.eq.s32.totalorder %v1012, 15
        %v1014 = vsel %vm1013, %v990, %v1010
        %1015 = vst [vmem:[%s953] sm:$0xff] %v975
        %1016 = vst [vmem:[%s954] sm:$0xff] %v982
        %1017 = vst [vmem:[%s984] sm:$0xff] %v1007
        %1018 = vst [vmem:[%s986] sm:$0xff] %v1014
        %s1019 = smov [#allocation15]
        %s1020 = smov [#allocation17]
        %v1021 = vld [vmem:[%s1019] ss:$0 sm:$0xff]
        %s1023 = scalar_lea.vmem %s1019, 4294967295
        %v1024 = vld [vmem:[%s1023] sm:$0xfe]
        %v1025 = vlaneseq
        %v1026 = vshrl.u32 %v1025, 7
        %vm1027 = vcmp.eq.s32.totalorder %v1026, 0
        %v1028 = vsel %vm1027, %v1021, %v1024
        %s1029 = scalar_lea.vmem %s1019, 7
        %v1030 = vld [vmem:[%s1029] ss:$0 sm:$0xff]
        %1031 = vst [vmem:[%s1019] sm:$0xff] %v1028
        %s1032 = scalar_lea.vmem %s1019, 8
        %s1034 = scalar_lea.vmem %s1032, 4294967295
        %v1035 = vld [vmem:[%s1034] sm:$0xfe]
        %v1036 = vlaneseq
        %v1037 = vshrl.u32 %v1036, 7
        %vm1038 = vcmp.eq.s32.totalorder %v1037, 0
        %v1039 = vsel %vm1038, %v1030, %v1035
        %s1040 = scalar_lea.vmem %s1032, 7
        %v1041 = vld [vmem:[%s1040] ss:$0 sm:$0xff]
        %1042 = vst [vmem:[%s1032] sm:$0xff] %v1039
        %v1043 = vld [vmem:[%s1020] ss:$0 sm:$0xff]
        %s1044 = scalar_lea.vmem %s1019, 1
        %1045 = vst [vmem:[%s1044] sm:$0x1] %v1043
        %s1046 = scalar_lea.vmem %s1020, 8
        %s1047 = scalar_lea.vmem %s1046, 1
        %v1048 = vld [vmem:[%s1047] sm:$0x7f]
        %v1049 = vlaneseq
        %v1050 = vshrl.u32 %v1049, 7
        %vm1051 = vcmp.eq.s32.totalorder %v1050, 7
        %v1052 = vsel %vm1051, %v1041, %v1048
        %v1053 = vld [vmem:[%s1046] ss:$0 sm:$0xff]
        %1054 = vst [vmem:[%s1046] sm:$0xff] %v1052
        %s1055 = scalar_lea.vmem %s1020, 1
        %v1056 = vld [vmem:[%s1055] sm:$0x7f]
        %v1057 = vlaneseq
        %v1058 = vshrl.u32 %v1057, 7
        %vm1059 = vcmp.eq.s32.totalorder %v1058, 7
        %v1060 = vsel %vm1059, %v1053, %v1056
        %v1061 = vld [vmem:[%s1020] ss:$0 sm:$0xff]
        %1062 = vst [vmem:[%s1020] sm:$0xff] %v1060
        %s1063 = smov [#allocation16]
        %s1064 = smov [#allocation18]
        %v1065 = vld [vmem:[%s1063] ss:$0 sm:$0xff]
        %s1067 = scalar_lea.vmem %s1063, 4294967295
        %v1068 = vld [vmem:[%s1067] sm:$0xfe]
        %v1069 = vlaneseq
        %v1070 = vshrl.u32 %v1069, 7
        %vm1071 = vcmp.eq.s32.totalorder %v1070, 0
        %v1072 = vsel %vm1071, %v1065, %v1068
        %s1073 = scalar_lea.vmem %s1063, 7
        %v1074 = vld [vmem:[%s1073] ss:$0 sm:$0xff]
        %1075 = vst [vmem:[%s1063] sm:$0xff] %v1072
        %s1076 = scalar_lea.vmem %s1063, 8
        %s1078 = scalar_lea.vmem %s1076, 4294967295
        %v1079 = vld [vmem:[%s1078] sm:$0xfe]
        %v1080 = vlaneseq
        %v1081 = vshrl.u32 %v1080, 7
        %vm1082 = vcmp.eq.s32.totalorder %v1081, 0
        %v1083 = vsel %vm1082, %v1074, %v1079
        %s1084 = scalar_lea.vmem %s1076, 7
        %v1085 = vld [vmem:[%s1084] ss:$0 sm:$0xff]
        %1086 = vst [vmem:[%s1076] sm:$0xff] %v1083
        %v1087 = vld [vmem:[%s1064] ss:$0 sm:$0xff]
        %s1088 = scalar_lea.vmem %s1063, 1
        %1089 = vst [vmem:[%s1088] sm:$0x1] %v1087
        %s1090 = scalar_lea.vmem %s1064, 8
        %s1091 = scalar_lea.vmem %s1090, 1
        %v1092 = vld [vmem:[%s1091] sm:$0x7f]
        %v1093 = vlaneseq
        %v1094 = vshrl.u32 %v1093, 7
        %vm1095 = vcmp.eq.s32.totalorder %v1094, 7
        %v1096 = vsel %vm1095, %v1085, %v1092
        %v1097 = vld [vmem:[%s1090] ss:$0 sm:$0xff]
        %1098 = vst [vmem:[%s1090] sm:$0xff] %v1096
        %s1099 = scalar_lea.vmem %s1064, 1
        %v1100 = vld [vmem:[%s1099] sm:$0x7f]
        %v1101 = vlaneseq
        %v1102 = vshrl.u32 %v1101, 7
        %vm1103 = vcmp.eq.s32.totalorder %v1102, 7
        %v1104 = vsel %vm1103, %v1097, %v1100
        %v1105 = vld [vmem:[%s1064] ss:$0 sm:$0xff]
        %1106 = vst [vmem:[%s1064] sm:$0xff] %v1104
        %s1107 = smov [#allocation26]
        %v1108 = vld [vmem:[%s1107] sm:$0xff]
        %s1109 = smov [#allocation27]
        %v1110 = vld [vmem:[%s1109] sm:$0xff]
        %s1111 = smov [#allocation8]
        %s1112 = smov [#allocation10]
        %s1113 = smov [#allocation12]
        %s1114 = smov [#allocation13]
        %v1115 = vld [vmem:[%s1111] sm:$0xff]
        %v1116 = vld [vmem:[%s1112] sm:$0xff]
        %v1117 = vld [vmem:[%s1113] sm:$0xff]
        %v1118 = vld [vmem:[%s1114] sm:$0xff]
        %v1119 = vmul.f32 %v1108, %v1115
        %v1120 = vmul.f32 %v1110, %v1117
        %v1121 = vsub.f32 %v1119, %v1120
        %v1122 = vmul.f32 %v1108, %v1116
        %v1123 = vmul.f32 %v1110, %v1118
        %v1124 = vsub.f32 %v1122, %v1123
        %v1125 = vmul.f32 %v1110, %v1115
        %v1126 = vmul.f32 %v1108, %v1117
        %v1127 = vadd.f32 %v1125, %v1126
        %v1128 = vmul.f32 %v1110, %v1116
        %v1129 = vmul.f32 %v1108, %v1118
        %v1130 = vadd.f32 %v1128, %v1129
        %1131 = vst [vmem:[%s1111] sm:$0xff] %v1121
        %1132 = vst [vmem:[%s1112] sm:$0xff] %v1124
        %1133 = vst [vmem:[%s1113] sm:$0xff] %v1127
        %1134 = vst [vmem:[%s1114] sm:$0xff] %v1130
        %s1135 = smov [#allocation26]
        %s1136 = scalar_lea.vmem %s1135, 8
        %v1137 = vld [vmem:[%s1136] sm:$0xff]
        %s1138 = smov [#allocation27]
        %s1139 = scalar_lea.vmem %s1138, 8
        %v1140 = vld [vmem:[%s1139] sm:$0xff]
        %s1141 = smov [#allocation8]
        %s1142 = scalar_lea.vmem %s1141, 8
        %s1143 = smov [#allocation10]
        %s1144 = scalar_lea.vmem %s1143, 8
        %s1145 = smov [#allocation12]
        %s1146 = scalar_lea.vmem %s1145, 8
        %s1147 = smov [#allocation13]
        %s1148 = scalar_lea.vmem %s1147, 8
        %v1149 = vld [vmem:[%s1142] sm:$0xff]
        %v1150 = vld [vmem:[%s1144] sm:$0xff]
        %v1151 = vld [vmem:[%s1146] sm:$0xff]
        %v1152 = vld [vmem:[%s1148] sm:$0xff]
        %v1153 = vmul.f32 %v1137, %v1149
        %v1154 = vmul.f32 %v1140, %v1151
        %v1155 = vsub.f32 %v1153, %v1154
        %v1156 = vmul.f32 %v1137, %v1150
        %v1157 = vmul.f32 %v1140, %v1152
        %v1158 = vsub.f32 %v1156, %v1157
        %v1159 = vmul.f32 %v1140, %v1149
        %v1160 = vmul.f32 %v1137, %v1151
        %v1161 = vadd.f32 %v1159, %v1160
        %v1162 = vmul.f32 %v1140, %v1150
        %v1163 = vmul.f32 %v1137, %v1152
        %v1164 = vadd.f32 %v1162, %v1163
        %1165 = vst [vmem:[%s1142] sm:$0xff] %v1155
        %1166 = vst [vmem:[%s1144] sm:$0xff] %v1158
        %1167 = vst [vmem:[%s1146] sm:$0xff] %v1161
        %1168 = vst [vmem:[%s1148] sm:$0xff] %v1164
        %s1169 = smov [#allocation8]
        %s1170 = smov [#allocation12]
        %v1171 = vld [vmem:[%s1169] ss:$0 sm:$0xff]
        %s1173 = scalar_lea.vmem %s1169, 4294967295
        %v1174 = vld [vmem:[%s1173] sm:$0xfe]
        %v1175 = vlaneseq
        %v1176 = vshrl.u32 %v1175, 7
        %vm1177 = vcmp.eq.s32.totalorder %v1176, 0
        %v1178 = vsel %vm1177, %v1171, %v1174
        %s1179 = scalar_lea.vmem %s1169, 7
        %v1180 = vld [vmem:[%s1179] ss:$0 sm:$0xff]
        %1181 = vst [vmem:[%s1169] sm:$0xff] %v1178
        %s1182 = scalar_lea.vmem %s1169, 8
        %s1184 = scalar_lea.vmem %s1182, 4294967295
        %v1185 = vld [vmem:[%s1184] sm:$0xfe]
        %v1186 = vlaneseq
        %v1187 = vshrl.u32 %v1186, 7
        %vm1188 = vcmp.eq.s32.totalorder %v1187, 0
        %v1189 = vsel %vm1188, %v1180, %v1185
        %s1190 = scalar_lea.vmem %s1182, 7
        %v1191 = vld [vmem:[%s1190] ss:$0 sm:$0xff]
        %1192 = vst [vmem:[%s1182] sm:$0xff] %v1189
        %v1193 = vld [vmem:[%s1170] ss:$0 sm:$0xff]
        %s1194 = scalar_lea.vmem %s1169, 1
        %1195 = vst [vmem:[%s1194] sm:$0x1] %v1193
        %s1196 = scalar_lea.vmem %s1170, 8
        %s1197 = scalar_lea.vmem %s1196, 1
        %v1198 = vld [vmem:[%s1197] sm:$0x7f]
        %v1199 = vlaneseq
        %v1200 = vshrl.u32 %v1199, 7
        %vm1201 = vcmp.eq.s32.totalorder %v1200, 7
        %v1202 = vsel %vm1201, %v1191, %v1198
        %v1203 = vld [vmem:[%s1196] ss:$0 sm:$0xff]
        %1204 = vst [vmem:[%s1196] sm:$0xff] %v1202
        %s1205 = scalar_lea.vmem %s1170, 1
        %v1206 = vld [vmem:[%s1205] sm:$0x7f]
        %v1207 = vlaneseq
        %v1208 = vshrl.u32 %v1207, 7
        %vm1209 = vcmp.eq.s32.totalorder %v1208, 7
        %v1210 = vsel %vm1209, %v1203, %v1206
        %v1211 = vld [vmem:[%s1170] ss:$0 sm:$0xff]
        %1212 = vst [vmem:[%s1170] sm:$0xff] %v1210
        %s1213 = smov [#allocation10]
        %s1214 = smov [#allocation13]
        %v1215 = vld [vmem:[%s1213] ss:$0 sm:$0xff]
        %s1217 = scalar_lea.vmem %s1213, 4294967295
        %v1218 = vld [vmem:[%s1217] sm:$0xfe]
        %v1219 = vlaneseq
        %v1220 = vshrl.u32 %v1219, 7
        %vm1221 = vcmp.eq.s32.totalorder %v1220, 0
        %v1222 = vsel %vm1221, %v1215, %v1218
        %s1223 = scalar_lea.vmem %s1213, 7
        %v1224 = vld [vmem:[%s1223] ss:$0 sm:$0xff]
        %1225 = vst [vmem:[%s1213] sm:$0xff] %v1222
        %s1226 = scalar_lea.vmem %s1213, 8
        %s1228 = scalar_lea.vmem %s1226, 4294967295
        %v1229 = vld [vmem:[%s1228] sm:$0xfe]
        %v1230 = vlaneseq
        %v1231 = vshrl.u32 %v1230, 7
        %vm1232 = vcmp.eq.s32.totalorder %v1231, 0
        %v1233 = vsel %vm1232, %v1224, %v1229
        %s1234 = scalar_lea.vmem %s1226, 7
        %v1235 = vld [vmem:[%s1234] ss:$0 sm:$0xff]
        %1236 = vst [vmem:[%s1226] sm:$0xff] %v1233
        %v1237 = vld [vmem:[%s1214] ss:$0 sm:$0xff]
        %s1238 = scalar_lea.vmem %s1213, 1
        %1239 = vst [vmem:[%s1238] sm:$0x1] %v1237
        %s1240 = scalar_lea.vmem %s1214, 8
        %s1241 = scalar_lea.vmem %s1240, 1
        %v1242 = vld [vmem:[%s1241] sm:$0x7f]
        %v1243 = vlaneseq
        %v1244 = vshrl.u32 %v1243, 7
        %vm1245 = vcmp.eq.s32.totalorder %v1244, 7
        %v1246 = vsel %vm1245, %v1235, %v1242
        %v1247 = vld [vmem:[%s1240] ss:$0 sm:$0xff]
        %1248 = vst [vmem:[%s1240] sm:$0xff] %v1246
        %s1249 = scalar_lea.vmem %s1214, 1
        %v1250 = vld [vmem:[%s1249] sm:$0x7f]
        %v1251 = vlaneseq
        %v1252 = vshrl.u32 %v1251, 7
        %vm1253 = vcmp.eq.s32.totalorder %v1252, 7
        %v1254 = vsel %vm1253, %v1247, %v1250
        %v1255 = vld [vmem:[%s1214] ss:$0 sm:$0xff]
        %1256 = vst [vmem:[%s1214] sm:$0xff] %v1254
      $region101: #{custom-call.8} parent=93 // loop_footer
        %s453 = sadd.s32 1, %s449
      $region102: #{custom-call.8} parent=93 // loop_footer_branch
        %448 = sbr.rel target = $region98
      $region103: #{custom-call.8} parent=93 // loop_exit
        _
      %s1257 = sadd.s32 %s319, 1
    $region94: #{custom-call.8} parent=1 // loop_footer
      _
    $region95: #{custom-call.8} parent=1 // loop_footer_branch
      %318 = sbr.rel target = $region91
    $region96: #{custom-call.8} parent=1 // loop_exit
      _
    %s1260 = smov [#allocation15]
    %s1261 = smov [#allocation4]
    %v1262 = vlaneseq
    %v1263 = vand.u32 %v1262, 127
    %v1264 = vmov %v1263
    %v1265 = vlaneseq
    %v1266 = vshrl.u32 %v1265, 7
    %v1267 = vmov %v1266
    %v1268 = vld [vmem:[%s1260] sm:$0xff]
    %vm1271 = vcmp.eq.s32.totalorder %v1267, %v1264
    %v1272 = vsel %vm1271, %v1268, 0.0
    %s1273 = scalar_lea.vmem %s1260, 8
    %v1274 = vld [vmem:[%s1273] sm:$0xff]
    %v1276 = vadd.s32 %v1267, 8
    %vm1277 = vcmp.eq.s32.totalorder %v1276, %v1264
    %v1278 = vsel %vm1277, %v1274, %v1272
    %v1279 = vrot.slane %v1278, 4
    %v1280 = vadd.f32 %v1278, %v1279
    %v1281 = vrot.slane %v1280, 2
    %v1282 = vadd.f32 %v1280, %v1281
    %v1283 = vrot.slane %v1282, 1
    %v1284 = vadd.f32 %v1282, %v1283
    %1285 = vst [vmem:[%s1261] sm:$0x1] %v1284
    %s1286 = smov [#allocation18]
    %s1287 = smov [#allocation6]
    %v1288 = vlaneseq
    %v1289 = vand.u32 %v1288, 127
    %v1290 = vmov %v1289
    %v1291 = vlaneseq
    %v1292 = vshrl.u32 %v1291, 7
    %v1293 = vmov %v1292
    %v1294 = vld [vmem:[%s1286] sm:$0xff]
    %vm1297 = vcmp.eq.s32.totalorder %v1293, %v1290
    %v1298 = vsel %vm1297, %v1294, 0.0
    %s1299 = scalar_lea.vmem %s1286, 8
    %v1300 = vld [vmem:[%s1299] sm:$0xff]
    %v1302 = vadd.s32 %v1293, 8
    %vm1303 = vcmp.eq.s32.totalorder %v1302, %v1290
    %v1304 = vsel %vm1303, %v1300, %v1298
    %v1305 = vrot.slane %v1304, 4
    %v1306 = vadd.f32 %v1304, %v1305
    %v1307 = vrot.slane %v1306, 2
    %v1308 = vadd.f32 %v1306, %v1307
    %v1309 = vrot.slane %v1308, 1
    %v1310 = vadd.f32 %v1308, %v1309
    %1311 = vst [vmem:[%s1287] sm:$0x1] %v1310
    %s1313 = ssub.s32 2, 1
    %v1314 = vld [vmem:[#allocation4] sm:%s1313]
    %s1316 = ssub.s32 2, 1
    %1317 = vst [vmem:[#allocation5] sm:%s1316] %v1314
    %s1319 = ssub.s32 2, 1
    %v1320 = vld [vmem:[#allocation6] sm:%s1319]
    %s1322 = ssub.s32 2, 1
    %1323 = vst [vmem:[#allocation7] sm:%s1322] %v1320
    // Predicated region
    $region104: #{custom-call.8} parent=1 // pred_check
      _
    $region105: #{custom-call.8} parent=1 // pred_check_branch
      %1325 = sbr.rel (0) target = $region107
    $region106: #{custom-call.8} parent=1 // pred_region
      // Predicated region
      $region108: #{custom-call.8} parent=106 // pred_check
        _
      $region109: #{custom-call.8} parent=106 // pred_check_branch
        %1327 = sbr.rel (0) target = $region111
      $region110: #{custom-call.8} parent=106 // pred_region
        %p1329 = scmp.gt.s32.totalorder 0, 0
        // Predicated region
        $region112: #{custom-call.8} parent=110 // pred_check
          %p1330 = pneg %p1329
        $region113: #{custom-call.8} parent=110 // pred_check_branch
          %1332 = sbr.rel (%p1330) target = $region115
        $region114: #{custom-call.8} parent=110 // pred_region
          %s1333 = ssub.s32 0, 1
          %s1334 = smul.u32 %s1333, 8
          %s1335 = scalar_lea.vmem [#allocation5], %s1334
          %v1336 = vld [vmem:[#allocation5] sm:$0xff]
          // While loop
          $region116: #{custom-call.8} parent=114 // loop_pre_header
            _
          $region117: #{custom-call.8} parent=114 // loop_header
            %s1337 = sphi [#allocation5], %s1359
            %s1338 = sphi %s4, %s1360
            %v1339 = vphi %v1336, %v1361
            %s1340 = ssub.s32 %s1335, 64
            %p1341 = scmp.gt.s32.totalorder %s1337, %s1340
          $region118: #{custom-call.8} parent=114 // loop_header_branch
            %1343 = sbr.rel (%p1341) target = $region122
          $region119: #{custom-call.8} parent=114 // loop_body
            %1344 = vst [vmem:[%s1338] sm:$0xff] %v1339
            %v1345 = vld [vmem:[%s1337 + $0x8] sm:$0xff]
            %1346 = vst [vmem:[%s1338 + $0x8] sm:$0xff] %v1345
            %v1347 = vld [vmem:[%s1337 + $0x10] sm:$0xff]
            %1348 = vst [vmem:[%s1338 + $0x10] sm:$0xff] %v1347
            %v1349 = vld [vmem:[%s1337 + $0x18] sm:$0xff]
            %1350 = vst [vmem:[%s1338 + $0x18] sm:$0xff] %v1349
            %v1351 = vld [vmem:[%s1337 + $0x20] sm:$0xff]
            %1352 = vst [vmem:[%s1338 + $0x20] sm:$0xff] %v1351
            %v1353 = vld [vmem:[%s1337 + $0x28] sm:$0xff]
            %1354 = vst [vmem:[%s1338 + $0x28] sm:$0xff] %v1353
            %v1355 = vld [vmem:[%s1337 + $0x30] sm:$0xff]
            %1356 = vst [vmem:[%s1338 + $0x30] sm:$0xff] %v1355
            %v1357 = vld [vmem:[%s1337 + $0x38] sm:$0xff]
            %1358 = vst [vmem:[%s1338 + $0x38] sm:$0xff] %v1357
          $region120: #{custom-call.8} parent=114 // loop_footer
            %s1359 = scalar_lea.vmem %s1337, 64
            %s1360 = scalar_lea.vmem %s1338, 64
            %v1361 = vld [vmem:[%s1337 + $0x40] sm:$0xff]
          $region121: #{custom-call.8} parent=114 // loop_footer_branch
            %1362 = sbr.rel target = $region117
          $region122: #{custom-call.8} parent=114 // loop_exit
            _
          // While loop
          $region123: #{custom-call.8} parent=114 // loop_pre_header
            _
          $region124: #{custom-call.8} parent=114 // loop_header
            %s1363 = sphi %s1337, %s1371
            %s1364 = sphi %s1338, %s1372
            %v1365 = vphi %v1339, %v1365
            %p1366 = scmp.gt.s32.totalorder %s1363, %s1335
          $region125: #{custom-call.8} parent=114 // loop_header_branch
            %1368 = sbr.rel (%p1366) target = $region129
          $region126: #{custom-call.8} parent=114 // loop_body
            %v1369 = vld [vmem:[%s1363] sm:$0xff]
            %1370 = vst [vmem:[%s1364] sm:$0xff] %v1369
          $region127: #{custom-call.8} parent=114 // loop_footer
            %s1371 = scalar_lea.vmem %s1363, 8
            %s1372 = scalar_lea.vmem %s1364, 8
          $region128: #{custom-call.8} parent=114 // loop_footer_branch
            %1373 = sbr.rel target = $region124
          $region129: #{custom-call.8} parent=114 // loop_exit
            _
        $region115: #{custom-call.8} parent=110 // pred_fallthru
          _
        %s1375 = ssub.s32 2, 1
        %s1376 = smul.u32 0, 8
        %s1377 = scalar_lea.vmem %s4, %s1376
        %s1378 = smul.u32 0, 8
        %s1379 = scalar_lea.vmem [#allocation5], %s1378
        %v1380 = vld [vmem:[%s1379] sm:%s1375]
        %1381 = vst [vmem:[%s1377] sm:%s1375] %v1380
      $region111: #{custom-call.8} parent=106 // pred_fallthru
        _
    $region107: #{custom-call.8} parent=1 // pred_fallthru
      _
    // Predicated region
    $region130: #{custom-call.8} parent=1 // pred_check
      _
    $region131: #{custom-call.8} parent=1 // pred_check_branch
      %1383 = sbr.rel (0) target = $region133
    $region132: #{custom-call.8} parent=1 // pred_region
      // Predicated region
      $region134: #{custom-call.8} parent=132 // pred_check
        _
      $region135: #{custom-call.8} parent=132 // pred_check_branch
        %1385 = sbr.rel (0) target = $region137
      $region136: #{custom-call.8} parent=132 // pred_region
        %p1387 = scmp.gt.s32.totalorder 0, 0
        // Predicated region
        $region138: #{custom-call.8} parent=136 // pred_check
          %p1388 = pneg %p1387
        $region139: #{custom-call.8} parent=136 // pred_check_branch
          %1390 = sbr.rel (%p1388) target = $region141
        $region140: #{custom-call.8} parent=136 // pred_region
          %s1391 = ssub.s32 0, 1
          %s1392 = smul.u32 %s1391, 8
          %s1393 = scalar_lea.vmem [#allocation7], %s1392
          %v1394 = vld [vmem:[#allocation7] sm:$0xff]
          // While loop
          $region142: #{custom-call.8} parent=140 // loop_pre_header
            _
          $region143: #{custom-call.8} parent=140 // loop_header
            %s1395 = sphi [#allocation7], %s1417
            %s1396 = sphi %s5, %s1418
            %v1397 = vphi %v1394, %v1419
            %s1398 = ssub.s32 %s1393, 64
            %p1399 = scmp.gt.s32.totalorder %s1395, %s1398
          $region144: #{custom-call.8} parent=140 // loop_header_branch
            %1401 = sbr.rel (%p1399) target = $region148
          $region145: #{custom-call.8} parent=140 // loop_body
            %1402 = vst [vmem:[%s1396] sm:$0xff] %v1397
            %v1403 = vld [vmem:[%s1395 + $0x8] sm:$0xff]
            %1404 = vst [vmem:[%s1396 + $0x8] sm:$0xff] %v1403
            %v1405 = vld [vmem:[%s1395 + $0x10] sm:$0xff]
            %1406 = vst [vmem:[%s1396 + $0x10] sm:$0xff] %v1405
            %v1407 = vld [vmem:[%s1395 + $0x18] sm:$0xff]
            %1408 = vst [vmem:[%s1396 + $0x18] sm:$0xff] %v1407
            %v1409 = vld [vmem:[%s1395 + $0x20] sm:$0xff]
            %1410 = vst [vmem:[%s1396 + $0x20] sm:$0xff] %v1409
            %v1411 = vld [vmem:[%s1395 + $0x28] sm:$0xff]
            %1412 = vst [vmem:[%s1396 + $0x28] sm:$0xff] %v1411
            %v1413 = vld [vmem:[%s1395 + $0x30] sm:$0xff]
            %1414 = vst [vmem:[%s1396 + $0x30] sm:$0xff] %v1413
            %v1415 = vld [vmem:[%s1395 + $0x38] sm:$0xff]
            %1416 = vst [vmem:[%s1396 + $0x38] sm:$0xff] %v1415
          $region146: #{custom-call.8} parent=140 // loop_footer
            %s1417 = scalar_lea.vmem %s1395, 64
            %s1418 = scalar_lea.vmem %s1396, 64
            %v1419 = vld [vmem:[%s1395 + $0x40] sm:$0xff]
          $region147: #{custom-call.8} parent=140 // loop_footer_branch
            %1420 = sbr.rel target = $region143
          $region148: #{custom-call.8} parent=140 // loop_exit
            _
          // While loop
          $region149: #{custom-call.8} parent=140 // loop_pre_header
            _
          $region150: #{custom-call.8} parent=140 // loop_header
            %s1421 = sphi %s1395, %s1429
            %s1422 = sphi %s1396, %s1430
            %v1423 = vphi %v1397, %v1423
            %p1424 = scmp.gt.s32.totalorder %s1421, %s1393
          $region151: #{custom-call.8} parent=140 // loop_header_branch
            %1426 = sbr.rel (%p1424) target = $region155
          $region152: #{custom-call.8} parent=140 // loop_body
            %v1427 = vld [vmem:[%s1421] sm:$0xff]
            %1428 = vst [vmem:[%s1422] sm:$0xff] %v1427
          $region153: #{custom-call.8} parent=140 // loop_footer
            %s1429 = scalar_lea.vmem %s1421, 8
            %s1430 = scalar_lea.vmem %s1422, 8
          $region154: #{custom-call.8} parent=140 // loop_footer_branch
            %1431 = sbr.rel target = $region150
          $region155: #{custom-call.8} parent=140 // loop_exit
            _
        $region141: #{custom-call.8} parent=136 // pred_fallthru
          _
        %s1433 = ssub.s32 2, 1
        %s1434 = smul.u32 0, 8
        %s1435 = scalar_lea.vmem %s5, %s1434
        %s1436 = smul.u32 0, 8
        %s1437 = scalar_lea.vmem [#allocation7], %s1436
        %v1438 = vld [vmem:[%s1437] sm:%s1433]
        %1439 = vst [vmem:[%s1435] sm:%s1433] %v1438
      $region137: #{custom-call.8} parent=132 // pred_fallthru
        _
    $region133: #{custom-call.8} parent=1 // pred_fallthru
      _
    %1441 = vsyncadd [#allocation9], 0
    %s1443 = sshll.u32 [#allocation8], 4
    %s1444 = int_to_ptr.vmem [resolvable:$true] %s1443
    %s1445 = sshll.u32 %s6, 4
    %s1446 = int_to_ptr.hbm [resolvable:$true] %s1445
    %1448 = dma.vmem_to_hbm [thread:$0]  %s1444, 256, %s1446, [#allocation9]
    %1450 = vsyncadd [#allocation11], 0
    %s1452 = sshll.u32 [#allocation10], 4
    %s1453 = int_to_ptr.vmem [resolvable:$true] %s1452
    %s1454 = sshll.u32 %s7, 4
    %s1455 = int_to_ptr.hbm [resolvable:$true] %s1454
    %1457 = dma.vmem_to_hbm [thread:$0]  %s1453, 256, %s1455, [#allocation11]
    %1459 = vsyncadd [#allocation11], 0
    %s1461 = sshll.u32 [#allocation12], 4
    %s1462 = int_to_ptr.vmem [resolvable:$true] %s1461
    %s1463 = sshll.u32 %s8, 4
    %s1464 = int_to_ptr.hbm [resolvable:$true] %s1463
    %1466 = dma.vmem_to_hbm [thread:$0]  %s1462, 256, %s1464, [#allocation11]
    %1468 = vsyncadd [#allocation14], 0
    %s1470 = sshll.u32 [#allocation13], 4
    %s1471 = int_to_ptr.vmem [resolvable:$true] %s1470
    %s1472 = sshll.u32 %s9, 4
    %s1473 = int_to_ptr.hbm [resolvable:$true] %s1472
    %1475 = dma.vmem_to_hbm [thread:$0]  %s1471, 256, %s1473, [#allocation14]
    // Predicated region
    $region156: #{custom-call.8} parent=1 // pred_check
      _
    $region157: #{custom-call.8} parent=1 // pred_check_branch
      %1477 = sbr.rel (0) target = $region159
    $region158: #{custom-call.8} parent=1 // pred_region
      _
    $region159: #{custom-call.8} parent=1 // pred_fallthru
      _
    // Predicated region
    $region160: #{custom-call.8} parent=1 // pred_check
      _
    $region161: #{custom-call.8} parent=1 // pred_check_branch
      %1479 = sbr.rel (0) target = $region163
    $region162: #{custom-call.8} parent=1 // pred_region
      _
    $region163: #{custom-call.8} parent=1 // pred_fallthru
      _
    %1481 = dma.done [#allocation9], 256
    %1483 = dma.done [#allocation11], 256
    %1485 = dma.done [#allocation11], 256
    %1487 = dma.done [#allocation14], 256
    %1488 = vsyncpa [#allocation9], 1
    %1489 = vsyncpa [#allocation11], 1
    %1490 = vsyncpa [#allocation14], 1

</llo_original>
